<compile_context>
chip_gen: v7x
topology: tpu7x:2x2x1
jax: 0.10.0
libtpu: 0.0.40
codegen_flags: <defaults>
</compile_context>

<pallas_src>
import functools

import numpy as np
import jax
import jax.numpy as jnp
from jax import lax
from jax.experimental import pallas as pl
from jax.experimental.pallas import tpu as pltpu

EPSILON = 0.0005
_LANE = 128


def _round_up(x, m):
    return ((x + m - 1) // m) * m


# ----------------------------------------------------------------------------
# Kernel 1: BCE-with-logits partial sums (lane-dense (1, 128) partials / block).
# ----------------------------------------------------------------------------
def _bce_kernel(x_ref, t_ref, part_ref):
    x = x_ref[...]                        # (BR, 128) logits
    t = t_ref[...]                        # (BR, 128) targets
    e = jnp.exp(-jnp.abs(x))
    # numerically-stable BCE with logits: max(x,0) - x*t + log(1 + exp(-|x|)).
    # (log1p(e) would be marginally more accurate, but e <= 1 so log(1+e) is
    #  within ~1e-7 and uses only guaranteed-lowered primitives.)
    bce = jnp.maximum(x, 0.0) - x * t + jnp.log(1.0 + e)
    part_ref[0] = jnp.sum(bce, axis=0, keepdims=True)        # (1, 128) partials


def bce_with_logits_mean(logits, target, *, block_rows=8192):
    """Mean elementwise BCE-with-logits via Pallas per-block partial sums."""
    total = int(np.prod(logits.shape))
    rows = -(-total // _LANE)
    br = min(block_rows, _round_up(rows, 8))
    padded_rows = _round_up(rows, br)
    pad = padded_rows * _LANE - total
    # pad logits with a large negative value and targets with 0 so padded
    # elements contribute exactly 0 to the BCE sum.
    x = jnp.pad(logits.reshape(-1).astype(jnp.float32), (0, pad),
                constant_values=-1e9)
    t = jnp.pad(target.reshape(-1).astype(jnp.float32), (0, pad),
                constant_values=0.0)
    x2 = x.reshape(padded_rows, _LANE)
    t2 = t.reshape(padded_rows, _LANE)
    nblocks = padded_rows // br

    partials = pl.pallas_call(
        _bce_kernel,
        out_shape=jax.ShapeDtypeStruct((nblocks, 1, _LANE), jnp.float32),
        grid=(nblocks,),
        in_specs=[pl.BlockSpec((br, _LANE), lambda i: (i, 0)),
                  pl.BlockSpec((br, _LANE), lambda i: (i, 0))],
        out_specs=pl.BlockSpec((1, 1, _LANE), lambda i: (i, 0, 0)),
        compiler_params=pltpu.CompilerParams(
            dimension_semantics=("parallel",),
            vmem_limit_bytes=48 * 1024 * 1024),
    )(x2, t2)
    return jnp.sum(partials) / float(total)


# ----------------------------------------------------------------------------
# Kernel 2: fused region-extraction + packed-head gram, accumulated over NK
# chunks of the contraction (reduction axis last), plus row sums.
# ----------------------------------------------------------------------------
def _fused_gram_kernel(y_ref, p_ref, mask_ref, g_ref, s_ref, slab_ref, *,
                       radius, Wp, NK, NKE, TB, mxu_dtype):
    k = pl.program_id(1)

    @pl.when(k == 0)
    def _():
        g_ref[...] = jnp.zeros_like(g_ref)
        s_ref[...] = jnp.zeros_like(s_ref)

    n0 = pl.multiple_of(k * NK, NK)             # 128-aligned chunk start
    mask = mask_ref[0]                          # (1, NK): 1.0 for valid columns
    base_y = y_ref[0, :, pl.ds(n0, NKE)]        # (TB, NKE) shifted-window source
    base_p = p_ref[0, :, pl.ds(n0, NKE)]

    # Assemble the packed slab: slab row (m*TB + h) = head h's region-row m;
    # the 9 y rows come first, then the 9 p rows.  Region row (ki, kj) of a
    # head is just its flat pooled map shifted by ki*Wp + kj, with invalid
    # (out-of-window) columns zeroed by the mask — so F.unfold never hits HBM.
    m = 0
    for base in (base_y, base_p):
        for ki in range(radius):
            for kj in range(radius):
                off = ki * Wp + kj
                slab_ref[m * TB:(m + 1) * TB, :] = base[:, off:off + NK] * mask
                m += 1

    x = slab_ref[...]                           # (M, NK), masked & -0.5 shifted
    xs = x.astype(mxu_dtype)
    dn = (((1,), (1,)), ((), ()))               # contract columns -> X @ X^T
    g_ref[0] = g_ref[0] + lax.dot_general(xs, xs, dn,
                                          preferred_element_type=jnp.float32)
    s_ref[0] = s_ref[0] + jnp.sum(x, axis=1, keepdims=True)


def region_covariances(y_pool, p_pool, *, radius=3, heads_per_block=8,
                       n_block=4096, mxu_dtype=jnp.float32):
    """Per-(b, c) region covariances y_cov, p_cov, yp_cov of the pooled maps.

    The unfold (kernel_size=radius, stride=1) is fused into the kernel; the
    mean-centering is applied afterwards as a rank-1 correction over the true
    number of windows N:  cov = G - s s^T / N  (exact, and well conditioned
    thanks to the -0.5 shift of the pooled maps).
    """
    B, C, Hp, Wp = y_pool.shape
    if Hp < radius or Wp < radius:
        raise ValueError("pooled map smaller than the region radius")
    BC = B * C
    R2 = radius * radius
    oh = Hp - radius + 1
    ow = Wp - radius + 1
    N = oh * ow                                    # true #windows per head
    K_total = (oh - 1) * Wp + ow                   # span of the Wp-stride flatten
    NK = min(n_block, _round_up(K_total, _LANE))   # contraction tile (lane mult.)
    K_pad = _round_up(K_total, NK)
    nk = K_pad // NK
    max_off = (radius - 1) * Wp + (radius - 1)     # largest region-row shift
    pad_w = _round_up(max_off, _LANE)              # static-shift headroom
    NKE = NK + pad_w
    Lp = K_pad + pad_w                             # padded flat-map length
    TB = heads_per_block                           # 8 heads -> M=144 (8-aligned)
    M = 2 * R2 * TB
    pad_bc = _round_up(BC, TB)
    nblocks = pad_bc // TB                         # >=2 heads blocks lets v7x use
                                                   # both TensorCores ("parallel")

    def prep(x):
        # -0.5 shift: covariance is shift-invariant; keeps the uncentered gram
        # well conditioned (values land in [-0.5, 0.5]).
        xf = x.astype(jnp.float32).reshape(BC, Hp * Wp) - 0.5
        xf = jnp.pad(xf, ((0, pad_bc - BC), (0, Lp - Hp * Wp)))
        return xf.reshape(nblocks, TB, Lp)

    yf = prep(y_pool)
    pf = prep(p_pool)

    # validity mask per flat position n (same for every slab row): the window
    # (i, j) = (n // Wp, n % Wp) is valid iff j < ow and n < K_total.
    pos = np.arange(K_pad)
    mask_np = ((pos % Wp) < ow) & (pos < K_total)
    mask = jnp.asarray(mask_np.astype(np.float32)).reshape(nk, 1, NK)

    kernel = functools.partial(_fused_gram_kernel, radius=radius, Wp=Wp, NK=NK,
                               NKE=NKE, TB=TB, mxu_dtype=mxu_dtype)
    G, S = pl.pallas_call(
        kernel,
        out_shape=(jax.ShapeDtypeStruct((nblocks, M, M), jnp.float32),
                   jax.ShapeDtypeStruct((nblocks, M, 1), jnp.float32)),
        grid=(nblocks, nk),
        in_specs=[pl.BlockSpec((1, TB, Lp), lambda i, k: (i, 0, 0)),
                  pl.BlockSpec((1, TB, Lp), lambda i, k: (i, 0, 0)),
                  pl.BlockSpec((1, 1, NK), lambda i, k: (k, 0, 0))],
        out_specs=(pl.BlockSpec((1, M, M), lambda i, k: (i, 0, 0)),
                   pl.BlockSpec((1, M, 1), lambda i, k: (i, 0, 0))),
        scratch_shapes=[pltpu.VMEM((M, NK), jnp.float32)],
        compiler_params=pltpu.CompilerParams(
            dimension_semantics=("parallel", "arbitrary"),
            vmem_limit_bytes=32 * 1024 * 1024),
    )(yf, pf, mask)

    # per-head diagonal 18x18 blocks of the packed gram (rows are region-row
    # major, head minor) + rank-1 mean correction over the true N windows.
    Gr = G.reshape(nblocks, 2 * R2, TB, 2 * R2, TB)
    Gd = jnp.moveaxis(jnp.diagonal(Gr, axis1=2, axis2=4), -1, 1)
    Gd = Gd.reshape(pad_bc, 2 * R2, 2 * R2)[:BC]
    s = jnp.moveaxis(S.reshape(nblocks, 2 * R2, TB), -1, 1)
    s = s.reshape(pad_bc, 2 * R2)[:BC]
    cov = Gd - (s[:, :, None] * s[:, None, :]) * (1.0 / float(N))
    y_cov = cov[:, :R2, :R2].reshape(B, C, R2, R2)
    p_cov = cov[:, R2:, R2:].reshape(B, C, R2, R2)
    yp_cov = cov[:, :R2, R2:].reshape(B, C, R2, R2)
    return y_cov, p_cov, yp_cov


# ----------------------------------------------------------------------------
# JAX glue: pooling (layout plumbing) and the unfold used only by the pure-JAX
# reference / 'region-extraction' fallback.
# ----------------------------------------------------------------------------
def _max_pool2d(x, k, s, pad):
    return lax.reduce_window(
        x, -jnp.inf, lax.max,
        window_dimensions=(1, 1, k, k), window_strides=(1, 1, s, s),
        padding=((0, 0), (0, 0), (pad, pad), (pad, pad)))


def _avg_pool2d(x, k, s, pad):
    summed = lax.reduce_window(
        x, 0.0, lax.add,
        window_dimensions=(1, 1, k, k), window_strides=(1, 1, s, s),
        padding=((0, 0), (0, 0), (pad, pad), (pad, pad)))
    return summed / float(k * k)


def extract_region_vector(x, radius, stride, method):
    if stride > 1 and method != 'region-extraction':
        pad = stride // 2
        if method == 'max':
            x = _max_pool2d(x, stride, stride, pad)
        elif method == 'avg':
            x = _avg_pool2d(x, stride, stride, pad)
        else:
            raise ValueError(method)
    us = stride if method == 'region-extraction' else 1
    B, C, H, W = x.shape
    oh = (H - radius) // us + 1
    ow = (W - radius) // us + 1
    pats = [x[:, :, ki:ki + us * (oh - 1) + 1:us, kj:kj + us * (ow - 1) + 1:us]
            for ki in range(radius) for kj in range(radius)]
    return jnp.stack(pats, axis=2).reshape(B, C, radius * radius, oh * ow)


# ----------------------------------------------------------------------------
# Full RMI loss (default config: with_logits=True, radius=3, bce_weight=0.5,
# max-pool downsampling, stride=3, log-trace via Cholesky).
# ----------------------------------------------------------------------------
def rmi_loss_pallas(logits, target, *, radius=3, bce_weight=0.5,
                    downsampling_method='max', stride=3, use_log_trace=True,
                    epsilon=EPSILON, mxu_dtype=jnp.float32):
    # TODO(synk): the reference module promotes the covariance stage to float64
    # (use_double_precision=True); TPU compute here stays float32.
    logits = logits.astype(jnp.float32)
    target = target.astype(jnp.float32)
    vec = radius * radius

    if bce_weight != 0:
        bce = bce_with_logits_mean(logits, target) * bce_weight
    else:
        bce = 0.0

    if downsampling_method == 'region-extraction' and stride > 1:
        # TODO(synk): the fused gram kernel assumes unfold stride 1; the
        # 'region-extraction' method (stride-3 unfold) falls back to plain JAX.
        prob = jax.nn.sigmoid(logits)
        y = extract_region_vector(target, radius, stride, downsampling_method)
        p = extract_region_vector(prob, radius, stride, downsampling_method)
        y = y - y.mean(axis=3, keepdims=True)
        p = p - p.mean(axis=3, keepdims=True)
        y_cov = y @ jnp.swapaxes(y, -1, -2)
        p_cov = p @ jnp.swapaxes(p, -1, -2)
        yp_cov = y @ jnp.swapaxes(p, -1, -2)
    else:
        pad = stride // 2
        if stride > 1 and downsampling_method == 'max':
            # sigmoid is monotonic => sigmoid(max_pool(x)) == max_pool(sigmoid(x)):
            # the full-resolution probability map is never materialized.
            y_pool = _max_pool2d(target, stride, stride, pad)
            p_pool = jax.nn.sigmoid(_max_pool2d(logits, stride, stride, pad))
        elif stride > 1 and downsampling_method == 'avg':
            y_pool = _avg_pool2d(target, stride, stride, pad)
            p_pool = _avg_pool2d(jax.nn.sigmoid(logits), stride, stride, pad)
        elif stride == 1:
            y_pool = target
            p_pool = jax.nn.sigmoid(logits)
        else:
            raise ValueError(downsampling_method)
        y_cov, p_cov, yp_cov = region_covariances(
            y_pool, p_pool, radius=radius, mxu_dtype=mxu_dtype)

    eps = jnp.eye(vec, dtype=jnp.float32) * epsilon           # (R2, R2)
    # TODO(synk): the 9x9 inverse / Cholesky have no Pallas primitive; done with
    # jnp.linalg on the tiny (B, C, 9, 9) batch.
    inv_p = jnp.linalg.inv(p_cov + eps)
    m = y_cov - yp_cov @ jnp.swapaxes(inv_p, -1, -2) @ jnp.swapaxes(yp_cov, -1, -2)
    if use_log_trace:
        chol = jnp.linalg.cholesky(m + eps)
        diag = jnp.diagonal(chol, axis1=-2, axis2=-1)
        rmi = 0.5 * (2.0 * jnp.sum(jnp.log(diag + 1e-8), axis=-1))
    else:
        _, logdet = jnp.linalg.slogdet(m + eps)
        rmi = 0.5 * logdet
    rmi = rmi / float(vec)                                    # (B, C)
    rmi = rmi.sum(axis=1).mean(axis=0)                        # scalar
    return rmi * (1.0 - bce_weight) + bce


# Pure-JAX reference (mirrors the PyTorch module in float32), for correctness.
def rmi_loss_ref(logits, target, *, radius=3, bce_weight=0.5,
                 downsampling_method='max', stride=3, epsilon=EPSILON):
    logits = logits.astype(jnp.float32)
    target = target.astype(jnp.float32)
    vec = radius * radius
    bce = jnp.mean(jnp.maximum(logits, 0.0) - logits * target
                   + jnp.log1p(jnp.exp(-jnp.abs(logits)))) * bce_weight
    prob = jax.nn.sigmoid(logits)
    y = extract_region_vector(target, radius, stride, downsampling_method)
    p = extract_region_vector(prob, radius, stride, downsampling_method)
    y = y - y.mean(axis=3, keepdims=True)
    p = p - p.mean(axis=3, keepdims=True)
    yT = jnp.swapaxes(y, -1, -2)
    pT = jnp.swapaxes(p, -1, -2)
    y_cov, p_cov, yp_cov = y @ yT, p @ pT, y @ pT
    eps = jnp.eye(vec, dtype=jnp.float32) * epsilon
    inv_p = jnp.linalg.inv(p_cov + eps)
    m = y_cov - yp_cov @ jnp.swapaxes(inv_p, -1, -2) @ jnp.swapaxes(yp_cov, -1, -2)
    chol = jnp.linalg.cholesky(m + eps)
    diag = jnp.diagonal(chol, axis1=-2, axis2=-1)
    rmi = 0.5 * (2.0 * jnp.sum(jnp.log(diag + 1e-8), axis=-1)) / float(vec)
    rmi = rmi.sum(axis=1).mean(axis=0)
    return rmi * (1.0 - bce_weight) + bce


if __name__ == "__main__":
    key = jax.random.PRNGKey(0)
    k1, k2 = jax.random.split(key)
    B, C, H, W = 2, 4, 16, 16
    logits = jax.random.normal(k1, (B, C, H, W), dtype=jnp.float32)
    target = jax.random.bernoulli(k2, 0.5, (B, C, H, W)).astype(jnp.float32)

    loss = jax.jit(rmi_loss_pallas)(logits, target)
    loss = jax.block_until_ready(loss)

    ref = jax.block_until_ready(rmi_loss_ref(logits, target))
    assert bool(jnp.isfinite(loss)), f"non-finite loss: {loss}"
    np.testing.assert_allclose(np.asarray(loss), np.asarray(ref),
                               rtol=1e-2, atol=2e-3)
    print("KERNEL_OK")
</pallas_src>

<mosaic_0001>
module attributes {stable_mosaic.version = 11 : i64} {
  func.func @_bce_kernel(%arg0: i32, %arg1: memref<16x128xf32, #tpu.memory_space<vmem>>, %arg2: memref<16x128xf32, #tpu.memory_space<vmem>>, %arg3: memref<1x1x128xf32, #tpu.memory_space<vmem>>) attributes {dimension_semantics = [#tpu.dimension_semantics<parallel>], iteration_bounds = array<i64: 1>, scalar_prefetch = 0 : i64, scratch_operands = 0 : i64, tpu.core_type = #tpu.core_type<tc>, window_params = [{transform_indices = @transform_0, window_bounds = array<i64: 16, 128>}, {transform_indices = @transform_1, window_bounds = array<i64: 16, 128>}, {transform_indices = @transform_2, window_bounds = array<i64: 1, 1, 128>}]} {
    %c0 = arith.constant 0 : index
    %c0_0 = arith.constant 0 : index
    %0 = vector.load %arg1[%c0, %c0_0] : memref<16x128xf32, #tpu.memory_space<vmem>>, vector<16x128xf32>
    %c0_1 = arith.constant 0 : index
    %c0_2 = arith.constant 0 : index
    %1 = vector.load %arg2[%c0_1, %c0_2] : memref<16x128xf32, #tpu.memory_space<vmem>>, vector<16x128xf32>
    %2 = math.absf %0 : vector<16x128xf32>
    %cst = arith.constant 0.000000e+00 : f32
    %3 = vector.broadcast %cst : f32 to vector<16x128xf32>
    %4 = arith.subf %3, %2 : vector<16x128xf32>
    %5 = math.exp %4 : vector<16x128xf32>
    %cst_3 = arith.constant 0.000000e+00 : f32
    %6 = vector.broadcast %cst_3 : f32 to vector<16x128xf32>
    %7 = arith.maximumf %0, %6 : vector<16x128xf32>
    %8 = arith.mulf %0, %1 : vector<16x128xf32>
    %9 = arith.subf %7, %8 : vector<16x128xf32>
    %cst_4 = arith.constant 1.000000e+00 : f32
    %10 = vector.broadcast %cst_4 : f32 to vector<16x128xf32>
    %11 = arith.addf %10, %5 : vector<16x128xf32>
    %12 = math.log %11 : vector<16x128xf32>
    %13 = arith.addf %9, %12 : vector<16x128xf32>
    %cst_5 = arith.constant dense<0.000000e+00> : vector<128xf32>
    %14 = vector.multi_reduction <add>, %13, %cst_5 [0] : vector<16x128xf32> to vector<128xf32>
    %15 = vector.shape_cast %14 : vector<128xf32> to vector<1x128xf32>
    %c0_6 = arith.constant 0 : index
    %c0_7 = arith.constant 0 : index
    %c0_8 = arith.constant 0 : index
    %16 = vector.load %arg3[%c0_6, %c0_7, %c0_8] : memref<1x1x128xf32, #tpu.memory_space<vmem>>, vector<1x1x128xf32>
    %17 = vector.shape_cast %16 : vector<1x1x128xf32> to vector<1x128xf32>
    %18 = vector.shape_cast %15 : vector<1x128xf32> to vector<1x1x128xf32>
    tpu.vector_store %arg3[%c0_6, %c0_7, %c0_8], %18 {strides = array<i32>} : memref<1x1x128xf32, #tpu.memory_space<vmem>>, vector<1x1x128xf32>,
    return
  }
  func.func @transform_0(%arg0: i32) -> (i32, i32) {
    %c0_i32 = arith.constant 0 : i32
    %c0_i32_0 = arith.constant 0 : i32
    return %arg0, %c0_i32 : i32, i32
  }
  func.func @transform_1(%arg0: i32) -> (i32, i32) {
    %c0_i32 = arith.constant 0 : i32
    %c0_i32_0 = arith.constant 0 : i32
    return %arg0, %c0_i32 : i32, i32
  }
  func.func @transform_2(%arg0: i32) -> (i32, i32, i32) {
    %c0_i32 = arith.constant 0 : i32
    %c0_i32_0 = arith.constant 0 : i32
    %c0_i32_1 = arith.constant 0 : i32
    return %arg0, %c0_i32, %c0_i32_0 : i32, i32, i32
  }
}

module attributes {stable_mosaic.version = 11 : i64} {
  func.func @_fused_gram_kernel(%arg0: i32, %arg1: i32, %arg2: memref<1x8x256xf32, #tpu.memory_space<vmem>>, %arg3: memref<1x8x256xf32, #tpu.memory_space<vmem>>, %arg4: memref<1x1x128xf32, #tpu.memory_space<vmem>>, %arg5: memref<1x144x144xf32, #tpu.memory_space<vmem>>, %arg6: memref<1x144x1xf32, #tpu.memory_space<vmem>>, %arg7: memref<144x128xf32, #tpu.memory_space<vmem>>) attributes {dimension_semantics = [#tpu.dimension_semantics<parallel>, #tpu.dimension_semantics<arbitrary>], iteration_bounds = array<i64: 1, 1>, scalar_prefetch = 0 : i64, scratch_operands = 1 : i64, tpu.core_type = #tpu.core_type<tc>, window_params = [{transform_indices = @transform_0, window_bounds = array<i64: 1, 8, 256>}, {transform_indices = @transform_1, window_bounds = array<i64: 1, 8, 256>}, {transform_indices = @transform_2, window_bounds = array<i64: 1, 1, 128>}, {transform_indices = @transform_3, window_bounds = array<i64: 1, 144, 144>}, {transform_indices = @transform_4, window_bounds = array<i64: 1, 144, 1>}]} {
    %c0_i32 = arith.constant 0 : i32
    %0 = arith.cmpi eq, %arg1, %c0_i32 : i32
    %1 = arith.extui %0 : i1 to i32
    %c0_i32_0 = arith.constant 0 : i32
    %2 = arith.cmpi ne, %1, %c0_i32_0 : i32
    scf.if %2 {
      %cst_41 = arith.constant 0.000000e+00 : f32
      %101 = vector.broadcast %cst_41 : f32 to vector<1x144x144xf32>
      %c0_42 = arith.constant 0 : index
      %c0_43 = arith.constant 0 : index
      %c0_44 = arith.constant 0 : index
      %102 = vector.load %arg5[%c0_42, %c0_43, %c0_44] : memref<1x144x144xf32, #tpu.memory_space<vmem>>, vector<1x144x144xf32>
      tpu.vector_store %arg5[%c0_42, %c0_43, %c0_44], %101 {strides = array<i32>} : memref<1x144x144xf32, #tpu.memory_space<vmem>>, vector<1x144x144xf32>,
      %cst_45 = arith.constant 0.000000e+00 : f32
      %103 = vector.broadcast %cst_45 : f32 to vector<1x144x1xf32>
      %c0_46 = arith.constant 0 : index
      %c0_47 = arith.constant 0 : index
      %c0_48 = arith.constant 0 : index
      %104 = vector.load %arg6[%c0_46, %c0_47, %c0_48] : memref<1x144x1xf32, #tpu.memory_space<vmem>>, vector<1x144x1xf32>
      tpu.vector_store %arg6[%c0_46, %c0_47, %c0_48], %103 {strides = array<i32>} : memref<1x144x1xf32, #tpu.memory_space<vmem>>, vector<1x144x1xf32>,
    } else {
    }
    %c128_i32 = arith.constant 128 : i32
    %3 = arith.muli %arg1, %c128_i32 : i32
    %4 = tpu.assume_multiple %3, 128 : i32
    %c0 = arith.constant 0 : index
    %c0_1 = arith.constant 0 : index
    %c0_2 = arith.constant 0 : index
    %5 = vector.load %arg4[%c0, %c0_1, %c0_2] : memref<1x1x128xf32, #tpu.memory_space<vmem>>, vector<1x1x128xf32>
    %6 = vector.shape_cast %5 : vector<1x1x128xf32> to vector<1x128xf32>
    %c0_3 = arith.constant 0 : index
    %c0_4 = arith.constant 0 : index
    %7 = arith.index_cast %4 : i32 to index
    %8 = vector.load %arg2[%c0_3, %c0_4, %7] : memref<1x8x256xf32, #tpu.memory_space<vmem>>, vector<1x8x256xf32>
    %9 = vector.shape_cast %8 : vector<1x8x256xf32> to vector<8x256xf32>
    %c0_5 = arith.constant 0 : index
    %c0_6 = arith.constant 0 : index
    %10 = arith.index_cast %4 : i32 to index
    %11 = vector.load %arg3[%c0_5, %c0_6, %10] : memref<1x8x256xf32, #tpu.memory_space<vmem>>, vector<1x8x256xf32>
    %12 = vector.shape_cast %11 : vector<1x8x256xf32> to vector<8x256xf32>
    %13 = vector.extract_strided_slice %9 {offsets = [0, 0], sizes = [8, 128], strides = [1, 1]} : vector<8x256xf32> to vector<8x128xf32>
    %14 = vector.broadcast %6 : vector<1x128xf32> to vector<8x128xf32>
    %15 = arith.mulf %13, %14 : vector<8x128xf32>
    %c0_7 = arith.constant 0 : index
    %c0_8 = arith.constant 0 : index
    %16 = vector.load %arg7[%c0_7, %c0_8] : memref<144x128xf32, #tpu.memory_space<vmem>>, vector<8x128xf32>
    tpu.vector_store %arg7[%c0_7, %c0_8], %15 {strides = array<i32>} : memref<144x128xf32, #tpu.memory_space<vmem>>, vector<8x128xf32>,
    %17 = vector.extract_strided_slice %9 {offsets = [0, 1], sizes = [8, 128], strides = [1, 1]} : vector<8x256xf32> to vector<8x128xf32>
    %18 = vector.broadcast %6 : vector<1x128xf32> to vector<8x128xf32>
    %19 = arith.mulf %17, %18 : vector<8x128xf32>
    %c8 = arith.constant 8 : index
    %c0_9 = arith.constant 0 : index
    %20 = vector.load %arg7[%c8, %c0_9] : memref<144x128xf32, #tpu.memory_space<vmem>>, vector<8x128xf32>
    tpu.vector_store %arg7[%c8, %c0_9], %19 {strides = array<i32>} : memref<144x128xf32, #tpu.memory_space<vmem>>, vector<8x128xf32>,
    %21 = vector.extract_strided_slice %9 {offsets = [0, 2], sizes = [8, 128], strides = [1, 1]} : vector<8x256xf32> to vector<8x128xf32>
    %22 = vector.broadcast %6 : vector<1x128xf32> to vector<8x128xf32>
    %23 = arith.mulf %21, %22 : vector<8x128xf32>
    %c16 = arith.constant 16 : index
    %c0_10 = arith.constant 0 : index
    %24 = vector.load %arg7[%c16, %c0_10] : memref<144x128xf32, #tpu.memory_space<vmem>>, vector<8x128xf32>
    tpu.vector_store %arg7[%c16, %c0_10], %23 {strides = array<i32>} : memref<144x128xf32, #tpu.memory_space<vmem>>, vector<8x128xf32>,
    %25 = vector.extract_strided_slice %9 {offsets = [0, 6], sizes = [8, 128], strides = [1, 1]} : vector<8x256xf32> to vector<8x128xf32>
    %26 = vector.broadcast %6 : vector<1x128xf32> to vector<8x128xf32>
    %27 = arith.mulf %25, %26 : vector<8x128xf32>
    %c24 = arith.constant 24 : index
    %c0_11 = arith.constant 0 : index
    %28 = vector.load %arg7[%c24, %c0_11] : memref<144x128xf32, #tpu.memory_space<vmem>>, vector<8x128xf32>
    tpu.vector_store %arg7[%c24, %c0_11], %27 {strides = array<i32>} : memref<144x128xf32, #tpu.memory_space<vmem>>, vector<8x128xf32>,
    %29 = vector.extract_strided_slice %9 {offsets = [0, 7], sizes = [8, 128], strides = [1, 1]} : vector<8x256xf32> to vector<8x128xf32>
    %30 = vector.broadcast %6 : vector<1x128xf32> to vector<8x128xf32>
    %31 = arith.mulf %29, %30 : vector<8x128xf32>
    %c32 = arith.constant 32 : index
    %c0_12 = arith.constant 0 : index
    %32 = vector.load %arg7[%c32, %c0_12] : memref<144x128xf32, #tpu.memory_space<vmem>>, vector<8x128xf32>
    tpu.vector_store %arg7[%c32, %c0_12], %31 {strides = array<i32>} : memref<144x128xf32, #tpu.memory_space<vmem>>, vector<8x128xf32>,
    %33 = vector.extract_strided_slice %9 {offsets = [0, 8], sizes = [8, 128], strides = [1, 1]} : vector<8x256xf32> to vector<8x128xf32>
    %34 = vector.broadcast %6 : vector<1x128xf32> to vector<8x128xf32>
    %35 = arith.mulf %33, %34 : vector<8x128xf32>
    %c40 = arith.constant 40 : index
    %c0_13 = arith.constant 0 : index
    %36 = vector.load %arg7[%c40, %c0_13] : memref<144x128xf32, #tpu.memory_space<vmem>>, vector<8x128xf32>
    tpu.vector_store %arg7[%c40, %c0_13], %35 {strides = array<i32>} : memref<144x128xf32, #tpu.memory_space<vmem>>, vector<8x128xf32>,
    %37 = vector.extract_strided_slice %9 {offsets = [0, 12], sizes = [8, 128], strides = [1, 1]} : vector<8x256xf32> to vector<8x128xf32>
    %38 = vector.broadcast %6 : vector<1x128xf32> to vector<8x128xf32>
    %39 = arith.mulf %37, %38 : vector<8x128xf32>
    %c48 = arith.constant 48 : index
    %c0_14 = arith.constant 0 : index
    %40 = vector.load %arg7[%c48, %c0_14] : memref<144x128xf32, #tpu.memory_space<vmem>>, vector<8x128xf32>
    tpu.vector_store %arg7[%c48, %c0_14], %39 {strides = array<i32>} : memref<144x128xf32, #tpu.memory_space<vmem>>, vector<8x128xf32>,
    %41 = vector.extract_strided_slice %9 {offsets = [0, 13], sizes = [8, 128], strides = [1, 1]} : vector<8x256xf32> to vector<8x128xf32>
    %42 = vector.broadcast %6 : vector<1x128xf32> to vector<8x128xf32>
    %43 = arith.mulf %41, %42 : vector<8x128xf32>
    %c56 = arith.constant 56 : index
    %c0_15 = arith.constant 0 : index
    %44 = vector.load %arg7[%c56, %c0_15] : memref<144x128xf32, #tpu.memory_space<vmem>>, vector<8x128xf32>
    tpu.vector_store %arg7[%c56, %c0_15], %43 {strides = array<i32>} : memref<144x128xf32, #tpu.memory_space<vmem>>, vector<8x128xf32>,
    %45 = vector.extract_strided_slice %9 {offsets = [0, 14], sizes = [8, 128], strides = [1, 1]} : vector<8x256xf32> to vector<8x128xf32>
    %46 = vector.broadcast %6 : vector<1x128xf32> to vector<8x128xf32>
    %47 = arith.mulf %45, %46 : vector<8x128xf32>
    %c64 = arith.constant 64 : index
    %c0_16 = arith.constant 0 : index
    %48 = vector.load %arg7[%c64, %c0_16] : memref<144x128xf32, #tpu.memory_space<vmem>>, vector<8x128xf32>
    tpu.vector_store %arg7[%c64, %c0_16], %47 {strides = array<i32>} : memref<144x128xf32, #tpu.memory_space<vmem>>, vector<8x128xf32>,
    %49 = vector.extract_strided_slice %12 {offsets = [0, 0], sizes = [8, 128], strides = [1, 1]} : vector<8x256xf32> to vector<8x128xf32>
    %50 = vector.broadcast %6 : vector<1x128xf32> to vector<8x128xf32>
    %51 = arith.mulf %49, %50 : vector<8x128xf32>
    %c72 = arith.constant 72 : index
    %c0_17 = arith.constant 0 : index
    %52 = vector.load %arg7[%c72, %c0_17] : memref<144x128xf32, #tpu.memory_space<vmem>>, vector<8x128xf32>
    tpu.vector_store %arg7[%c72, %c0_17], %51 {strides = array<i32>} : memref<144x128xf32, #tpu.memory_space<vmem>>, vector<8x128xf32>,
    %53 = vector.extract_strided_slice %12 {offsets = [0, 1], sizes = [8, 128], strides = [1, 1]} : vector<8x256xf32> to vector<8x128xf32>
    %54 = vector.broadcast %6 : vector<1x128xf32> to vector<8x128xf32>
    %55 = arith.mulf %53, %54 : vector<8x128xf32>
    %c80 = arith.constant 80 : index
    %c0_18 = arith.constant 0 : index
    %56 = vector.load %arg7[%c80, %c0_18] : memref<144x128xf32, #tpu.memory_space<vmem>>, vector<8x128xf32>
    tpu.vector_store %arg7[%c80, %c0_18], %55 {strides = array<i32>} : memref<144x128xf32, #tpu.memory_space<vmem>>, vector<8x128xf32>,
    %57 = vector.extract_strided_slice %12 {offsets = [0, 2], sizes = [8, 128], strides = [1, 1]} : vector<8x256xf32> to vector<8x128xf32>
    %58 = vector.broadcast %6 : vector<1x128xf32> to vector<8x128xf32>
    %59 = arith.mulf %57, %58 : vector<8x128xf32>
    %c88 = arith.constant 88 : index
    %c0_19 = arith.constant 0 : index
    %60 = vector.load %arg7[%c88, %c0_19] : memref<144x128xf32, #tpu.memory_space<vmem>>, vector<8x128xf32>
    tpu.vector_store %arg7[%c88, %c0_19], %59 {strides = array<i32>} : memref<144x128xf32, #tpu.memory_space<vmem>>, vector<8x128xf32>,
    %61 = vector.extract_strided_slice %12 {offsets = [0, 6], sizes = [8, 128], strides = [1, 1]} : vector<8x256xf32> to vector<8x128xf32>
    %62 = vector.broadcast %6 : vector<1x128xf32> to vector<8x128xf32>
    %63 = arith.mulf %61, %62 : vector<8x128xf32>
    %c96 = arith.constant 96 : index
    %c0_20 = arith.constant 0 : index
    %64 = vector.load %arg7[%c96, %c0_20] : memref<144x128xf32, #tpu.memory_space<vmem>>, vector<8x128xf32>
    tpu.vector_store %arg7[%c96, %c0_20], %63 {strides = array<i32>} : memref<144x128xf32, #tpu.memory_space<vmem>>, vector<8x128xf32>,
    %65 = vector.extract_strided_slice %12 {offsets = [0, 7], sizes = [8, 128], strides = [1, 1]} : vector<8x256xf32> to vector<8x128xf32>
    %66 = vector.broadcast %6 : vector<1x128xf32> to vector<8x128xf32>
    %67 = arith.mulf %65, %66 : vector<8x128xf32>
    %c104 = arith.constant 104 : index
    %c0_21 = arith.constant 0 : index
    %68 = vector.load %arg7[%c104, %c0_21] : memref<144x128xf32, #tpu.memory_space<vmem>>, vector<8x128xf32>
    tpu.vector_store %arg7[%c104, %c0_21], %67 {strides = array<i32>} : memref<144x128xf32, #tpu.memory_space<vmem>>, vector<8x128xf32>,
    %69 = vector.extract_strided_slice %12 {offsets = [0, 8], sizes = [8, 128], strides = [1, 1]} : vector<8x256xf32> to vector<8x128xf32>
    %70 = vector.broadcast %6 : vector<1x128xf32> to vector<8x128xf32>
    %71 = arith.mulf %69, %70 : vector<8x128xf32>
    %c112 = arith.constant 112 : index
    %c0_22 = arith.constant 0 : index
    %72 = vector.load %arg7[%c112, %c0_22] : memref<144x128xf32, #tpu.memory_space<vmem>>, vector<8x128xf32>
    tpu.vector_store %arg7[%c112, %c0_22], %71 {strides = array<i32>} : memref<144x128xf32, #tpu.memory_space<vmem>>, vector<8x128xf32>,
    %73 = vector.extract_strided_slice %12 {offsets = [0, 12], sizes = [8, 128], strides = [1, 1]} : vector<8x256xf32> to vector<8x128xf32>
    %74 = vector.broadcast %6 : vector<1x128xf32> to vector<8x128xf32>
    %75 = arith.mulf %73, %74 : vector<8x128xf32>
    %c120 = arith.constant 120 : index
    %c0_23 = arith.constant 0 : index
    %76 = vector.load %arg7[%c120, %c0_23] : memref<144x128xf32, #tpu.memory_space<vmem>>, vector<8x128xf32>
    tpu.vector_store %arg7[%c120, %c0_23], %75 {strides = array<i32>} : memref<144x128xf32, #tpu.memory_space<vmem>>, vector<8x128xf32>,
    %77 = vector.extract_strided_slice %12 {offsets = [0, 13], sizes = [8, 128], strides = [1, 1]} : vector<8x256xf32> to vector<8x128xf32>
    %78 = vector.broadcast %6 : vector<1x128xf32> to vector<8x128xf32>
    %79 = arith.mulf %77, %78 : vector<8x128xf32>
    %c128 = arith.constant 128 : index
    %c0_24 = arith.constant 0 : index
    %80 = vector.load %arg7[%c128, %c0_24] : memref<144x128xf32, #tpu.memory_space<vmem>>, vector<8x128xf32>
    tpu.vector_store %arg7[%c128, %c0_24], %79 {strides = array<i32>} : memref<144x128xf32, #tpu.memory_space<vmem>>, vector<8x128xf32>,
    %81 = vector.extract_strided_slice %12 {offsets = [0, 14], sizes = [8, 128], strides = [1, 1]} : vector<8x256xf32> to vector<8x128xf32>
    %82 = vector.broadcast %6 : vector<1x128xf32> to vector<8x128xf32>
    %83 = arith.mulf %81, %82 : vector<8x128xf32>
    %c136 = arith.constant 136 : index
    %c0_25 = arith.constant 0 : index
    %84 = vector.load %arg7[%c136, %c0_25] : memref<144x128xf32, #tpu.memory_space<vmem>>, vector<8x128xf32>
    tpu.vector_store %arg7[%c136, %c0_25], %83 {strides = array<i32>} : memref<144x128xf32, #tpu.memory_space<vmem>>, vector<8x128xf32>,
    %c0_26 = arith.constant 0 : index
    %c0_27 = arith.constant 0 : index
    %85 = vector.load %arg7[%c0_26, %c0_27] : memref<144x128xf32, #tpu.memory_space<vmem>>, vector<144x128xf32>
    %c0_28 = arith.constant 0 : index
    %c0_29 = arith.constant 0 : index
    %c0_30 = arith.constant 0 : index
    %86 = vector.load %arg5[%c0_28, %c0_29, %c0_30] : memref<1x144x144xf32, #tpu.memory_space<vmem>>, vector<1x144x144xf32>
    %87 = vector.shape_cast %86 : vector<1x144x144xf32> to vector<144x144xf32>
    %cst = arith.constant dense<0.000000e+00> : vector<144x144xf32>
    %88 = tpu.matmul %85, %85, %cst {dimension_numbers = #tpu.dot_dimension_numbers<[1], [1], [0], [0], [0, 0, 1, 0], [], []>} : vector<144x128xf32>, vector<144x128xf32>, vector<144x144xf32> -> vector<144x144xf32>
    %89 = arith.addf %87, %88 : vector<144x144xf32>
    %c0_31 = arith.constant 0 : index
    %c0_32 = arith.constant 0 : index
    %c0_33 = arith.constant 0 : index
    %90 = vector.load %arg5[%c0_31, %c0_32, %c0_33] : memref<1x144x144xf32, #tpu.memory_space<vmem>>, vector<1x144x144xf32>
    %91 = vector.shape_cast %90 : vector<1x144x144xf32> to vector<144x144xf32>
    %92 = vector.shape_cast %89 : vector<144x144xf32> to vector<1x144x144xf32>
    tpu.vector_store %arg5[%c0_31, %c0_32, %c0_33], %92 {strides = array<i32>} : memref<1x144x144xf32, #tpu.memory_space<vmem>>, vector<1x144x144xf32>,
    %c0_34 = arith.constant 0 : index
    %c0_35 = arith.constant 0 : index
    %c0_36 = arith.constant 0 : index
    %93 = vector.load %arg6[%c0_34, %c0_35, %c0_36] : memref<1x144x1xf32, #tpu.memory_space<vmem>>, vector<1x144x1xf32>
    %94 = vector.shape_cast %93 : vector<1x144x1xf32> to vector<144x1xf32>
    %cst_37 = arith.constant dense<0.000000e+00> : vector<144xf32>
    %95 = vector.multi_reduction <add>, %85, %cst_37 [1] : vector<144x128xf32> to vector<144xf32>
    %96 = vector.shape_cast %95 : vector<144xf32> to vector<144x1xf32>
    %97 = arith.addf %94, %96 : vector<144x1xf32>
    %c0_38 = arith.constant 0 : index
    %c0_39 = arith.constant 0 : index
    %c0_40 = arith.constant 0 : index
    %98 = vector.load %arg6[%c0_38, %c0_39, %c0_40] : memref<1x144x1xf32, #tpu.memory_space<vmem>>, vector<1x144x1xf32>
    %99 = vector.shape_cast %98 : vector<1x144x1xf32> to vector<144x1xf32>
    %100 = vector.shape_cast %97 : vector<144x1xf32> to vector<1x144x1xf32>
    tpu.vector_store %arg6[%c0_38, %c0_39, %c0_40], %100 {strides = array<i32>} : memref<1x144x1xf32, #tpu.memory_space<vmem>>, vector<1x144x1xf32>,
    return
  }
  func.func @transform_0(%arg0: i32, %arg1: i32) -> (i32, i32, i32) {
    %c0_i32 = arith.constant 0 : i32
    %c0_i32_0 = arith.constant 0 : i32
    %c0_i32_1 = arith.constant 0 : i32
    return %arg0, %c0_i32, %c0_i32_0 : i32, i32, i32
  }
  func.func @transform_1(%arg0: i32, %arg1: i32) -> (i32, i32, i32) {
    %c0_i32 = arith.constant 0 : i32
    %c0_i32_0 = arith.constant 0 : i32
    %c0_i32_1 = arith.constant 0 : i32
    return %arg0, %c0_i32, %c0_i32_0 : i32, i32, i32
  }
  func.func @transform_2(%arg0: i32, %arg1: i32) -> (i32, i32, i32) {
    %c0_i32 = arith.constant 0 : i32
    %c0_i32_0 = arith.constant 0 : i32
    %c0_i32_1 = arith.constant 0 : i32
    return %arg1, %c0_i32, %c0_i32_0 : i32, i32, i32
  }
  func.func @transform_3(%arg0: i32, %arg1: i32) -> (i32, i32, i32) {
    %c0_i32 = arith.constant 0 : i32
    %c0_i32_0 = arith.constant 0 : i32
    %c0_i32_1 = arith.constant 0 : i32
    return %arg0, %c0_i32, %c0_i32_0 : i32, i32, i32
  }
  func.func @transform_4(%arg0: i32, %arg1: i32) -> (i32, i32, i32) {
    %c0_i32 = arith.constant 0 : i32
    %c0_i32_0 = arith.constant 0 : i32
    %c0_i32_1 = arith.constant 0 : i32
    return %arg0, %c0_i32, %c0_i32_0 : i32, i32, i32
  }
}

</mosaic_0001>

<llo_original>
// kernel: rmi_loss_pallas.2
$region0: #{rmi_loss_pallas.2}
  #allocation0 [shape = 'u32[]', space=smem, size = 0x4, offset = 0x4, fixed_abs, tag = 'smem constant byte address 0x4 - core index']
  #allocation1 [shape = 'u32[144,128]{1,0:T(1,128)}', space=vmem, size = 0x12000, scoped, tag = 'internal scratch']
  %s0 = inlined_call_operand.vmem [shape: f32[16,128], index: 0, kind: input, shape index: {}]
  %s1 = inlined_call_operand.vmem [shape: f32[16,128], index: 1, kind: input, shape index: {}]
  %s2 = inlined_call_operand.vmem [shape: f32[1,1,128], index: 2, kind: output, shape index: {}]
  %s3 = sld [smem:[#allocation0]]
  $region18: #{rmi_loss_pallas.2} parent=0
    _
  %s5 = ssub.s32 1, %s3
  %s6 = scalar_select 0, %s5, %s3
  // Predicated region
  $region2: #{rmi_loss_pallas.2} parent=0 // pred_check
    _
  $region3: #{rmi_loss_pallas.2} parent=0 // pred_check_branch
    %8 = sbr.rel (0) target = $region5
  $region4: #{rmi_loss_pallas.2} parent=0 // pred_region
    _
  $region5: #{rmi_loss_pallas.2} parent=0 // pred_fallthru
    _
  // Predicated region
  $region6: #{rmi_loss_pallas.2} parent=0 // pred_check
    _
  $region7: #{rmi_loss_pallas.2} parent=0 // pred_check_branch
    %10 = sbr.rel (0) target = $region9
  $region8: #{rmi_loss_pallas.2} parent=0 // pred_region
    _
  $region9: #{rmi_loss_pallas.2} parent=0 // pred_fallthru
    _
  %v11 = vld [vmem:[%s0] sm:$0xff]
  %v12 = vld [vmem:[%s0 + $0x8] sm:$0xff]
  %v13 = vld [vmem:[%s1] sm:$0xff]
  %v14 = vld [vmem:[%s1 + $0x8] sm:$0xff]
  %v15 = vand.u32 2147483647, %v11
  %v16 = vand.u32 2147483647, %v12
  %v17 = vsub.f32 0.0, %v15
  %v18 = vsub.f32 0.0, %v16
  %v19 = vmul.f32 %v17, 1.442695
  %v20 = vpow.pop %v19
  %v21 = vmul.f32 %v18, 1.442695
  %v22 = vpow.pop %v21
  %v23 = vmax.f32 %v11, 0.0
  %v24 = vmax.f32 %v12, 0.0
  %v25 = vmul.f32 %v11, %v13
  %v26 = vmul.f32 %v12, %v14
  %v27 = vsub.f32 %v23, %v25
  %v28 = vsub.f32 %v24, %v26
  %v29 = vadd.f32 %v20, 1.0
  %v30 = vadd.f32 %v22, 1.0
  %v31 = vlog2.pop %v29
  %v32 = vmul.f32 %v31, 0.6931472
  %v33 = vlog2.pop %v30
  %v34 = vmul.f32 %v33, 0.6931472
  %v35 = vadd.f32 %v27, %v32
  %v36 = vadd.f32 %v28, %v34
  %v37 = vadd.f32 %v35, %v36
  %v38 = vrot.slane %v37, 4
  %v39 = vadd.f32 %v37, %v38
  %v40 = vrot.slane %v39, 2
  %v41 = vadd.f32 %v39, %v40
  %v42 = vrot.slane %v41, 1
  %v43 = vadd.f32 %v41, %v42
  %44 = vst [vmem:[%s2] sm:$0x1] %v43
  // Predicated region
  $region10: #{rmi_loss_pallas.2} parent=0 // pred_check
    _
  $region11: #{rmi_loss_pallas.2} parent=0 // pred_check_branch
    %46 = sbr.rel (0) target = $region13
  $region12: #{rmi_loss_pallas.2} parent=0 // pred_region
    _
  $region13: #{rmi_loss_pallas.2} parent=0 // pred_fallthru
    _
  // Predicated region
  $region14: #{rmi_loss_pallas.2} parent=0 // pred_check
    _
  $region15: #{rmi_loss_pallas.2} parent=0 // pred_check_branch
    %48 = sbr.rel (0) target = $region17
  $region16: #{rmi_loss_pallas.2} parent=0 // pred_region
    _
  $region17: #{rmi_loss_pallas.2} parent=0 // pred_fallthru
    _

// kernel: rmi_loss_pallas.3
$region0: #{rmi_loss_pallas.3}
  #allocation0 [shape = 'u32[]', space=smem, size = 0x4, offset = 0x4, fixed_abs, tag = 'smem constant byte address 0x4 - core index']
  #allocation1 [shape = 'u32[144,128]{1,0:T(1,128)}', space=vmem, size = 0x12000, scoped, tag = 'internal scratch']
  #allocation2 [shape = 'f32[144,128]{1,0:T(8,128)}', space=vmem, size = 0x12000, scoped, tag = 'scratch operand']
  %s0 = inlined_call_operand.vmem [shape: f32[1,8,256], index: 0, kind: input, shape index: {}]
  %s1 = inlined_call_operand.vmem [shape: f32[1,8,256], index: 1, kind: input, shape index: {}]
  %s2 = inlined_call_operand.hbm [shape: f32[1,1,128], index: 2, kind: input, shape index: {}]
  %s3 = inlined_call_operand.vmem [shape: f32[1,144,144], index: 3, kind: output, shape index: {0}]
  %s4 = inlined_call_operand.vmem [shape: f32[1,144,1], index: 4, kind: output, shape index: {1}]
  %5 = xla_tuple %s3, %s4
  %s6 = sld [smem:[#allocation0]]
  $region38: #{rmi_loss_pallas.3} parent=0
    _
  %s8 = ssub.s32 1, %s6
  %s9 = scalar_select 0, %s8, %s6
  $region1: #{rmi_loss_pallas.3} parent=0
    #allocation3 [shape = 'u8[512]{0}', space=vmem, size = 0x400, scoped, tag = 'input window, operand 2, single buffered']
    #allocation4 [shape = 's32[1]{0}', space=sflag, size = 0x4, scoped, tag = 'scoped memory for rmi_loss_pallas.3']
    %10 = vsyncpa [#allocation4], 0
    // Predicated region
    $region2: #{rmi_loss_pallas.3} parent=1 // pred_check
      _
    $region3: #{rmi_loss_pallas.3} parent=1 // pred_check_branch
      %12 = sbr.rel (0) target = $region5
    $region4: #{rmi_loss_pallas.3} parent=1 // pred_region
      _
    $region5: #{rmi_loss_pallas.3} parent=1 // pred_fallthru
      _
    // Predicated region
    $region6: #{rmi_loss_pallas.3} parent=1 // pred_check
      _
    $region7: #{rmi_loss_pallas.3} parent=1 // pred_check_branch
      %14 = sbr.rel (0) target = $region9
    $region8: #{rmi_loss_pallas.3} parent=1 // pred_region
      _
    $region9: #{rmi_loss_pallas.3} parent=1 // pred_fallthru
      _
    // Predicated region
    $region10: #{rmi_loss_pallas.3} parent=1 // pred_check
      _
    $region11: #{rmi_loss_pallas.3} parent=1 // pred_check_branch
      %16 = sbr.rel (0) target = $region13
    $region12: #{rmi_loss_pallas.3} parent=1 // pred_region
      %s18 = ssub.s32 16, 16
      %19 = vsyncadd [#allocation4], %s18
      %s21 = sshll.u32 [#allocation3], 4
      %s22 = int_to_ptr.vmem [resolvable:$true] %s21
      %24 = dma.hbm_to_vmem [thread:$0]  %s2, 16, %s22, [#allocation4]
    $region13: #{rmi_loss_pallas.3} parent=1 // pred_fallthru
      _
    // Predicated region
    $region14: #{rmi_loss_pallas.3} parent=1 // pred_check
      _
    $region15: #{rmi_loss_pallas.3} parent=1 // pred_check_branch
      %26 = sbr.rel (0) target = $region17
    $region16: #{rmi_loss_pallas.3} parent=1 // pred_region
      %27 = dma.done [#allocation4], 16
    $region17: #{rmi_loss_pallas.3} parent=1 // pred_fallthru
      _
    %p28 = scmp.eq.s32.totalorder 0, 0
    // Predicated region
    $region18: #{rmi_loss_pallas.3} parent=1 // pred_check
      %p29 = pneg %p28
    $region19: #{rmi_loss_pallas.3} parent=1 // pred_check_branch
      %31 = sbr.rel (%p29) target = $region21
    $region20: #{rmi_loss_pallas.3} parent=1 // pred_region
      %32 = vst [vmem:[%s3] sm:$0xff] 0.0
      %vm33 = vcmask 130048
      %34 = vst.msk [vmem:[%s3 + $0x8] sm:$0xff] %vm33, 0.0
      %35 = vst [vmem:[%s3 + $0x10] sm:$0xff] 0.0
      %36 = vst.msk [vmem:[%s3 + $0x18] sm:$0xff] %vm33, 0.0
      %37 = vst [vmem:[%s3 + $0x20] sm:$0xff] 0.0
      %38 = vst.msk [vmem:[%s3 + $0x28] sm:$0xff] %vm33, 0.0
      %39 = vst [vmem:[%s3 + $0x30] sm:$0xff] 0.0
      %40 = vst.msk [vmem:[%s3 + $0x38] sm:$0xff] %vm33, 0.0
      %41 = vst [vmem:[%s3 + $0x40] sm:$0xff] 0.0
      %42 = vst.msk [vmem:[%s3 + $0x48] sm:$0xff] %vm33, 0.0
      %43 = vst [vmem:[%s3 + $0x50] sm:$0xff] 0.0
      %44 = vst.msk [vmem:[%s3 + $0x58] sm:$0xff] %vm33, 0.0
      %45 = vst [vmem:[%s3 + $0x60] sm:$0xff] 0.0
      %46 = vst.msk [vmem:[%s3 + $0x68] sm:$0xff] %vm33, 0.0
      %47 = vst [vmem:[%s3 + $0x70] sm:$0xff] 0.0
      %48 = vst.msk [vmem:[%s3 + $0x78] sm:$0xff] %vm33, 0.0
      %49 = vst [vmem:[%s3 + $0x80] sm:$0xff] 0.0
      %50 = vst.msk [vmem:[%s3 + $0x88] sm:$0xff] %vm33, 0.0
      %51 = vst [vmem:[%s3 + $0x90] sm:$0xff] 0.0
      %52 = vst.msk [vmem:[%s3 + $0x98] sm:$0xff] %vm33, 0.0
      %53 = vst [vmem:[%s3 + $0xa0] sm:$0xff] 0.0
      %54 = vst.msk [vmem:[%s3 + $0xa8] sm:$0xff] %vm33, 0.0
      %55 = vst [vmem:[%s3 + $0xb0] sm:$0xff] 0.0
      %56 = vst.msk [vmem:[%s3 + $0xb8] sm:$0xff] %vm33, 0.0
      %57 = vst [vmem:[%s3 + $0xc0] sm:$0xff] 0.0
      %58 = vst.msk [vmem:[%s3 + $0xc8] sm:$0xff] %vm33, 0.0
      %59 = vst [vmem:[%s3 + $0xd0] sm:$0xff] 0.0
      %60 = vst.msk [vmem:[%s3 + $0xd8] sm:$0xff] %vm33, 0.0
      %61 = vst [vmem:[%s3 + $0xe0] sm:$0xff] 0.0
      %62 = vst.msk [vmem:[%s3 + $0xe8] sm:$0xff] %vm33, 0.0
      %63 = vst [vmem:[%s3 + $0xf0] sm:$0xff] 0.0
      %64 = vst.msk [vmem:[%s3 + $0xf8] sm:$0xff] %vm33, 0.0
      %65 = vst [vmem:[%s3 + $0x100] sm:$0xff] 0.0
      %66 = vst.msk [vmem:[%s3 + $0x108] sm:$0xff] %vm33, 0.0
      %67 = vst [vmem:[%s3 + $0x110] sm:$0xff] 0.0
      %68 = vst.msk [vmem:[%s3 + $0x118] sm:$0xff] %vm33, 0.0
      %vm69 = vcmask 7168
      %70 = vst.msk [vmem:[%s4] sm:$0xff] %vm69, 0.0
      %71 = vst.msk [vmem:[%s4 + $0x8] sm:$0xff] %vm69, 0.0
      %72 = vst.msk [vmem:[%s4 + $0x10] sm:$0xff] %vm69, 0.0
      %73 = vst.msk [vmem:[%s4 + $0x18] sm:$0xff] %vm69, 0.0
      %74 = vst.msk [vmem:[%s4 + $0x20] sm:$0xff] %vm69, 0.0
      %75 = vst.msk [vmem:[%s4 + $0x28] sm:$0xff] %vm69, 0.0
      %76 = vst.msk [vmem:[%s4 + $0x30] sm:$0xff] %vm69, 0.0
      %77 = vst.msk [vmem:[%s4 + $0x38] sm:$0xff] %vm69, 0.0
      %78 = vst.msk [vmem:[%s4 + $0x40] sm:$0xff] %vm69, 0.0
      %79 = vst.msk [vmem:[%s4 + $0x48] sm:$0xff] %vm69, 0.0
      %80 = vst.msk [vmem:[%s4 + $0x50] sm:$0xff] %vm69, 0.0
      %81 = vst.msk [vmem:[%s4 + $0x58] sm:$0xff] %vm69, 0.0
      %82 = vst.msk [vmem:[%s4 + $0x60] sm:$0xff] %vm69, 0.0
      %83 = vst.msk [vmem:[%s4 + $0x68] sm:$0xff] %vm69, 0.0
      %84 = vst.msk [vmem:[%s4 + $0x70] sm:$0xff] %vm69, 0.0
      %85 = vst.msk [vmem:[%s4 + $0x78] sm:$0xff] %vm69, 0.0
      %86 = vst.msk [vmem:[%s4 + $0x80] sm:$0xff] %vm69, 0.0
      %87 = vst.msk [vmem:[%s4 + $0x88] sm:$0xff] %vm69, 0.0
    $region21: #{rmi_loss_pallas.3} parent=1 // pred_fallthru
      _
    %s88 = smul.u32 0, 128
    %v89 = vld [vmem:[#allocation3] sm:$0x1]
    %s90 = sshra.s32 %s88, 7
    %s91 = sand.u32 %s88, 127
    %s92 = smul.addr %s90, 8
    %s93 = scalar_lea.vmem %s0, %s92
    %v94 = vld [vmem:[%s93] sm:$0xff]
    %v95 = vld [vmem:[%s93 + $0x8] sm:$0xff]
    %s96 = smul.addr %s90, 8
    %s97 = scalar_lea.vmem %s1, %s96
    %v98 = vld [vmem:[%s97] sm:$0xff]
    %v99 = vld [vmem:[%s97 + $0x8] sm:$0xff]
    %v101 = vlaneseq
    %v102 = vshrl.u32 %v101, 7
    %v103 = vsub.s32 0, %v102
    %v104 = vrot.slane %v89, %v103
    %v106 = vmul.f32 %v94, %v104
    %107 = vst [vmem:[#allocation2] sm:$0xff] %v106
    %108 = vrot.lane.b32.xlu0 %v104, 1
    %v109 = vpop.permute.xlu0 %108
    %v111 = vmul.f32 %v94, %v109
    %v112 = vmul.f32 %v95, %v109
    %115 = vrot.lane.b32.xlu0 %v111, 127
    %v116 = vpop.permute.xlu0 %115
    %117 = vrot.lane.b32.xlu0 %v112, 127
    %v118 = vpop.permute.xlu0 %117
    %vm119 = vcmask 1039360
    %v120 = vsel %vm119, %v116, %v118
    %122 = vst [vmem:[#allocation2 + $0x8] sm:$0xff] %v120
    %123 = vrot.lane.b32.xlu0 %v104, 2
    %v124 = vpop.permute.xlu0 %123
    %v126 = vmul.f32 %v94, %v124
    %v127 = vmul.f32 %v95, %v124
    %130 = vrot.lane.b32.xlu0 %v126, 126
    %v131 = vpop.permute.xlu0 %130
    %132 = vrot.lane.b32.xlu0 %v127, 126
    %v133 = vpop.permute.xlu0 %132
    %vm134 = vcmask 1031168
    %v135 = vsel %vm134, %v131, %v133
    %137 = vst [vmem:[#allocation2 + $0x10] sm:$0xff] %v135
    %138 = vrot.lane.b32.xlu0 %v104, 6
    %v139 = vpop.permute.xlu0 %138
    %v141 = vmul.f32 %v94, %v139
    %v142 = vmul.f32 %v95, %v139
    %145 = vrot.lane.b32.xlu0 %v141, 122
    %v146 = vpop.permute.xlu0 %145
    %147 = vrot.lane.b32.xlu0 %v142, 122
    %v148 = vpop.permute.xlu0 %147
    %vm149 = vcmask 998400
    %v150 = vsel %vm149, %v146, %v148
    %152 = vst [vmem:[#allocation2 + $0x18] sm:$0xff] %v150
    %153 = vrot.lane.b32.xlu0 %v104, 7
    %v154 = vpop.permute.xlu0 %153
    %v156 = vmul.f32 %v94, %v154
    %v157 = vmul.f32 %v95, %v154
    %160 = vrot.lane.b32.xlu0 %v156, 121
    %v161 = vpop.permute.xlu0 %160
    %162 = vrot.lane.b32.xlu0 %v157, 121
    %v163 = vpop.permute.xlu0 %162
    %vm164 = vcmask 990208
    %v165 = vsel %vm164, %v161, %v163
    %167 = vst [vmem:[#allocation2 + $0x20] sm:$0xff] %v165
    %168 = vrot.lane.b32.xlu0 %v104, 8
    %v169 = vpop.permute.xlu0 %168
    %v171 = vmul.f32 %v94, %v169
    %v172 = vmul.f32 %v95, %v169
    %175 = vrot.lane.b32.xlu0 %v171, 120
    %v176 = vpop.permute.xlu0 %175
    %177 = vrot.lane.b32.xlu0 %v172, 120
    %v178 = vpop.permute.xlu0 %177
    %vm179 = vcmask 982016
    %v180 = vsel %vm179, %v176, %v178
    %182 = vst [vmem:[#allocation2 + $0x28] sm:$0xff] %v180
    %183 = vrot.lane.b32.xlu0 %v104, 12
    %v184 = vpop.permute.xlu0 %183
    %v186 = vmul.f32 %v94, %v184
    %v187 = vmul.f32 %v95, %v184
    %190 = vrot.lane.b32.xlu0 %v186, 116
    %v191 = vpop.permute.xlu0 %190
    %192 = vrot.lane.b32.xlu0 %v187, 116
    %v193 = vpop.permute.xlu0 %192
    %vm194 = vcmask 949248
    %v195 = vsel %vm194, %v191, %v193
    %197 = vst [vmem:[#allocation2 + $0x30] sm:$0xff] %v195
    %198 = vrot.lane.b32.xlu0 %v104, 13
    %v199 = vpop.permute.xlu0 %198
    %v201 = vmul.f32 %v94, %v199
    %v202 = vmul.f32 %v95, %v199
    %205 = vrot.lane.b32.xlu0 %v201, 115
    %v206 = vpop.permute.xlu0 %205
    %207 = vrot.lane.b32.xlu0 %v202, 115
    %v208 = vpop.permute.xlu0 %207
    %vm209 = vcmask 941056
    %v210 = vsel %vm209, %v206, %v208
    %212 = vst [vmem:[#allocation2 + $0x38] sm:$0xff] %v210
    %213 = vrot.lane.b32.xlu0 %v104, 14
    %v214 = vpop.permute.xlu0 %213
    %v216 = vmul.f32 %v94, %v214
    %v217 = vmul.f32 %v95, %v214
    %220 = vrot.lane.b32.xlu0 %v216, 114
    %v221 = vpop.permute.xlu0 %220
    %222 = vrot.lane.b32.xlu0 %v217, 114
    %v223 = vpop.permute.xlu0 %222
    %vm224 = vcmask 932864
    %v225 = vsel %vm224, %v221, %v223
    %227 = vst [vmem:[#allocation2 + $0x40] sm:$0xff] %v225
    %v228 = vmul.f32 %v98, %v104
    %229 = vst [vmem:[#allocation2 + $0x48] sm:$0xff] %v228
    %v230 = vmul.f32 %v98, %v109
    %v231 = vmul.f32 %v99, %v109
    %234 = vrot.lane.b32.xlu0 %v230, 127
    %v235 = vpop.permute.xlu0 %234
    %236 = vrot.lane.b32.xlu0 %v231, 127
    %v237 = vpop.permute.xlu0 %236
    %v238 = vsel %vm119, %v235, %v237
    %240 = vst [vmem:[#allocation2 + $0x50] sm:$0xff] %v238
    %v241 = vmul.f32 %v98, %v124
    %v242 = vmul.f32 %v99, %v124
    %245 = vrot.lane.b32.xlu0 %v241, 126
    %v246 = vpop.permute.xlu0 %245
    %247 = vrot.lane.b32.xlu0 %v242, 126
    %v248 = vpop.permute.xlu0 %247
    %v249 = vsel %vm134, %v246, %v248
    %251 = vst [vmem:[#allocation2 + $0x58] sm:$0xff] %v249
    %v252 = vmul.f32 %v98, %v139
    %v253 = vmul.f32 %v99, %v139
    %256 = vrot.lane.b32.xlu0 %v252, 122
    %v257 = vpop.permute.xlu0 %256
    %258 = vrot.lane.b32.xlu0 %v253, 122
    %v259 = vpop.permute.xlu0 %258
    %v260 = vsel %vm149, %v257, %v259
    %262 = vst [vmem:[#allocation2 + $0x60] sm:$0xff] %v260
    %v263 = vmul.f32 %v98, %v154
    %v264 = vmul.f32 %v99, %v154
    %267 = vrot.lane.b32.xlu0 %v263, 121
    %v268 = vpop.permute.xlu0 %267
    %269 = vrot.lane.b32.xlu0 %v264, 121
    %v270 = vpop.permute.xlu0 %269
    %v271 = vsel %vm164, %v268, %v270
    %273 = vst [vmem:[#allocation2 + $0x68] sm:$0xff] %v271
    %v274 = vmul.f32 %v98, %v169
    %v275 = vmul.f32 %v99, %v169
    %278 = vrot.lane.b32.xlu0 %v274, 120
    %v279 = vpop.permute.xlu0 %278
    %280 = vrot.lane.b32.xlu0 %v275, 120
    %v281 = vpop.permute.xlu0 %280
    %v282 = vsel %vm179, %v279, %v281
    %284 = vst [vmem:[#allocation2 + $0x70] sm:$0xff] %v282
    %v285 = vmul.f32 %v98, %v184
    %v286 = vmul.f32 %v99, %v184
    %289 = vrot.lane.b32.xlu0 %v285, 116
    %v290 = vpop.permute.xlu0 %289
    %291 = vrot.lane.b32.xlu0 %v286, 116
    %v292 = vpop.permute.xlu0 %291
    %v293 = vsel %vm194, %v290, %v292
    %295 = vst [vmem:[#allocation2 + $0x78] sm:$0xff] %v293
    %v296 = vmul.f32 %v98, %v199
    %v297 = vmul.f32 %v99, %v199
    %300 = vrot.lane.b32.xlu0 %v296, 115
    %v301 = vpop.permute.xlu0 %300
    %302 = vrot.lane.b32.xlu0 %v297, 115
    %v303 = vpop.permute.xlu0 %302
    %v304 = vsel %vm209, %v301, %v303
    %306 = vst [vmem:[#allocation2 + $0x80] sm:$0xff] %v304
    %v307 = vmul.f32 %v98, %v214
    %v308 = vmul.f32 %v99, %v214
    %311 = vrot.lane.b32.xlu0 %v307, 114
    %v312 = vpop.permute.xlu0 %311
    %313 = vrot.lane.b32.xlu0 %v308, 114
    %v314 = vpop.permute.xlu0 %313
    %v315 = vsel %vm224, %v312, %v314
    %317 = vst [vmem:[#allocation2 + $0x88] sm:$0xff] %v315
    %v318 = vld [vmem:[#allocation2] sm:$0xff]
    %v319 = vld [vmem:[#allocation2 + $0x8] sm:$0xff]
    %v320 = vld [vmem:[#allocation2 + $0x10] sm:$0xff]
    %v321 = vld [vmem:[#allocation2 + $0x18] sm:$0xff]
    %v322 = vld [vmem:[#allocation2 + $0x20] sm:$0xff]
    %v323 = vld [vmem:[#allocation2 + $0x28] sm:$0xff]
    %v324 = vld [vmem:[#allocation2 + $0x30] sm:$0xff]
    %v325 = vld [vmem:[#allocation2 + $0x38] sm:$0xff]
    %v326 = vld [vmem:[#allocation2 + $0x40] sm:$0xff]
    %v327 = vld [vmem:[#allocation2 + $0x48] sm:$0xff]
    %v328 = vld [vmem:[#allocation2 + $0x50] sm:$0xff]
    %v329 = vld [vmem:[#allocation2 + $0x58] sm:$0xff]
    %v330 = vld [vmem:[#allocation2 + $0x60] sm:$0xff]
    %v331 = vld [vmem:[#allocation2 + $0x68] sm:$0xff]
    %v332 = vld [vmem:[#allocation2 + $0x70] sm:$0xff]
    %v333 = vld [vmem:[#allocation2 + $0x78] sm:$0xff]
    %v334 = vld [vmem:[#allocation2 + $0x80] sm:$0xff]
    %v335 = vld [vmem:[#allocation2 + $0x88] sm:$0xff]
    %v336 = vld [vmem:[%s3] sm:$0xff]
    %v337 = vld [vmem:[%s3 + $0x8] sm:$0xff]
    %v338 = vld [vmem:[%s3 + $0x10] sm:$0xff]
    %v339 = vld [vmem:[%s3 + $0x18] sm:$0xff]
    %v340 = vld [vmem:[%s3 + $0x20] sm:$0xff]
    %v341 = vld [vmem:[%s3 + $0x28] sm:$0xff]
    %v342 = vld [vmem:[%s3 + $0x30] sm:$0xff]
    %v343 = vld [vmem:[%s3 + $0x38] sm:$0xff]
    %v344 = vld [vmem:[%s3 + $0x40] sm:$0xff]
    %v345 = vld [vmem:[%s3 + $0x48] sm:$0xff]
    %v346 = vld [vmem:[%s3 + $0x50] sm:$0xff]
    %v347 = vld [vmem:[%s3 + $0x58] sm:$0xff]
    %v348 = vld [vmem:[%s3 + $0x60] sm:$0xff]
    %v349 = vld [vmem:[%s3 + $0x68] sm:$0xff]
    %v350 = vld [vmem:[%s3 + $0x70] sm:$0xff]
    %v351 = vld [vmem:[%s3 + $0x78] sm:$0xff]
    %v352 = vld [vmem:[%s3 + $0x80] sm:$0xff]
    %v353 = vld [vmem:[%s3 + $0x88] sm:$0xff]
    %v354 = vld [vmem:[%s3 + $0x90] sm:$0xff]
    %v355 = vld [vmem:[%s3 + $0x98] sm:$0xff]
    %v356 = vld [vmem:[%s3 + $0xa0] sm:$0xff]
    %v357 = vld [vmem:[%s3 + $0xa8] sm:$0xff]
    %v358 = vld [vmem:[%s3 + $0xb0] sm:$0xff]
    %v359 = vld [vmem:[%s3 + $0xb8] sm:$0xff]
    %v360 = vld [vmem:[%s3 + $0xc0] sm:$0xff]
    %v361 = vld [vmem:[%s3 + $0xc8] sm:$0xff]
    %v362 = vld [vmem:[%s3 + $0xd0] sm:$0xff]
    %v363 = vld [vmem:[%s3 + $0xd8] sm:$0xff]
    %v364 = vld [vmem:[%s3 + $0xe0] sm:$0xff]
    %v365 = vld [vmem:[%s3 + $0xe8] sm:$0xff]
    %v366 = vld [vmem:[%s3 + $0xf0] sm:$0xff]
    %v367 = vld [vmem:[%s3 + $0xf8] sm:$0xff]
    %v368 = vld [vmem:[%s3 + $0x100] sm:$0xff]
    %v369 = vld [vmem:[%s3 + $0x108] sm:$0xff]
    %v370 = vld [vmem:[%s3 + $0x110] sm:$0xff]
    %v371 = vld [vmem:[%s3 + $0x118] sm:$0xff]
    %372 = vmatprep.subr.mxu0 0.0
    %373 = vmatpush1.xpose.msra.mxu0 %v318
    %374 = vmatprep.subr.mxu0 0.0
    %375 = vmatpush1.xpose.msra.mxu0 %v319
    %376 = vmatprep.subr.mxu0 0.0
    %377 = vmatpush1.xpose.msra.mxu0 %v320
    %378 = vmatprep.subr.mxu0 0.0
    %379 = vmatpush1.xpose.msra.mxu0 %v321
    %380 = vmatprep.subr.mxu0 0.0
    %381 = vmatpush1.xpose.msra.mxu0 %v322
    %382 = vmatprep.subr.mxu0 0.0
    %383 = vmatpush1.xpose.msra.mxu0 %v323
    %384 = vmatprep.subr.mxu0 0.0
    %385 = vmatpush1.xpose.msra.mxu0 %v324
    %386 = vmatprep.subr.mxu0 0.0
    %387 = vmatpush1.xpose.msra.mxu0 %v325
    %388 = vmatprep.subr.mxu0 0.0
    %389 = vmatpush1.xpose.msra.mxu0 %v326
    %390 = vmatprep.subr.mxu0 0.0
    %391 = vmatpush1.xpose.msra.mxu0 %v327
    %392 = vmatprep.subr.mxu0 0.0
    %393 = vmatpush1.xpose.msra.mxu0 %v328
    %394 = vmatprep.subr.mxu0 0.0
    %395 = vmatpush1.xpose.msra.mxu0 %v329
    %396 = vmatprep.subr.mxu0 0.0
    %397 = vmatpush1.xpose.msra.mxu0 %v330
    %398 = vmatprep.subr.mxu0 0.0
    %399 = vmatpush1.xpose.msra.mxu0 %v331
    %400 = vmatprep.subr.mxu0 0.0
    %401 = vmatpush1.xpose.msra.mxu0 %v332
    %402 = vmatprep.subr.mxu0 0.0
    %403 = vmatpush1.xpose.msra.mxu0 %v333
    %404 = vmatprep.subr.mxu0 0.0
    %405 = vmatpush1.xpose.msra.mxu0 %v334
    %406 = vmatprep.subr.mxu0 0.0
    %407 = vmatpush1.xpose.msra.mxu0 %v335
    %408 = vmatprep.subr.mxu0 0.0
    %409 = vmatpush1.xpose.msra.mxu0 0.0
    %410 = vmatprep.subr.mxu0 0.0
    %411 = vmatpush1.xpose.msra.mxu0 0.0
    %412 = vmatprep.subr.mxu0 0.0
    %413 = vmatpush1.xpose.msra.mxu0 0.0
    %414 = vmatprep.subr.mxu0 0.0
    %415 = vmatpush1.xpose.msra.mxu0 0.0
    %416 = vmatprep.subr.mxu0 0.0
    %417 = vmatpush1.xpose.msra.mxu0 0.0
    %418 = vmatprep.subr.mxu0 0.0
    %419 = vmatpush1.xpose.msra.mxu0 0.0
    %420 = vmatprep.subr.mxu0 0.0
    %421 = vmatpush1.xpose.msra.mxu0 0.0
    %422 = vmatprep.subr.mxu0 0.0
    %423 = vmatpush1.xpose.msra.mxu0 0.0
    %424 = vmatprep.subr.mxu0 0.0
    %425 = vmatpush1.xpose.msra.mxu0 0.0
    %426 = vmatprep.subr.mxu0 0.0
    %427 = vmatpush1.xpose.msra.mxu0 0.0
    %428 = vmatprep.subr.mxu0 0.0
    %429 = vmatpush1.xpose.msra.mxu0 0.0
    %430 = vmatprep.subr.mxu0 0.0
    %431 = vmatpush1.xpose.msra.mxu0 0.0
    %432 = vmatprep.subr.mxu0 0.0
    %433 = vmatpush1.xpose.msra.mxu0 0.0
    %434 = vmatprep.subr.mxu0 0.0
    %435 = vmatpush1.xpose.msra.mxu0 0.0
    %436 = vmatprep.mubr.f32.mxu0 0.0
    %437 = vmatmul.mubr.f32.gmra.mrb[0].mxu0 %v318
    %v438 = vpop.f32.mrb[0].mxu0
    %v439 = vadd.f32 0.0, %v438
    %v440 = vpop.f32.mrb[0].mxu0
    %v441 = vadd.f32 0.0, %v440
    %442 = vmatprep.mubr.f32.mxu0 0.0
    %443 = vmatmul.mubr.f32.gmra.mrb[0].mxu0 %v319
    %v444 = vpop.f32.mrb[0].mxu0
    %v445 = vadd.f32 0.0, %v444
    %v446 = vpop.f32.mrb[0].mxu0
    %v447 = vadd.f32 0.0, %v446
    %448 = vmatprep.mubr.f32.mxu0 0.0
    %449 = vmatmul.mubr.f32.gmra.mrb[0].mxu0 %v320
    %v450 = vpop.f32.mrb[0].mxu0
    %v451 = vadd.f32 0.0, %v450
    %v452 = vpop.f32.mrb[0].mxu0
    %v453 = vadd.f32 0.0, %v452
    %454 = vmatprep.mubr.f32.mxu0 0.0
    %455 = vmatmul.mubr.f32.gmra.mrb[0].mxu0 %v321
    %v456 = vpop.f32.mrb[0].mxu0
    %v457 = vadd.f32 0.0, %v456
    %v458 = vpop.f32.mrb[0].mxu0
    %v459 = vadd.f32 0.0, %v458
    %460 = vmatprep.mubr.f32.mxu0 0.0
    %461 = vmatmul.mubr.f32.gmra.mrb[0].mxu0 %v322
    %v462 = vpop.f32.mrb[0].mxu0
    %v463 = vadd.f32 0.0, %v462
    %v464 = vpop.f32.mrb[0].mxu0
    %v465 = vadd.f32 0.0, %v464
    %466 = vmatprep.mubr.f32.mxu0 0.0
    %467 = vmatmul.mubr.f32.gmra.mrb[0].mxu0 %v323
    %v468 = vpop.f32.mrb[0].mxu0
    %v469 = vadd.f32 0.0, %v468
    %v470 = vpop.f32.mrb[0].mxu0
    %v471 = vadd.f32 0.0, %v470
    %472 = vmatprep.mubr.f32.mxu0 0.0
    %473 = vmatmul.mubr.f32.gmra.mrb[0].mxu0 %v324
    %v474 = vpop.f32.mrb[0].mxu0
    %v475 = vadd.f32 0.0, %v474
    %v476 = vpop.f32.mrb[0].mxu0
    %v477 = vadd.f32 0.0, %v476
    %478 = vmatprep.mubr.f32.mxu0 0.0
    %479 = vmatmul.mubr.f32.gmra.mrb[0].mxu0 %v325
    %v480 = vpop.f32.mrb[0].mxu0
    %v481 = vadd.f32 0.0, %v480
    %v482 = vpop.f32.mrb[0].mxu0
    %v483 = vadd.f32 0.0, %v482
    %484 = vmatprep.mubr.f32.mxu0 0.0
    %485 = vmatmul.mubr.f32.gmra.mrb[0].mxu0 %v326
    %v486 = vpop.f32.mrb[0].mxu0
    %v487 = vadd.f32 0.0, %v486
    %v488 = vpop.f32.mrb[0].mxu0
    %v489 = vadd.f32 0.0, %v488
    %490 = vmatprep.mubr.f32.mxu0 0.0
    %491 = vmatmul.mubr.f32.gmra.mrb[0].mxu0 %v327
    %v492 = vpop.f32.mrb[0].mxu0
    %v493 = vadd.f32 0.0, %v492
    %v494 = vpop.f32.mrb[0].mxu0
    %v495 = vadd.f32 0.0, %v494
    %496 = vmatprep.mubr.f32.mxu0 0.0
    %497 = vmatmul.mubr.f32.gmra.mrb[0].mxu0 %v328
    %v498 = vpop.f32.mrb[0].mxu0
    %v499 = vadd.f32 0.0, %v498
    %v500 = vpop.f32.mrb[0].mxu0
    %v501 = vadd.f32 0.0, %v500
    %502 = vmatprep.mubr.f32.mxu0 0.0
    %503 = vmatmul.mubr.f32.gmra.mrb[0].mxu0 %v329
    %v504 = vpop.f32.mrb[0].mxu0
    %v505 = vadd.f32 0.0, %v504
    %v506 = vpop.f32.mrb[0].mxu0
    %v507 = vadd.f32 0.0, %v506
    %508 = vmatprep.mubr.f32.mxu0 0.0
    %509 = vmatmul.mubr.f32.gmra.mrb[0].mxu0 %v330
    %v510 = vpop.f32.mrb[0].mxu0
    %v511 = vadd.f32 0.0, %v510
    %v512 = vpop.f32.mrb[0].mxu0
    %v513 = vadd.f32 0.0, %v512
    %514 = vmatprep.mubr.f32.mxu0 0.0
    %515 = vmatmul.mubr.f32.gmra.mrb[0].mxu0 %v331
    %v516 = vpop.f32.mrb[0].mxu0
    %v517 = vadd.f32 0.0, %v516
    %v518 = vpop.f32.mrb[0].mxu0
    %v519 = vadd.f32 0.0, %v518
    %520 = vmatprep.mubr.f32.mxu0 0.0
    %521 = vmatmul.mubr.f32.gmra.mrb[0].mxu0 %v332
    %v522 = vpop.f32.mrb[0].mxu0
    %v523 = vadd.f32 0.0, %v522
    %v524 = vpop.f32.mrb[0].mxu0
    %v525 = vadd.f32 0.0, %v524
    %526 = vmatprep.mubr.f32.mxu0 0.0
    %527 = vmatmul.mubr.f32.gmra.mrb[0].mxu0 %v333
    %v528 = vpop.f32.mrb[0].mxu0
    %v529 = vadd.f32 0.0, %v528
    %v530 = vpop.f32.mrb[0].mxu0
    %v531 = vadd.f32 0.0, %v530
    %532 = vmatprep.mubr.f32.mxu0 0.0
    %533 = vmatmul.mubr.f32.gmra.mrb[0].mxu0 %v334
    %v534 = vpop.f32.mrb[0].mxu0
    %v535 = vadd.f32 0.0, %v534
    %v536 = vpop.f32.mrb[0].mxu0
    %v537 = vadd.f32 0.0, %v536
    %538 = vmatprep.mubr.f32.mxu0 0.0
    %539 = vmatmul.mubr.f32.gmra.mrb[0].mxu0 %v335
    %v540 = vpop.f32.mrb[0].mxu0
    %v541 = vadd.f32 0.0, %v540
    %v542 = vpop.f32.mrb[0].mxu0
    %v543 = vadd.f32 0.0, %v542
    %544 = vdwg.mxu0
    %v545 = vadd.f32 %v336, %v439
    %v546 = vadd.f32 %v337, %v441
    %v547 = vadd.f32 %v338, %v445
    %v548 = vadd.f32 %v339, %v447
    %v549 = vadd.f32 %v340, %v451
    %v550 = vadd.f32 %v341, %v453
    %v551 = vadd.f32 %v342, %v457
    %v552 = vadd.f32 %v343, %v459
    %v553 = vadd.f32 %v344, %v463
    %v554 = vadd.f32 %v345, %v465
    %v555 = vadd.f32 %v346, %v469
    %v556 = vadd.f32 %v347, %v471
    %v557 = vadd.f32 %v348, %v475
    %v558 = vadd.f32 %v349, %v477
    %v559 = vadd.f32 %v350, %v481
    %v560 = vadd.f32 %v351, %v483
    %v561 = vadd.f32 %v352, %v487
    %v562 = vadd.f32 %v353, %v489
    %v563 = vadd.f32 %v354, %v493
    %v564 = vadd.f32 %v355, %v495
    %v565 = vadd.f32 %v356, %v499
    %v566 = vadd.f32 %v357, %v501
    %v567 = vadd.f32 %v358, %v505
    %v568 = vadd.f32 %v359, %v507
    %v569 = vadd.f32 %v360, %v511
    %v570 = vadd.f32 %v361, %v513
    %v571 = vadd.f32 %v362, %v517
    %v572 = vadd.f32 %v363, %v519
    %v573 = vadd.f32 %v364, %v523
    %v574 = vadd.f32 %v365, %v525
    %v575 = vadd.f32 %v366, %v529
    %v576 = vadd.f32 %v367, %v531
    %v577 = vadd.f32 %v368, %v535
    %v578 = vadd.f32 %v369, %v537
    %v579 = vadd.f32 %v370, %v541
    %v580 = vadd.f32 %v371, %v543
    %581 = vst [vmem:[%s3] sm:$0xff] %v545
    %vm582 = vcmask 130048
    %583 = vst.msk [vmem:[%s3 + $0x8] sm:$0xff] %vm582, %v546
    %584 = vst [vmem:[%s3 + $0x10] sm:$0xff] %v547
    %585 = vst.msk [vmem:[%s3 + $0x18] sm:$0xff] %vm582, %v548
    %586 = vst [vmem:[%s3 + $0x20] sm:$0xff] %v549
    %587 = vst.msk [vmem:[%s3 + $0x28] sm:$0xff] %vm582, %v550
    %588 = vst [vmem:[%s3 + $0x30] sm:$0xff] %v551
    %589 = vst.msk [vmem:[%s3 + $0x38] sm:$0xff] %vm582, %v552
    %590 = vst [vmem:[%s3 + $0x40] sm:$0xff] %v553
    %591 = vst.msk [vmem:[%s3 + $0x48] sm:$0xff] %vm582, %v554
    %592 = vst [vmem:[%s3 + $0x50] sm:$0xff] %v555
    %593 = vst.msk [vmem:[%s3 + $0x58] sm:$0xff] %vm582, %v556
    %594 = vst [vmem:[%s3 + $0x60] sm:$0xff] %v557
    %595 = vst.msk [vmem:[%s3 + $0x68] sm:$0xff] %vm582, %v558
    %596 = vst [vmem:[%s3 + $0x70] sm:$0xff] %v559
    %597 = vst.msk [vmem:[%s3 + $0x78] sm:$0xff] %vm582, %v560
    %598 = vst [vmem:[%s3 + $0x80] sm:$0xff] %v561
    %599 = vst.msk [vmem:[%s3 + $0x88] sm:$0xff] %vm582, %v562
    %600 = vst [vmem:[%s3 + $0x90] sm:$0xff] %v563
    %601 = vst.msk [vmem:[%s3 + $0x98] sm:$0xff] %vm582, %v564
    %602 = vst [vmem:[%s3 + $0xa0] sm:$0xff] %v565
    %603 = vst.msk [vmem:[%s3 + $0xa8] sm:$0xff] %vm582, %v566
    %604 = vst [vmem:[%s3 + $0xb0] sm:$0xff] %v567
    %605 = vst.msk [vmem:[%s3 + $0xb8] sm:$0xff] %vm582, %v568
    %606 = vst [vmem:[%s3 + $0xc0] sm:$0xff] %v569
    %607 = vst.msk [vmem:[%s3 + $0xc8] sm:$0xff] %vm582, %v570
    %608 = vst [vmem:[%s3 + $0xd0] sm:$0xff] %v571
    %609 = vst.msk [vmem:[%s3 + $0xd8] sm:$0xff] %vm582, %v572
    %610 = vst [vmem:[%s3 + $0xe0] sm:$0xff] %v573
    %611 = vst.msk [vmem:[%s3 + $0xe8] sm:$0xff] %vm582, %v574
    %612 = vst [vmem:[%s3 + $0xf0] sm:$0xff] %v575
    %613 = vst.msk [vmem:[%s3 + $0xf8] sm:$0xff] %vm582, %v576
    %614 = vst [vmem:[%s3 + $0x100] sm:$0xff] %v577
    %615 = vst.msk [vmem:[%s3 + $0x108] sm:$0xff] %vm582, %v578
    %616 = vst [vmem:[%s3 + $0x110] sm:$0xff] %v579
    %617 = vst.msk [vmem:[%s3 + $0x118] sm:$0xff] %vm582, %v580
    %v618 = vld [vmem:[%s4] sm:$0xff]
    %v619 = vld [vmem:[%s4 + $0x8] sm:$0xff]
    %v620 = vld [vmem:[%s4 + $0x10] sm:$0xff]
    %v621 = vld [vmem:[%s4 + $0x18] sm:$0xff]
    %v622 = vld [vmem:[%s4 + $0x20] sm:$0xff]
    %v623 = vld [vmem:[%s4 + $0x28] sm:$0xff]
    %v624 = vld [vmem:[%s4 + $0x30] sm:$0xff]
    %v625 = vld [vmem:[%s4 + $0x38] sm:$0xff]
    %v626 = vld [vmem:[%s4 + $0x40] sm:$0xff]
    %v627 = vld [vmem:[%s4 + $0x48] sm:$0xff]
    %v628 = vld [vmem:[%s4 + $0x50] sm:$0xff]
    %v629 = vld [vmem:[%s4 + $0x58] sm:$0xff]
    %v630 = vld [vmem:[%s4 + $0x60] sm:$0xff]
    %v631 = vld [vmem:[%s4 + $0x68] sm:$0xff]
    %v632 = vld [vmem:[%s4 + $0x70] sm:$0xff]
    %v633 = vld [vmem:[%s4 + $0x78] sm:$0xff]
    %v634 = vld [vmem:[%s4 + $0x80] sm:$0xff]
    %v635 = vld [vmem:[%s4 + $0x88] sm:$0xff]
    %636 = vadd.xlane.f32.xlu0 %v318
    %v637 = vpop.xlane.xlu0 %636
    %638 = vadd.xlane.f32.xlu0 %v319
    %v639 = vpop.xlane.xlu0 %638
    %640 = vadd.xlane.f32.xlu0 %v320
    %v641 = vpop.xlane.xlu0 %640
    %642 = vadd.xlane.f32.xlu0 %v321
    %v643 = vpop.xlane.xlu0 %642
    %644 = vadd.xlane.f32.xlu0 %v322
    %v645 = vpop.xlane.xlu0 %644
    %646 = vadd.xlane.f32.xlu0 %v323
    %v647 = vpop.xlane.xlu0 %646
    %648 = vadd.xlane.f32.xlu0 %v324
    %v649 = vpop.xlane.xlu0 %648
    %650 = vadd.xlane.f32.xlu0 %v325
    %v651 = vpop.xlane.xlu0 %650
    %652 = vadd.xlane.f32.xlu0 %v326
    %v653 = vpop.xlane.xlu0 %652
    %654 = vadd.xlane.f32.xlu0 %v327
    %v655 = vpop.xlane.xlu0 %654
    %656 = vadd.xlane.f32.xlu0 %v328
    %v657 = vpop.xlane.xlu0 %656
    %658 = vadd.xlane.f32.xlu0 %v329
    %v659 = vpop.xlane.xlu0 %658
    %660 = vadd.xlane.f32.xlu0 %v330
    %v661 = vpop.xlane.xlu0 %660
    %662 = vadd.xlane.f32.xlu0 %v331
    %v663 = vpop.xlane.xlu0 %662
    %664 = vadd.xlane.f32.xlu0 %v332
    %v665 = vpop.xlane.xlu0 %664
    %666 = vadd.xlane.f32.xlu0 %v333
    %v667 = vpop.xlane.xlu0 %666
    %668 = vadd.xlane.f32.xlu0 %v334
    %v669 = vpop.xlane.xlu0 %668
    %670 = vadd.xlane.f32.xlu0 %v335
    %v671 = vpop.xlane.xlu0 %670
    %v672 = vadd.f32 %v618, %v637
    %v673 = vadd.f32 %v619, %v639
    %v674 = vadd.f32 %v620, %v641
    %v675 = vadd.f32 %v621, %v643
    %v676 = vadd.f32 %v622, %v645
    %v677 = vadd.f32 %v623, %v647
    %v678 = vadd.f32 %v624, %v649
    %v679 = vadd.f32 %v625, %v651
    %v680 = vadd.f32 %v626, %v653
    %v681 = vadd.f32 %v627, %v655
    %v682 = vadd.f32 %v628, %v657
    %v683 = vadd.f32 %v629, %v659
    %v684 = vadd.f32 %v630, %v661
    %v685 = vadd.f32 %v631, %v663
    %v686 = vadd.f32 %v632, %v665
    %v687 = vadd.f32 %v633, %v667
    %v688 = vadd.f32 %v634, %v669
    %v689 = vadd.f32 %v635, %v671
    %vm690 = vcmask 7168
    %691 = vst.msk [vmem:[%s4] sm:$0xff] %vm690, %v672
    %692 = vst.msk [vmem:[%s4 + $0x8] sm:$0xff] %vm690, %v673
    %693 = vst.msk [vmem:[%s4 + $0x10] sm:$0xff] %vm690, %v674
    %694 = vst.msk [vmem:[%s4 + $0x18] sm:$0xff] %vm690, %v675
    %695 = vst.msk [vmem:[%s4 + $0x20] sm:$0xff] %vm690, %v676
    %696 = vst.msk [vmem:[%s4 + $0x28] sm:$0xff] %vm690, %v677
    %697 = vst.msk [vmem:[%s4 + $0x30] sm:$0xff] %vm690, %v678
    %698 = vst.msk [vmem:[%s4 + $0x38] sm:$0xff] %vm690, %v679
    %699 = vst.msk [vmem:[%s4 + $0x40] sm:$0xff] %vm690, %v680
    %700 = vst.msk [vmem:[%s4 + $0x48] sm:$0xff] %vm690, %v681
    %701 = vst.msk [vmem:[%s4 + $0x50] sm:$0xff] %vm690, %v682
    %702 = vst.msk [vmem:[%s4 + $0x58] sm:$0xff] %vm690, %v683
    %703 = vst.msk [vmem:[%s4 + $0x60] sm:$0xff] %vm690, %v684
    %704 = vst.msk [vmem:[%s4 + $0x68] sm:$0xff] %vm690, %v685
    %705 = vst.msk [vmem:[%s4 + $0x70] sm:$0xff] %vm690, %v686
    %706 = vst.msk [vmem:[%s4 + $0x78] sm:$0xff] %vm690, %v687
    %707 = vst.msk [vmem:[%s4 + $0x80] sm:$0xff] %vm690, %v688
    %708 = vst.msk [vmem:[%s4 + $0x88] sm:$0xff] %vm690, %v689
    // Predicated region
    $region22: #{rmi_loss_pallas.3} parent=1 // pred_check
      _
    $region23: #{rmi_loss_pallas.3} parent=1 // pred_check_branch
      %710 = sbr.rel (0) target = $region25
    $region24: #{rmi_loss_pallas.3} parent=1 // pred_region
      _
    $region25: #{rmi_loss_pallas.3} parent=1 // pred_fallthru
      _
    // Predicated region
    $region26: #{rmi_loss_pallas.3} parent=1 // pred_check
      _
    $region27: #{rmi_loss_pallas.3} parent=1 // pred_check_branch
      %712 = sbr.rel (0) target = $region29
    $region28: #{rmi_loss_pallas.3} parent=1 // pred_region
      _
    $region29: #{rmi_loss_pallas.3} parent=1 // pred_fallthru
      _
    // Predicated region
    $region30: #{rmi_loss_pallas.3} parent=1 // pred_check
      _
    $region31: #{rmi_loss_pallas.3} parent=1 // pred_check_branch
      %714 = sbr.rel (0) target = $region33
    $region32: #{rmi_loss_pallas.3} parent=1 // pred_region
      _
    $region33: #{rmi_loss_pallas.3} parent=1 // pred_fallthru
      _
    // Predicated region
    $region34: #{rmi_loss_pallas.3} parent=1 // pred_check
      _
    $region35: #{rmi_loss_pallas.3} parent=1 // pred_check_branch
      %716 = sbr.rel (0) target = $region37
    $region36: #{rmi_loss_pallas.3} parent=1 // pred_region
      _
    $region37: #{rmi_loss_pallas.3} parent=1 // pred_fallthru
      _
    %717 = vsyncpa [#allocation4], 1

// kernel: custom-call.13
$region0: #{custom-call.13}
  %s0 = inlined_call_operand.vmem [shape: f32[2,4,9,9], index: 0, kind: input, shape index: {}]
  %s1 = inlined_call_operand.vmem [shape: f32[2,4,9,9], index: 1, kind: output, shape index: {0}]
  %s2 = inlined_call_operand.hbm [shape: s32[2,4,9], index: 2, kind: output, shape index: {1}]
  %s3 = inlined_call_operand.vmem [shape: s32[2,4,9], index: 3, kind: output, shape index: {2}]
  %4 = xla_tuple %s1, %s2, %s3
  $region1: #{custom-call.13} parent=0
    #allocation0 [shape = 'u8[16384]{0}', space=vmem, size = 0x4000, scoped, tag = 'operand span for operand 0']
    #allocation1 [shape = 'u8[16384]{0}', space=vmem, size = 0x4000, scoped, tag = 'operand span for operand 1']
    #allocation2 [shape = 'u8[4096]{0}', space=vmem, size = 0x1000, scoped, tag = 'operand span for operand 2']
    #allocation3 [shape = 'u8[4096]{0}', space=vmem, size = 0x1000, scoped, tag = 'packed  for operand 2']
    #allocation4 [shape = 's32[2]{0}', space=sflag, size = 0x8, scoped, tag = 'scoped memory for custom-call.13']
    #allocation5 [shape = 'u8[4096]{0}', space=vmem, size = 0x1000, scoped, tag = 'operand span for operand 3']
    #allocation6 [shape = 'u8[4096]{0}', space=vmem, size = 0x1000, scoped, tag = 'packed  for operand 3']
    %5 = vsyncpa [#allocation4], 0
    %s6 = scalar_lea.sflag [#allocation4], 1
    %7 = vsyncpa %s6, 0
    loop: start=0, step=1, limit=10
    $region2: #{custom-call.13} parent=1 // loop_pre_header
      _
    $region3: #{custom-call.13} parent=1 // loop_header
      %s9 = sphi 0, %s13
      %p10 = scmp.ge.s32.totalorder %s9, 10
      %s16 = sphi 0, %s28
      %s17 = sphi 0, %s24
      %s18 = sphi 0, %s16
      %s19 = sphi 0, %s17
      %s20 = sphi 0, %s18
      %s21 = sphi 0, %s19
      %s35 = sphi 0, %s37
      %s38 = sphi 0, %s35
      %s39 = sphi 0, %s38
      %s55 = sphi 0, %s39
      %s65 = sphi 0, %s67
      %s68 = sphi 0, %s65
      %s69 = sphi 0, %s68
      %s85 = sphi 0, %s69
    $region4: #{custom-call.13} parent=1 // loop_header_branch
      %12 = sbr.rel (%p10) target = $region8
    $region5: #{custom-call.13} parent=1 // loop_body
      %s14 = ssub.s32 %s9, 1
      %s15 = ssub.s32 %s9, 2
      %s22 = sadd.s32 1, %s17
      %p23 = scmp.ge.s32.totalorder %s22, 4
      %s24 = scalar_select %p23, 0, %s22
      %s25 = sadd.s32 1, %s16
      %s26 = scalar_select %p23, %s25, %s16
      %p27 = scmp.ge.s32.totalorder %s26, 2
      %s28 = scalar_select %p27, 0, %s26
      %s29 = sshrl.u32 %s17, 3
      %s30 = sshrl.u32 %s24, 3
      %s31 = ssub.s32 %s16, %s28
      %s32 = ssub.s32 %s29, %s30
      %s33 = sor.u32 %s31, %s32
      %p34 = scmp.eq.s32.totalorder %s33, 0
      %s36 = sadd.s32 %s35, 1
      %s37 = scalar_select %p34, %s35, %s36
      %p40 = pneg %p34
      %p41 = scmp.eq.s32.totalorder %s9, 7
      %p42 = por %p40, %p41
      %p43 = scmp.ne.s32.totalorder %s35, %s38
      %p44 = scmp.eq.s32.totalorder %s9, 0
      %p45 = por %p43, %p44
      %p46 = scmp.ne.s32.totalorder %s35, %s38
      %p47 = scmp.eq.s32.totalorder %s14, 7
      %p48 = por %p46, %p47
      %p49 = scmp.ne.s32.totalorder %s38, %s39
      %p50 = scmp.eq.s32.totalorder %s14, 0
      %p51 = por %p49, %p50
      %p52 = scmp.ne.s32.totalorder %s38, %s39
      %p53 = scmp.eq.s32.totalorder %s15, 7
      %p54 = por %p52, %p53
      %p56 = scmp.ne.s32.totalorder %s39, %s55
      %p57 = scmp.eq.s32.totalorder %s15, 0
      %p58 = por %p56, %p57
      %s59 = sshrl.u32 %s17, 3
      %s60 = sshrl.u32 %s24, 3
      %s61 = ssub.s32 %s16, %s28
      %s62 = ssub.s32 %s59, %s60
      %s63 = sor.u32 %s61, %s62
      %p64 = scmp.eq.s32.totalorder %s63, 0
      %s66 = sadd.s32 %s65, 1
      %s67 = scalar_select %p64, %s65, %s66
      %p70 = pneg %p64
      %p71 = scmp.eq.s32.totalorder %s9, 7
      %p72 = por %p70, %p71
      %p73 = scmp.ne.s32.totalorder %s65, %s68
      %p74 = scmp.eq.s32.totalorder %s9, 0
      %p75 = por %p73, %p74
      %p76 = scmp.ne.s32.totalorder %s65, %s68
      %p77 = scmp.eq.s32.totalorder %s14, 7
      %p78 = por %p76, %p77
      %p79 = scmp.ne.s32.totalorder %s68, %s69
      %p80 = scmp.eq.s32.totalorder %s14, 0
      %p81 = por %p79, %p80
      %p82 = scmp.ne.s32.totalorder %s68, %s69
      %p83 = scmp.eq.s32.totalorder %s15, 7
      %p84 = por %p82, %p83
      %p86 = scmp.ne.s32.totalorder %s69, %s85
      %p87 = scmp.eq.s32.totalorder %s15, 0
      %p88 = por %p86, %p87
      %p89 = scmp.le.s32.totalorder 1, %s9
      %p90 = scmp.lt.s32.totalorder %s9, 9
      %p91 = pnand %p89, %p90
      %p92 = pneg %p91
      // Predicated region
      $region9: #{custom-call.13} parent=5 // pred_check
        _
      $region10: #{custom-call.13} parent=5 // pred_check_branch
        %94 = sbr.rel (%p91) target = $region12
      $region11: #{custom-call.13} parent=5 // pred_region
        %s95 = ssub.s32 %s9, 1
      $region12: #{custom-call.13} parent=5 // pred_fallthru
        _
      %p96 = scmp.lt.s32.totalorder %s9, 8
      // Predicated region
      $region13: #{custom-call.13} parent=5 // pred_check
        %p97 = pneg %p96
      $region14: #{custom-call.13} parent=5 // pred_check_branch
        %99 = sbr.rel (%p97) target = $region16
      $region15: #{custom-call.13} parent=5 // pred_region
        %s100 = sand.u32 %s9, 1
        %s101 = sand.u32 %s9, 1
        %s102 = smul.addr %s101, 16
        %s103 = scalar_lea.vmem [#allocation0], %s102
        %s104 = smul.addr %s16, 4
        %s105 = sadd.s32 %s17, %s104
        %s106 = smul.addr %s105, 16
        %s107 = scalar_lea.vmem %s0, %s106
        // Predicated region
        $region17: #{custom-call.13} parent=15 // pred_check
          _
        $region18: #{custom-call.13} parent=15 // pred_check_branch
          %109 = sbr.rel (0) target = $region20
        $region19: #{custom-call.13} parent=15 // pred_region
          // Predicated region
          $region21: #{custom-call.13} parent=19 // pred_check
            _
          $region22: #{custom-call.13} parent=19 // pred_check_branch
            %111 = sbr.rel (0) target = $region24
          $region23: #{custom-call.13} parent=19 // pred_region
            loop: start=0, step=1, limit=1
            $region25: #{custom-call.13} parent=23 // loop_pre_header
              _
            $region26: #{custom-call.13} parent=23 // loop_header
              %s113 = sphi 0, %s117
              %p114 = scmp.ge.s32.totalorder %s113, 1
              %s118 = sphi %s107, %s107
              %s119 = sphi %s103, %s103
            $region27: #{custom-call.13} parent=23 // loop_header_branch
              %116 = sbr.rel (%p114) target = $region31
            $region28: #{custom-call.13} parent=23 // loop_body
              %v120 = vld [vmem:[%s118] sm:$0xff]
              %121 = vst [vmem:[%s119] sm:$0xff] %v120
              %v122 = vld [vmem:[%s118 + $0x8] sm:$0xff]
              %123 = vst [vmem:[%s119 + $0x8] sm:$0xff] %v122
            $region29: #{custom-call.13} parent=23 // loop_footer
              %s117 = sadd.s32 1, %s113
            $region30: #{custom-call.13} parent=23 // loop_footer_branch
              %112 = sbr.rel target = $region26
            $region31: #{custom-call.13} parent=23 // loop_exit
              _
          $region24: #{custom-call.13} parent=19 // pred_fallthru
            _
          // Predicated region
          $region32: #{custom-call.13} parent=19 // pred_check
            _
          $region33: #{custom-call.13} parent=19 // pred_check_branch
            %125 = sbr.rel target = $region35
          $region34: #{custom-call.13} parent=19 // pred_region
            _
          $region35: #{custom-call.13} parent=19 // pred_fallthru
            _
        $region20: #{custom-call.13} parent=15 // pred_fallthru
          _
        %126 = vnop
      $region16: #{custom-call.13} parent=5 // pred_fallthru
        _
      %p127 = scmp.le.s32.totalorder 1, %s9
      %p128 = scmp.lt.s32.totalorder %s9, 9
      %p129 = pnand %p127, %p128
      %p130 = pneg %p129
      // Predicated region
      $region36: #{custom-call.13} parent=5 // pred_check
        _
      $region37: #{custom-call.13} parent=5 // pred_check_branch
        %132 = sbr.rel (%p129) target = $region39
      $region38: #{custom-call.13} parent=5 // pred_region
        #allocation7 [shape = 's32[9,128]{1,0}', space=vmem, size = 0x2000, scoped, tag = 'scratch for permutations']
        %s133 = ssub.s32 %s9, 1
        %s134 = sand.u32 %s14, 1
        %s135 = sand.u32 %s14, 1
        %s136 = smul.addr %s135, 16
        %s137 = scalar_lea.vmem [#allocation0], %s136
        %s138 = sand.u32 %s14, 1
        %s139 = sand.u32 %s14, 1
        %s140 = smul.addr %s139, 16
        %s141 = scalar_lea.vmem [#allocation0], %s140
        %s142 = sand.u32 %s14, 1
        %s143 = sand.u32 %s14, 1
        %s144 = smul.addr %s143, 16
        %s145 = scalar_lea.vmem [#allocation1], %s144
        %p146 = pneg %p51
        %p147 = pneg %p48
        %s148 = sand.u32 %s38, 1
        %s149 = scalar_lea.sflag [#allocation4], %s148
        %s150 = sand.u32 %s38, 1
        %s151 = smul.addr %s150, 4
        %s152 = scalar_lea.vmem [#allocation3], %s151
        %p153 = pneg %p81
        %p154 = pneg %p78
        %s155 = sand.u32 %s68, 1
        %s156 = sand.u32 %s68, 1
        %s157 = smul.addr %s156, 4
        %s158 = scalar_lea.vmem [#allocation6], %s157
        %s159 = sshrl.u32 %s19, 3
        %s160 = sshrl.u32 %s19, 3
        %v161 = vld [vmem:[%s137] sm:$0xff]
        %162 = vst [vmem:[%s145] sm:$0xff] %v161
        %s163 = scalar_lea.vmem %s145, 8 [#allocation1]
        %s164 = scalar_lea.vmem %s137, 8 [#allocation0]
        %v165 = vld [vmem:[%s164] sm:$0xff]
        %166 = vst [vmem:[%s163] sm:$0xff] %v165
        %s167 = sand.u32 %s19, 7
        %s168 = scalar_lea.vmem [#allocation2], %s167
        %s169 = sand.u32 %s19, 7
        %s170 = scalar_lea.vmem [#allocation5], %s169
        %171 = vst [vmem:[%s168] sm:$0x1] 0
        %v172 = vlaneseq
        %v173 = vshrl.u32 %v172, 7
        %v174 = vmov %v173
        loop: start=0, step=1, limit=2
        $region40: #{custom-call.13} parent=38 // loop_pre_header
          _
        $region41: #{custom-call.13} parent=38 // loop_header
          %s176 = sphi 0, %s180
          %p177 = scmp.ge.s32.totalorder %s176, 2
        $region42: #{custom-call.13} parent=38 // loop_header_branch
          %179 = sbr.rel (%p177) target = $region46
        $region43: #{custom-call.13} parent=38 // loop_body
          %s181 = smul.addr %s176, 8
          %s182 = scalar_lea.vmem [#allocation7], %s181
          %s183 = smul.u32 %s176, 8
          %v184 = vstv %s183
          %v185 = vadd.s32 %v174, %v184
          %186 = vst [vmem:[%s182] sm:$0xff] %v185
        $region44: #{custom-call.13} parent=38 // loop_footer
          %s180 = sadd.s32 1, %s176
        $region45: #{custom-call.13} parent=38 // loop_footer_branch
          %175 = sbr.rel target = $region41
        $region46: #{custom-call.13} parent=38 // loop_exit
          _
        loop: start=0, step=1, limit=9
        $region47: #{custom-call.13} parent=38 // loop_pre_header
          _
        $region48: #{custom-call.13} parent=38 // loop_header
          %s188 = sphi 0, %s192
          %p189 = scmp.ge.s32.totalorder %s188, 9
        $region49: #{custom-call.13} parent=38 // loop_header_branch
          %191 = sbr.rel (%p189) target = $region53
        $region50: #{custom-call.13} parent=38 // loop_body
          %v193 = vstv %s188
          %v194 = vlaneseq
          %v195 = vshrl.u32 %v194, 7
          %v196 = vmov %v195
          %v197 = vld [vmem:[%s145] sm:$0xff]
          %v198 = vand.u32 2147483647, %v197
          %v200 = vstv %s188
          %vm201 = vcmp.ge.s32.totalorder %v196, %v200
          %vm202 = vcmp.lt.s32.totalorder %v196, 9
          %vm203 = vmand %vm201, %vm202
          %vm204 = vcmp.lt.f32.partialorder -inf, %v198
          %vm205 = vmand %vm203, %vm204
          %v206 = vsel %vm205, %v196, %v193
          %v207 = vsel %vm205, %v198, -inf
          %s208 = scalar_lea.vmem %s145, 8 [#allocation1]
          %v209 = vld [vmem:[%s208] sm:$0xff]
          %v210 = vand.u32 2147483647, %v209
          %v211 = vadd.s32 %v196, 8
          %v212 = vstv %s188
          %vm213 = vcmp.ge.s32.totalorder %v211, %v212
          %vm214 = vcmp.lt.s32.totalorder %v211, 9
          %vm215 = vmand %vm213, %vm214
          %vm216 = vcmp.lt.f32.partialorder %v207, %v210
          %vm217 = vmand %vm215, %vm216
          %v218 = vsel %vm217, %v211, %v206
          %v219 = vsel %vm217, %v210, %v207
          %v220 = vrot.slane %v219, 1
          %v221 = vrot.slane %v218, 1
          %vm222 = vcmp.ge.f32.partialorder %v220, %v219
          %v223 = vsel %vm222, %v220, %v219
          %v224 = vsel %vm222, %v221, %v218
          %v225 = vrot.slane %v220, 1
          %v226 = vrot.slane %v221, 1
          %vm227 = vcmp.ge.f32.partialorder %v225, %v223
          %v228 = vsel %vm227, %v225, %v223
          %v229 = vsel %vm227, %v226, %v224
          %v230 = vrot.slane %v225, 1
          %v231 = vrot.slane %v226, 1
          %vm232 = vcmp.ge.f32.partialorder %v230, %v228
          %v233 = vsel %vm232, %v230, %v228
          %v234 = vsel %vm232, %v231, %v229
          %v235 = vrot.slane %v230, 1
          %v236 = vrot.slane %v231, 1
          %vm237 = vcmp.ge.f32.partialorder %v235, %v233
          %v238 = vsel %vm237, %v235, %v233
          %v239 = vsel %vm237, %v236, %v234
          %v240 = vrot.slane %v235, 1
          %v241 = vrot.slane %v236, 1
          %vm242 = vcmp.ge.f32.partialorder %v240, %v238
          %v243 = vsel %vm242, %v240, %v238
          %v244 = vsel %vm242, %v241, %v239
          %v245 = vrot.slane %v240, 1
          %v246 = vrot.slane %v241, 1
          %vm247 = vcmp.ge.f32.partialorder %v245, %v243
          %v248 = vsel %vm247, %v245, %v243
          %v249 = vsel %vm247, %v246, %v244
          %v250 = vrot.slane %v245, 1
          %v251 = vrot.slane %v246, 1
          %vm252 = vcmp.ge.f32.partialorder %v250, %v248
          %v253 = vsel %vm252, %v250, %v248
          %v254 = vsel %vm252, %v251, %v249
          %s255 = ssub.s32 128, %s188
          %256 = vrot.lane.b32.xlu0 %v254, %s255
          %v257 = vpop.permute.xlu0 %256
          %s258 = vtos %v257
          %v259 = vstv %s188
          %v260 = vlaneseq
          %v261 = vand.u32 %v260, 127
          %vm262 = vcmp.eq.s32.totalorder %v261, %v259
          %v263 = vstv %s258
          %v264 = vld [vmem:[%s168] ss:$0 sm:$0xff]
          %v265 = vsel %vm262, %v263, %v264
          %266 = vst [vmem:[%s168] sm:$0x1] %v265
          %s267 = scalar_lea.vmem %s145, %s188 [#allocation1]
          %s268 = scalar_lea.vmem %s145, %s258 [#allocation1]
          %v269 = vld [vmem:[%s267] ss:$0 sm:$0xff]
          %v270 = vld [vmem:[%s268] ss:$0 sm:$0xff]
          %271 = vst [vmem:[%s268] sm:$0x1] %v269
          %272 = vst [vmem:[%s267] sm:$0x1] %v270
          %s273 = scalar_lea.vmem [#allocation7], %s188
          %s274 = scalar_lea.vmem [#allocation7], %s258
          %v275 = vld [vmem:[%s273] ss:$0 sm:$0xff]
          %v276 = vld [vmem:[%s274] ss:$0 sm:$0xff]
          %277 = vst [vmem:[%s274] sm:$0x1] %v275
          %278 = vst [vmem:[%s273] sm:$0x1] %v276
          %vm279 = vcmp.ne.f32.partialorder %v270, 0.0
          %vm280 = vmand %vm262, %vm279
          %v281 = vsel %vm280, %v270, 1.0
          %v282 = vlaneseq
          %v283 = vand.u32 %v282, 127
          %v284 = vstv %s188
          %vm285 = vcmp.gt.s32.totalorder %v283, %v284
          %v286 = vsel %vm285, %v270, 0.0
          %v287 = vlaneseq
          %v288 = vshrl.u32 %v287, 7
          %v289 = vmov %v288
          %v290 = vld [vmem:[%s145] sm:$0xff]
          %v292 = vstv %s188
          %vm293 = vcmp.gt.s32.totalorder %v289, %v292
          %v294 = vsel %vm293, %v281, 1.0
          %v295 = vrcp.pop %v294
          %v296 = vmul.f32 %v290, %v295
          %vm297 = vmand %vm293, %vm262
          %v298 = vsel %vm297, %v296, 0.0
          %299 = vadd.xlane.f32.xlu0 %v298
          %v300 = vpop.xlane.xlu0 %299
          %v301 = vmul.f32 %v300, %v286
          %v302 = vsub.f32 %v296, %v301
          %303 = vst [vmem:[%s145] sm:$0xff] %v302
          %s304 = scalar_lea.vmem %s145, 8 [#allocation1]
          %v305 = vld [vmem:[%s304] sm:$0xff]
          %v306 = vadd.s32 %v289, 8
          %v307 = vstv %s188
          %vm308 = vcmp.gt.s32.totalorder %v306, %v307
          %v309 = vsel %vm308, %v281, 1.0
          %v310 = vrcp.pop %v309
          %v311 = vmul.f32 %v305, %v310
          %vm312 = vmand %vm308, %vm262
          %v313 = vsel %vm312, %v311, 0.0
          %314 = vadd.xlane.f32.xlu0 %v313
          %v315 = vpop.xlane.xlu0 %314
          %v316 = vmul.f32 %v315, %v286
          %v317 = vsub.f32 %v311, %v316
          %318 = vst [vmem:[%s304] sm:$0xff] %v317
        $region51: #{custom-call.13} parent=38 // loop_footer
          %s192 = sadd.s32 1, %s188
        $region52: #{custom-call.13} parent=38 // loop_footer_branch
          %187 = sbr.rel target = $region48
        $region53: #{custom-call.13} parent=38 // loop_exit
          _
        %v319 = vld [vmem:[#allocation7] sm:$0xff]
        %s320 = scalar_lea.vmem [#allocation7], 8
        %v321 = vld [vmem:[%s320] sm:$0xff]
        %s322 = scalar_lea.vmem [#allocation7], 16
        %s323 = scalar_lea.vmem [#allocation7], 24
        %s324 = scalar_lea.vmem [#allocation7], 32
        %s325 = scalar_lea.vmem [#allocation7], 40
        %s326 = scalar_lea.vmem [#allocation7], 48
        %s327 = scalar_lea.vmem [#allocation7], 56
        %s328 = scalar_lea.vmem [#allocation7], 64
        %s329 = scalar_lea.vmem [#allocation7], 72
        %s330 = scalar_lea.vmem [#allocation7], 80
        %s331 = scalar_lea.vmem [#allocation7], 88
        %s332 = scalar_lea.vmem [#allocation7], 96
        %s333 = scalar_lea.vmem [#allocation7], 104
        %s334 = scalar_lea.vmem [#allocation7], 112
        %s335 = scalar_lea.vmem [#allocation7], 120
        %336 = vxpose.xlu0.b32.start [1/16] %v319, 128
        %337 = vxpose.xlu0.b32.cont [2/16] %v321, 128
        %338 = vxpose.xlu0.b32.cont [3/16] 0, 128
        %339 = vxpose.xlu0.b32.cont [4/16] 0, 128
        %340 = vxpose.xlu0.b32.cont [5/16] 0, 128
        %341 = vxpose.xlu0.b32.cont [6/16] 0, 128
        %342 = vxpose.xlu0.b32.cont [7/16] 0, 128
        %343 = vxpose.xlu0.b32.cont [8/16] 0, 128
        %344 = vxpose.xlu0.b32.cont [9/16] 0, 128
        %345 = vxpose.xlu0.b32.cont [10/16] 0, 128
        %346 = vxpose.xlu0.b32.cont [11/16] 0, 128
        %347 = vxpose.xlu0.b32.cont [12/16] 0, 128
        %348 = vxpose.xlu0.b32.cont [13/16] 0, 128
        %349 = vxpose.xlu0.b32.cont [14/16] 0, 128
        %350 = vxpose.xlu0.b32.cont [15/16] 0, 128
        %351 = vxpose.xlu0.b32.end [16/16] 0, 128
        %v352 = vpop.trf.xlu0
        %v353 = vpop.trf.xlu0
        %v354 = vpop.trf.xlu0
        %v355 = vpop.trf.xlu0
        %v356 = vpop.trf.xlu0
        %v357 = vpop.trf.xlu0
        %v358 = vpop.trf.xlu0
        %v359 = vpop.trf.xlu0
        %v360 = vpop.trf.xlu0
        %v361 = vpop.trf.xlu0
        %v362 = vpop.trf.xlu0
        %v363 = vpop.trf.xlu0
        %v364 = vpop.trf.xlu0
        %v365 = vpop.trf.xlu0
        %v366 = vpop.trf.xlu0
        %v367 = vpop.trf.xlu0
        %368 = vst [vmem:[%s170] sm:$0x1] %v352
        %s370 = sshllo.u32 0, 4
        %v372 = vld [vmem:[#allocation2] sm:%s370]
        %s373 = sshllo.u32 0, 4
        %374 = vst [vmem:[%s152] sm:%s373] %v372
        %s376 = sshllo.u32 0, 4
        %v378 = vld [vmem:[#allocation5] sm:%s376]
        %s379 = sshllo.u32 0, 4
        %380 = vst [vmem:[%s158] sm:%s379] %v378
        %s381 = sand.u32 %s14, 1
        %s382 = sand.u32 %s14, 1
        %s383 = smul.addr %s382, 16
        %s384 = scalar_lea.vmem [#allocation1], %s383
        %s385 = sand.u32 %s38, 1
        %s386 = scalar_lea.sflag [#allocation4], %s385
        %s387 = sand.u32 %s38, 1
        %s388 = smul.addr %s387, 4
        %s389 = scalar_lea.vmem [#allocation3], %s388
        %s390 = sand.u32 %s68, 1
        %s391 = sand.u32 %s68, 1
        %s392 = smul.addr %s391, 4
        %s393 = scalar_lea.vmem [#allocation6], %s392
        %s394 = smul.addr %s18, 4
        %s395 = sadd.s32 %s19, %s394
        %s396 = smul.addr %s395, 16
        %s397 = scalar_lea.vmem %s1, %s396
        // Predicated region
        $region54: #{custom-call.13} parent=38 // pred_check
          _
        $region55: #{custom-call.13} parent=38 // pred_check_branch
          %399 = sbr.rel (0) target = $region57
        $region56: #{custom-call.13} parent=38 // pred_region
          // Predicated region
          $region58: #{custom-call.13} parent=56 // pred_check
            _
          $region59: #{custom-call.13} parent=56 // pred_check_branch
            %401 = sbr.rel (0) target = $region61
          $region60: #{custom-call.13} parent=56 // pred_region
            loop: start=0, step=1, limit=1
            $region62: #{custom-call.13} parent=60 // loop_pre_header
              _
            $region63: #{custom-call.13} parent=60 // loop_header
              %s403 = sphi 0, %s407
              %p404 = scmp.ge.s32.totalorder %s403, 1
              %s408 = sphi %s384, %s384
              %s409 = sphi %s397, %s397
            $region64: #{custom-call.13} parent=60 // loop_header_branch
              %406 = sbr.rel (%p404) target = $region68
            $region65: #{custom-call.13} parent=60 // loop_body
              %v410 = vld [vmem:[%s408] sm:$0xff]
              %411 = vst [vmem:[%s409] sm:$0xff] %v410
              %v412 = vld [vmem:[%s408 + $0x8] sm:$0xff]
              %413 = vst [vmem:[%s409 + $0x8] sm:$0xff] %v412
            $region66: #{custom-call.13} parent=60 // loop_footer
              %s407 = sadd.s32 1, %s403
            $region67: #{custom-call.13} parent=60 // loop_footer_branch
              %402 = sbr.rel target = $region63
            $region68: #{custom-call.13} parent=60 // loop_exit
              _
          $region61: #{custom-call.13} parent=56 // pred_fallthru
            _
          // Predicated region
          $region69: #{custom-call.13} parent=56 // pred_check
            _
          $region70: #{custom-call.13} parent=56 // pred_check_branch
            %415 = sbr.rel target = $region72
          $region71: #{custom-call.13} parent=56 // pred_region
            _
          $region72: #{custom-call.13} parent=56 // pred_fallthru
            _
        $region57: #{custom-call.13} parent=38 // pred_fallthru
          _
        %416 = vnop
        // Predicated region
        $region73: #{custom-call.13} parent=38 // pred_check
          %p417 = pneg %p48
        $region74: #{custom-call.13} parent=38 // pred_check_branch
          %419 = sbr.rel (%p417) target = $region76
        $region75: #{custom-call.13} parent=38 // pred_region
          %s420 = sshrl.u32 %s19, 3
          %s422 = ssub.s32 64, 64
          %423 = vsyncadd %s386, %s422
          %s424 = sadd.s32 %s420, %s18
          %s425 = smul.addr %s424, 64
          %s426 = scalar_lea.hbm %s2, %s425
          %s428 = sshll.u32 %s389, 4
          %s429 = int_to_ptr.vmem [resolvable:$true] %s428
          %431 = dma.vmem_to_hbm [thread:$0]  %s429, 64, %s426, %s386
        $region76: #{custom-call.13} parent=38 // pred_fallthru
          _
        // Predicated region
        $region77: #{custom-call.13} parent=38 // pred_check
          %p432 = pneg %p78
        $region78: #{custom-call.13} parent=38 // pred_check_branch
          %434 = sbr.rel (%p432) target = $region80
        $region79: #{custom-call.13} parent=38 // pred_region
          %s435 = sshrl.u32 %s19, 3
          %s436 = sadd.s32 %s435, %s18
          %s437 = smul.addr %s436, 4
          %s438 = scalar_lea.vmem %s3, %s437
          // Predicated region
          $region81: #{custom-call.13} parent=79 // pred_check
            _
          $region82: #{custom-call.13} parent=79 // pred_check_branch
            %440 = sbr.rel (0) target = $region84
          $region83: #{custom-call.13} parent=79 // pred_region
            // Predicated region
            $region85: #{custom-call.13} parent=83 // pred_check
              _
            $region86: #{custom-call.13} parent=83 // pred_check_branch
              %442 = sbr.rel target = $region88
            $region87: #{custom-call.13} parent=83 // pred_region
              // Predicated region
              $region100: #{custom-call.13} parent=87 // pred_check
                _
              $region101: #{custom-call.13} parent=87 // pred_check_branch
                %457 = sbr.rel (0) target = $region103
              $region102: #{custom-call.13} parent=87 // pred_region
                loop: start=0, step=1, limit=1
                $region104: #{custom-call.13} parent=102 // loop_pre_header
                  _
                $region105: #{custom-call.13} parent=102 // loop_header
                  %s460 = sphi 0, %s464
                  %p461 = scmp.ge.s32.totalorder %s460, 1
                  %s465 = sphi %s393, %s393
                  %s466 = sphi %s438, %s438
                $region106: #{custom-call.13} parent=102 // loop_header_branch
                  %463 = sbr.rel (%p461) target = $region110
                $region107: #{custom-call.13} parent=102 // loop_body
                  %v467 = vld [vmem:[%s465] sm:$0xf]
                  %468 = vst [vmem:[%s466] sm:$0xf] %v467
                $region108: #{custom-call.13} parent=102 // loop_footer
                  %s464 = sadd.s32 1, %s460
                $region109: #{custom-call.13} parent=102 // loop_footer_branch
                  %459 = sbr.rel target = $region105
                $region110: #{custom-call.13} parent=102 // loop_exit
                  _
              $region103: #{custom-call.13} parent=87 // pred_fallthru
                _
            $region88: #{custom-call.13} parent=83 // pred_fallthru
              _
            // Predicated region
            $region89: #{custom-call.13} parent=83 // pred_check
              _
            $region90: #{custom-call.13} parent=83 // pred_check_branch
              %444 = sbr.rel (0) target = $region92
            $region91: #{custom-call.13} parent=83 // pred_region
              loop: start=0, step=1, limit=1
              $region93: #{custom-call.13} parent=91 // loop_pre_header
                _
              $region94: #{custom-call.13} parent=91 // loop_header
                %s447 = sphi 0, %s451
                %p448 = scmp.ge.s32.totalorder %s447, 1
                %s452 = sphi %s393, %s393
                %s453 = sphi %s438, %s438
              $region95: #{custom-call.13} parent=91 // loop_header_branch
                %450 = sbr.rel (%p448) target = $region99
              $region96: #{custom-call.13} parent=91 // loop_body
                %v454 = vld [vmem:[%s452] sm:$0xf]
                %455 = vst [vmem:[%s453] sm:$0xf] %v454
              $region97: #{custom-call.13} parent=91 // loop_footer
                %s451 = sadd.s32 1, %s447
              $region98: #{custom-call.13} parent=91 // loop_footer_branch
                %446 = sbr.rel target = $region94
              $region99: #{custom-call.13} parent=91 // loop_exit
                _
            $region92: #{custom-call.13} parent=83 // pred_fallthru
              _
          $region84: #{custom-call.13} parent=79 // pred_fallthru
            _
          %469 = vnop
        $region80: #{custom-call.13} parent=38 // pred_fallthru
          _
      $region39: #{custom-call.13} parent=5 // pred_fallthru
        _
      %p470 = scmp.le.s32.totalorder 2, %s9
      // Predicated region
      $region111: #{custom-call.13} parent=5 // pred_check
        %p471 = pneg %p470
      $region112: #{custom-call.13} parent=5 // pred_check_branch
        %473 = sbr.rel (%p471) target = $region114
      $region113: #{custom-call.13} parent=5 // pred_region
        %s474 = ssub.s32 %s9, 2
        %s475 = sand.u32 %s15, 1
        %s476 = sand.u32 %s15, 1
        %s477 = smul.addr %s476, 16
        %s478 = scalar_lea.vmem [#allocation1], %s477
        // Predicated region
        $region115: #{custom-call.13} parent=113 // pred_check
          %p479 = pneg %p54
        $region116: #{custom-call.13} parent=113 // pred_check_branch
          %481 = sbr.rel (%p479) target = $region118
        $region117: #{custom-call.13} parent=113 // pred_region
          %s482 = sand.u32 %s39, 1
          %s483 = scalar_lea.sflag [#allocation4], %s482
          %s484 = sand.u32 %s39, 1
          %s485 = smul.addr %s484, 4
          %s486 = scalar_lea.vmem [#allocation3], %s485
          %487 = dma.done %s483, 64
        $region118: #{custom-call.13} parent=113 // pred_fallthru
          _
        // Predicated region
        $region119: #{custom-call.13} parent=113 // pred_check
          %p488 = pneg %p84
        $region120: #{custom-call.13} parent=113 // pred_check_branch
          %490 = sbr.rel (%p488) target = $region122
        $region121: #{custom-call.13} parent=113 // pred_region
          %s491 = sand.u32 %s69, 1
          %s492 = sand.u32 %s69, 1
          %s493 = smul.addr %s492, 4
          %s494 = scalar_lea.vmem [#allocation6], %s493
        $region122: #{custom-call.13} parent=113 // pred_fallthru
          _
      $region114: #{custom-call.13} parent=5 // pred_fallthru
        _
    $region6: #{custom-call.13} parent=1 // loop_footer
      %s13 = sadd.s32 1, %s9
    $region7: #{custom-call.13} parent=1 // loop_footer_branch
      %8 = sbr.rel target = $region3
    $region8: #{custom-call.13} parent=1 // loop_exit
      _
    %495 = vsyncpa [#allocation4], 1
    %s496 = scalar_lea.sflag [#allocation4], 1
    %497 = vsyncpa %s496, 1

// kernel: custom-call.14
$region0: #{custom-call.14}
  %s0 = inlined_call_operand.vmem [shape: f32[2,4,1,9,9], index: 0, kind: input, shape index: {}]
  %s1 = inlined_call_operand.vmem [shape: f32[2,4,1,9,9], index: 1, kind: output, shape index: {}]
  $region1: #{custom-call.14} parent=0
    #allocation0 [shape = 'u8[16384]{0}', space=vmem, size = 0x4000, scoped, tag = 'operand span for operand 0']
    #allocation1 [shape = 'u8[16384]{0}', space=vmem, size = 0x4000, scoped, tag = 'operand span for operand 1']
    loop: start=0, step=1, limit=10
    $region2: #{custom-call.14} parent=1 // loop_pre_header
      _
    $region3: #{custom-call.14} parent=1 // loop_header
      %s3 = sphi 0, %s7
      %p4 = scmp.ge.s32.totalorder %s3, 10
      %s10 = sphi 0, %s43
      %s11 = sphi 0, %s39
      %s12 = sphi 0, %s35
      %s13 = sphi 0, %s31
      %s14 = sphi 0, %s27
      %s15 = sphi 0, %s10
      %s16 = sphi 0, %s11
      %s17 = sphi 0, %s12
      %s18 = sphi 0, %s13
      %s19 = sphi 0, %s14
      %s20 = sphi 0, %s15
      %s21 = sphi 0, %s16
      %s22 = sphi 0, %s17
      %s23 = sphi 0, %s18
      %s24 = sphi 0, %s19
    $region4: #{custom-call.14} parent=1 // loop_header_branch
      %6 = sbr.rel (%p4) target = $region8
    $region5: #{custom-call.14} parent=1 // loop_body
      %s8 = ssub.s32 %s3, 1
      %s9 = ssub.s32 %s3, 2
      %s25 = sadd.s32 1, %s14
      %p26 = scmp.ge.s32.totalorder %s25, 1
      %s27 = scalar_select %p26, 0, %s25
      %s28 = sadd.s32 1, %s13
      %s29 = scalar_select %p26, %s28, %s13
      %p30 = scmp.ge.s32.totalorder %s29, 1
      %s31 = scalar_select %p30, 0, %s29
      %s32 = sadd.s32 1, %s12
      %s33 = scalar_select %p30, %s32, %s12
      %p34 = scmp.ge.s32.totalorder %s33, 1
      %s35 = scalar_select %p34, 0, %s33
      %s36 = sadd.s32 1, %s11
      %s37 = scalar_select %p34, %s36, %s11
      %p38 = scmp.ge.s32.totalorder %s37, 4
      %s39 = scalar_select %p38, 0, %s37
      %s40 = sadd.s32 1, %s10
      %s41 = scalar_select %p38, %s40, %s10
      %p42 = scmp.ge.s32.totalorder %s41, 2
      %s43 = scalar_select %p42, 0, %s41
      %p44 = scmp.le.s32.totalorder 1, %s3
      %p45 = scmp.lt.s32.totalorder %s3, 9
      %p46 = pnand %p44, %p45
      %p47 = pneg %p46
      // Predicated region
      $region9: #{custom-call.14} parent=5 // pred_check
        _
      $region10: #{custom-call.14} parent=5 // pred_check_branch
        %49 = sbr.rel (%p46) target = $region12
      $region11: #{custom-call.14} parent=5 // pred_region
        %s50 = ssub.s32 %s3, 1
      $region12: #{custom-call.14} parent=5 // pred_fallthru
        _
      %p51 = scmp.lt.s32.totalorder %s3, 8
      // Predicated region
      $region13: #{custom-call.14} parent=5 // pred_check
        %p52 = pneg %p51
      $region14: #{custom-call.14} parent=5 // pred_check_branch
        %54 = sbr.rel (%p52) target = $region16
      $region15: #{custom-call.14} parent=5 // pred_region
        %s55 = sand.u32 %s3, 1
        %s56 = sand.u32 %s3, 1
        %s57 = smul.addr %s56, 16
        %s58 = scalar_lea.vmem [#allocation0], %s57
        %s59 = sadd.s32 %s14, %s13
        %s60 = smul.addr %s12, 2
        %s61 = sadd.s32 %s59, %s60
        %s62 = smul.addr %s11, 2
        %s63 = sadd.s32 %s61, %s62
        %s64 = smul.addr %s10, 8
        %s65 = sadd.s32 %s63, %s64
        %s66 = smul.addr %s65, 8
        %s67 = scalar_lea.vmem %s0, %s66
        // Predicated region
        $region17: #{custom-call.14} parent=15 // pred_check
          _
        $region18: #{custom-call.14} parent=15 // pred_check_branch
          %69 = sbr.rel (0) target = $region20
        $region19: #{custom-call.14} parent=15 // pred_region
          // Predicated region
          $region21: #{custom-call.14} parent=19 // pred_check
            _
          $region22: #{custom-call.14} parent=19 // pred_check_branch
            %71 = sbr.rel (0) target = $region24
          $region23: #{custom-call.14} parent=19 // pred_region
            // Predicated region
            $region36: #{custom-call.14} parent=23 // pred_check
              _
            $region37: #{custom-call.14} parent=23 // pred_check_branch
              %88 = sbr.rel (0) target = $region39
            $region38: #{custom-call.14} parent=23 // pred_region
              loop: start=0, step=1, limit=1
              $region40: #{custom-call.14} parent=38 // loop_pre_header
                _
              $region41: #{custom-call.14} parent=38 // loop_header
                %s90 = sphi 0, %s94
                %p91 = scmp.ge.s32.totalorder %s90, 1
                %s95 = sphi %s67, %s67
                %s96 = sphi %s58, %s58
              $region42: #{custom-call.14} parent=38 // loop_header_branch
                %93 = sbr.rel (%p91) target = $region46
              $region43: #{custom-call.14} parent=38 // loop_body
                %v97 = vld [vmem:[%s95] sm:$0xff]
                %98 = vst [vmem:[%s96] sm:$0xff] %v97
                %v99 = vld [vmem:[%s95 + $0x8] sm:$0xff]
                %100 = vst [vmem:[%s96 + $0x8] sm:$0xff] %v99
              $region44: #{custom-call.14} parent=38 // loop_footer
                %s94 = sadd.s32 1, %s90
              $region45: #{custom-call.14} parent=38 // loop_footer_branch
                %89 = sbr.rel target = $region41
              $region46: #{custom-call.14} parent=38 // loop_exit
                _
            $region39: #{custom-call.14} parent=23 // pred_fallthru
              _
            // Predicated region
            $region47: #{custom-call.14} parent=23 // pred_check
              _
            $region48: #{custom-call.14} parent=23 // pred_check_branch
              %102 = sbr.rel target = $region50
            $region49: #{custom-call.14} parent=23 // pred_region
              _
            $region50: #{custom-call.14} parent=23 // pred_fallthru
              _
          $region24: #{custom-call.14} parent=19 // pred_fallthru
            _
          // Predicated region
          $region25: #{custom-call.14} parent=19 // pred_check
            _
          $region26: #{custom-call.14} parent=19 // pred_check_branch
            %73 = sbr.rel target = $region28
          $region27: #{custom-call.14} parent=19 // pred_region
            loop: start=0, step=1, limit=1
            $region29: #{custom-call.14} parent=27 // loop_pre_header
              _
            $region30: #{custom-call.14} parent=27 // loop_header
              %s76 = sphi 0, %s80
              %p77 = scmp.ge.s32.totalorder %s76, 1
              %s81 = sphi %s67, %s67
              %s82 = sphi %s58, %s58
            $region31: #{custom-call.14} parent=27 // loop_header_branch
              %79 = sbr.rel (%p77) target = $region35
            $region32: #{custom-call.14} parent=27 // loop_body
              %v83 = vld [vmem:[%s81] sm:$0xff]
              %84 = vst [vmem:[%s82] sm:$0xff] %v83
              %v85 = vld [vmem:[%s81 + $0x8] sm:$0xff]
              %86 = vst [vmem:[%s82 + $0x8] sm:$0xff] %v85
            $region33: #{custom-call.14} parent=27 // loop_footer
              %s80 = sadd.s32 1, %s76
            $region34: #{custom-call.14} parent=27 // loop_footer_branch
              %75 = sbr.rel target = $region30
            $region35: #{custom-call.14} parent=27 // loop_exit
              _
          $region28: #{custom-call.14} parent=19 // pred_fallthru
            _
        $region20: #{custom-call.14} parent=15 // pred_fallthru
          _
        %103 = vnop
      $region16: #{custom-call.14} parent=5 // pred_fallthru
        _
      %p104 = scmp.le.s32.totalorder 1, %s3
      %p105 = scmp.lt.s32.totalorder %s3, 9
      %p106 = pnand %p104, %p105
      %p107 = pneg %p106
      // Predicated region
      $region51: #{custom-call.14} parent=5 // pred_check
        _
      $region52: #{custom-call.14} parent=5 // pred_check_branch
        %109 = sbr.rel (%p106) target = $region54
      $region53: #{custom-call.14} parent=5 // pred_region
        #allocation2 [shape = 'f32[9,9]{1,0}', space=vmem, size = 0x2000, scoped, tag = 'rescaled input a']
        %s110 = ssub.s32 %s3, 1
        %s111 = sand.u32 %s8, 1
        %s112 = sand.u32 %s8, 1
        %s113 = smul.addr %s112, 16
        %s114 = scalar_lea.vmem [#allocation0], %s113
        %s115 = sand.u32 %s8, 1
        %s116 = sand.u32 %s8, 1
        %s117 = smul.addr %s116, 16
        %s118 = scalar_lea.vmem [#allocation0], %s117
        %s119 = sand.u32 %s8, 1
        %s120 = sand.u32 %s8, 1
        %s121 = smul.addr %s120, 16
        %s122 = scalar_lea.vmem [#allocation1], %s121
        %v123 = vlaneseq
        %v124 = vand.u32 %v123, 127
        %vm125 = vcmp.lt.s32.totalorder %v124, 9
        %v126 = vlaneseq
        %v127 = vshrl.u32 %v126, 7
        %vm129 = vcmp.eq.s32.totalorder %v127, %v124
        %v130 = vld [vmem:[%s114] sm:$0xff]
        %v131 = vsel %vm129, %v130, 0.0
        %132 = vadd.xlane.f32.xlu0 %v131
        %v133 = vpop.xlane.xlu0 %132
        %vm134 = vcmp.le.s32.totalorder %v127, %v124
        %vm135 = vmand %vm134, %vm125
        %v136 = vsel %vm135, %v130, 0.0
        %v137 = vrcp.pop %v133
        %v138 = vmul.f32 %v136, %v137
        %139 = vst [vmem:[#allocation2] sm:$0xff] %v138
        %s140 = scalar_lea.vmem %s114, 8 [#allocation0]
        %s141 = scalar_lea.vmem [#allocation2], 8
        %v142 = vlaneseq
        %v143 = vshrl.u32 %v142, 7
        %v144 = vadd.s32 %v143, 8
        %vm145 = vcmp.eq.s32.totalorder %v144, %v124
        %v146 = vld [vmem:[%s140] sm:$0xff]
        %v147 = vsel %vm145, %v146, 0.0
        %148 = vadd.xlane.f32.xlu0 %v147
        %v149 = vpop.xlane.xlu0 %148
        %vm150 = vcmp.le.s32.totalorder %v144, %v124
        %vm151 = vmand %vm150, %vm125
        %v152 = vsel %vm151, %v146, 0.0
        %v153 = vrcp.pop %v149
        %v154 = vmul.f32 %v152, %v153
        %155 = vst [vmem:[%s141] sm:$0xff] %v154
        %v156 = vlaneseq
        %v157 = vand.u32 %v156, 127
        %v158 = vlaneseq
        %v159 = vshrl.u32 %v158, 7
        %vm161 = vcmp.eq.s32.totalorder %v157, %v159
        %v162 = vsel %vm161, -1.0, 0.0
        %v163 = vlaneseq
        %v164 = vand.u32 %v163, 127
        %v165 = vlaneseq
        %v166 = vshrl.u32 %v165, 7
        %v167 = vadd.s32 %v166, 8
        %vm168 = vcmp.eq.s32.totalorder %v164, %v167
        %v169 = vlaneseq
        %v170 = vand.u32 %v169, 127
        %vm171 = vcmp.eq.s32.totalorder %v170, 8
        %v172 = vsel %vm171, 1.0, -1.0
        %v173 = vsel %vm168, %v172, 0.0
        %s174 = scalar_lea.vmem [#allocation2], 7
        %v175 = vld [vmem:[%s174] ss:$0 sm:$0xff]
        %v176 = vxor.u32 %v175, 2147483648
        %v177 = vlaneseq
        %v178 = vand.u32 %v177, 127
        %vm179 = vcmp.eq.s32.totalorder %v178, 7
        %v180 = vmul.f32 %v176, %v162
        %181 = vadd.xlane.f32.xlu0 %v180
        %v182 = vpop.xlane.xlu0 %181
        %v183 = vsel %vm179, %v182, %v162
        %v184 = vmul.f32 %v176, %v173
        %185 = vadd.xlane.f32.xlu0 %v184
        %v186 = vpop.xlane.xlu0 %185
        %v187 = vsel %vm179, %v186, %v173
        %s188 = scalar_lea.vmem [#allocation2], 6
        %v189 = vld [vmem:[%s188] ss:$0 sm:$0xff]
        %v190 = vxor.u32 %v189, 2147483648
        %v191 = vlaneseq
        %v192 = vand.u32 %v191, 127
        %vm193 = vcmp.eq.s32.totalorder %v192, 6
        %v194 = vmul.f32 %v190, %v183
        %195 = vadd.xlane.f32.xlu0 %v194
        %v196 = vpop.xlane.xlu0 %195
        %v197 = vsel %vm193, %v196, %v183
        %v198 = vmul.f32 %v190, %v187
        %199 = vadd.xlane.f32.xlu0 %v198
        %v200 = vpop.xlane.xlu0 %199
        %v201 = vsel %vm193, %v200, %v187
        %s202 = scalar_lea.vmem [#allocation2], 5
        %v203 = vld [vmem:[%s202] ss:$0 sm:$0xff]
        %v204 = vxor.u32 %v203, 2147483648
        %v205 = vlaneseq
        %v206 = vand.u32 %v205, 127
        %vm207 = vcmp.eq.s32.totalorder %v206, 5
        %v208 = vmul.f32 %v204, %v197
        %209 = vadd.xlane.f32.xlu0 %v208
        %v210 = vpop.xlane.xlu0 %209
        %v211 = vsel %vm207, %v210, %v197
        %v212 = vmul.f32 %v204, %v201
        %213 = vadd.xlane.f32.xlu0 %v212
        %v214 = vpop.xlane.xlu0 %213
        %v215 = vsel %vm207, %v214, %v201
        %s216 = scalar_lea.vmem [#allocation2], 4
        %v217 = vld [vmem:[%s216] ss:$0 sm:$0xff]
        %v218 = vxor.u32 %v217, 2147483648
        %v219 = vlaneseq
        %v220 = vand.u32 %v219, 127
        %vm221 = vcmp.eq.s32.totalorder %v220, 4
        %v222 = vmul.f32 %v218, %v211
        %223 = vadd.xlane.f32.xlu0 %v222
        %v224 = vpop.xlane.xlu0 %223
        %v225 = vsel %vm221, %v224, %v211
        %v226 = vmul.f32 %v218, %v215
        %227 = vadd.xlane.f32.xlu0 %v226
        %v228 = vpop.xlane.xlu0 %227
        %v229 = vsel %vm221, %v228, %v215
        %s230 = scalar_lea.vmem [#allocation2], 3
        %v231 = vld [vmem:[%s230] ss:$0 sm:$0xff]
        %v232 = vxor.u32 %v231, 2147483648
        %v233 = vlaneseq
        %v234 = vand.u32 %v233, 127
        %vm235 = vcmp.eq.s32.totalorder %v234, 3
        %v236 = vmul.f32 %v232, %v225
        %237 = vadd.xlane.f32.xlu0 %v236
        %v238 = vpop.xlane.xlu0 %237
        %v239 = vsel %vm235, %v238, %v225
        %v240 = vmul.f32 %v232, %v229
        %241 = vadd.xlane.f32.xlu0 %v240
        %v242 = vpop.xlane.xlu0 %241
        %v243 = vsel %vm235, %v242, %v229
        %s244 = scalar_lea.vmem [#allocation2], 2
        %v245 = vld [vmem:[%s244] ss:$0 sm:$0xff]
        %v246 = vxor.u32 %v245, 2147483648
        %v247 = vlaneseq
        %v248 = vand.u32 %v247, 127
        %vm249 = vcmp.eq.s32.totalorder %v248, 2
        %v250 = vmul.f32 %v246, %v239
        %251 = vadd.xlane.f32.xlu0 %v250
        %v252 = vpop.xlane.xlu0 %251
        %v253 = vsel %vm249, %v252, %v239
        %v254 = vmul.f32 %v246, %v243
        %255 = vadd.xlane.f32.xlu0 %v254
        %v256 = vpop.xlane.xlu0 %255
        %v257 = vsel %vm249, %v256, %v243
        %s258 = scalar_lea.vmem [#allocation2], 1
        %v259 = vld [vmem:[%s258] ss:$0 sm:$0xff]
        %v260 = vxor.u32 %v259, 2147483648
        %v261 = vlaneseq
        %v262 = vand.u32 %v261, 127
        %vm263 = vcmp.eq.s32.totalorder %v262, 1
        %v264 = vmul.f32 %v260, %v253
        %265 = vadd.xlane.f32.xlu0 %v264
        %v266 = vpop.xlane.xlu0 %265
        %v267 = vsel %vm263, %v266, %v253
        %v268 = vmul.f32 %v260, %v257
        %269 = vadd.xlane.f32.xlu0 %v268
        %v270 = vpop.xlane.xlu0 %269
        %v271 = vsel %vm263, %v270, %v257
        %v272 = vld [vmem:[#allocation2] ss:$0 sm:$0xff]
        %v273 = vxor.u32 %v272, 2147483648
        %v274 = vlaneseq
        %v275 = vand.u32 %v274, 127
        %vm276 = vcmp.eq.s32.totalorder %v275, 0
        %v277 = vmul.f32 %v273, %v267
        %278 = vadd.xlane.f32.xlu0 %v277
        %v279 = vpop.xlane.xlu0 %278
        %v280 = vsel %vm276, %v279, %v267
        %v281 = vmul.f32 %v273, %v271
        %282 = vadd.xlane.f32.xlu0 %v281
        %v283 = vpop.xlane.xlu0 %282
        %v284 = vsel %vm276, %v283, %v271
        %v285 = vrcp.pop %v133
        %v286 = vmul.f32 %v280, %v285
        %vm287 = vweird.f32 %v133
        %v288 = vsel %vm287, %v280, %v286
        %289 = vst [vmem:[%s122] sm:$0xff] %v288
        %v290 = vrcp.pop %v149
        %v291 = vmul.f32 %v284, %v290
        %vm292 = vweird.f32 %v149
        %v293 = vsel %vm292, %v284, %v291
        %s294 = scalar_lea.vmem %s122, 8 [#allocation1]
        %295 = vst [vmem:[%s294] sm:$0xff] %v293
        %s296 = sand.u32 %s8, 1
        %s297 = sand.u32 %s8, 1
        %s298 = smul.addr %s297, 16
        %s299 = scalar_lea.vmem [#allocation1], %s298
        %s300 = sadd.s32 %s19, %s18
        %s301 = smul.addr %s17, 2
        %s302 = sadd.s32 %s300, %s301
        %s303 = smul.addr %s16, 2
        %s304 = sadd.s32 %s302, %s303
        %s305 = smul.addr %s15, 8
        %s306 = sadd.s32 %s304, %s305
        %s307 = smul.addr %s306, 8
        %s308 = scalar_lea.vmem %s1, %s307
        // Predicated region
        $region55: #{custom-call.14} parent=53 // pred_check
          _
        $region56: #{custom-call.14} parent=53 // pred_check_branch
          %310 = sbr.rel (0) target = $region58
        $region57: #{custom-call.14} parent=53 // pred_region
          // Predicated region
          $region59: #{custom-call.14} parent=57 // pred_check
            _
          $region60: #{custom-call.14} parent=57 // pred_check_branch
            %312 = sbr.rel (0) target = $region62
          $region61: #{custom-call.14} parent=57 // pred_region
            // Predicated region
            $region74: #{custom-call.14} parent=61 // pred_check
              _
            $region75: #{custom-call.14} parent=61 // pred_check_branch
              %329 = sbr.rel (0) target = $region77
            $region76: #{custom-call.14} parent=61 // pred_region
              loop: start=0, step=1, limit=1
              $region78: #{custom-call.14} parent=76 // loop_pre_header
                _
              $region79: #{custom-call.14} parent=76 // loop_header
                %s331 = sphi 0, %s335
                %p332 = scmp.ge.s32.totalorder %s331, 1
                %s336 = sphi %s299, %s299
                %s337 = sphi %s308, %s308
              $region80: #{custom-call.14} parent=76 // loop_header_branch
                %334 = sbr.rel (%p332) target = $region84
              $region81: #{custom-call.14} parent=76 // loop_body
                %v338 = vld [vmem:[%s336] sm:$0xff]
                %339 = vst [vmem:[%s337] sm:$0xff] %v338
                %v340 = vld [vmem:[%s336 + $0x8] sm:$0xff]
                %341 = vst [vmem:[%s337 + $0x8] sm:$0xff] %v340
              $region82: #{custom-call.14} parent=76 // loop_footer
                %s335 = sadd.s32 1, %s331
              $region83: #{custom-call.14} parent=76 // loop_footer_branch
                %330 = sbr.rel target = $region79
              $region84: #{custom-call.14} parent=76 // loop_exit
                _
            $region77: #{custom-call.14} parent=61 // pred_fallthru
              _
            // Predicated region
            $region85: #{custom-call.14} parent=61 // pred_check
              _
            $region86: #{custom-call.14} parent=61 // pred_check_branch
              %343 = sbr.rel target = $region88
            $region87: #{custom-call.14} parent=61 // pred_region
              _
            $region88: #{custom-call.14} parent=61 // pred_fallthru
              _
          $region62: #{custom-call.14} parent=57 // pred_fallthru
            _
          // Predicated region
          $region63: #{custom-call.14} parent=57 // pred_check
            _
          $region64: #{custom-call.14} parent=57 // pred_check_branch
            %314 = sbr.rel target = $region66
          $region65: #{custom-call.14} parent=57 // pred_region
            loop: start=0, step=1, limit=1
            $region67: #{custom-call.14} parent=65 // loop_pre_header
              _
            $region68: #{custom-call.14} parent=65 // loop_header
              %s317 = sphi 0, %s321
              %p318 = scmp.ge.s32.totalorder %s317, 1
              %s322 = sphi %s299, %s299
              %s323 = sphi %s308, %s308
            $region69: #{custom-call.14} parent=65 // loop_header_branch
              %320 = sbr.rel (%p318) target = $region73
            $region70: #{custom-call.14} parent=65 // loop_body
              %v324 = vld [vmem:[%s322] sm:$0xff]
              %325 = vst [vmem:[%s323] sm:$0xff] %v324
              %v326 = vld [vmem:[%s322 + $0x8] sm:$0xff]
              %327 = vst [vmem:[%s323 + $0x8] sm:$0xff] %v326
            $region71: #{custom-call.14} parent=65 // loop_footer
              %s321 = sadd.s32 1, %s317
            $region72: #{custom-call.14} parent=65 // loop_footer_branch
              %316 = sbr.rel target = $region68
            $region73: #{custom-call.14} parent=65 // loop_exit
              _
          $region66: #{custom-call.14} parent=57 // pred_fallthru
            _
        $region58: #{custom-call.14} parent=53 // pred_fallthru
          _
        %344 = vnop
      $region54: #{custom-call.14} parent=5 // pred_fallthru
        _
      %p345 = scmp.le.s32.totalorder 2, %s3
      // Predicated region
      $region89: #{custom-call.14} parent=5 // pred_check
        %p346 = pneg %p345
      $region90: #{custom-call.14} parent=5 // pred_check_branch
        %348 = sbr.rel (%p346) target = $region92
      $region91: #{custom-call.14} parent=5 // pred_region
        %s349 = ssub.s32 %s3, 2
        %s350 = sand.u32 %s9, 1
        %s351 = sand.u32 %s9, 1
        %s352 = smul.addr %s351, 16
        %s353 = scalar_lea.vmem [#allocation1], %s352
      $region92: #{custom-call.14} parent=5 // pred_fallthru
        _
    $region6: #{custom-call.14} parent=1 // loop_footer
      %s7 = sadd.s32 1, %s3
    $region7: #{custom-call.14} parent=1 // loop_footer_branch
      %2 = sbr.rel target = $region3
    $region8: #{custom-call.14} parent=1 // loop_exit
      _

// kernel: custom-call.15
$region0: #{custom-call.15}
  %s0 = inlined_call_operand.vmem [shape: f32[2,4,1,9,9], index: 0, kind: input, shape index: {}]
  %s1 = inlined_call_operand.vmem [shape: f32[2,4,1,9,9], index: 1, kind: output, shape index: {}]
  $region1: #{custom-call.15} parent=0
    #allocation0 [shape = 'u8[16384]{0}', space=vmem, size = 0x4000, scoped, tag = 'operand span for operand 0']
    #allocation1 [shape = 'u8[16384]{0}', space=vmem, size = 0x4000, scoped, tag = 'operand span for operand 1']
    loop: start=0, step=1, limit=10
    $region2: #{custom-call.15} parent=1 // loop_pre_header
      _
    $region3: #{custom-call.15} parent=1 // loop_header
      %s3 = sphi 0, %s7
      %p4 = scmp.ge.s32.totalorder %s3, 10
      %s10 = sphi 0, %s43
      %s11 = sphi 0, %s39
      %s12 = sphi 0, %s35
      %s13 = sphi 0, %s31
      %s14 = sphi 0, %s27
      %s15 = sphi 0, %s10
      %s16 = sphi 0, %s11
      %s17 = sphi 0, %s12
      %s18 = sphi 0, %s13
      %s19 = sphi 0, %s14
      %s20 = sphi 0, %s15
      %s21 = sphi 0, %s16
      %s22 = sphi 0, %s17
      %s23 = sphi 0, %s18
      %s24 = sphi 0, %s19
    $region4: #{custom-call.15} parent=1 // loop_header_branch
      %6 = sbr.rel (%p4) target = $region8
    $region5: #{custom-call.15} parent=1 // loop_body
      %s8 = ssub.s32 %s3, 1
      %s9 = ssub.s32 %s3, 2
      %s25 = sadd.s32 1, %s14
      %p26 = scmp.ge.s32.totalorder %s25, 1
      %s27 = scalar_select %p26, 0, %s25
      %s28 = sadd.s32 1, %s13
      %s29 = scalar_select %p26, %s28, %s13
      %p30 = scmp.ge.s32.totalorder %s29, 1
      %s31 = scalar_select %p30, 0, %s29
      %s32 = sadd.s32 1, %s12
      %s33 = scalar_select %p30, %s32, %s12
      %p34 = scmp.ge.s32.totalorder %s33, 1
      %s35 = scalar_select %p34, 0, %s33
      %s36 = sadd.s32 1, %s11
      %s37 = scalar_select %p34, %s36, %s11
      %p38 = scmp.ge.s32.totalorder %s37, 4
      %s39 = scalar_select %p38, 0, %s37
      %s40 = sadd.s32 1, %s10
      %s41 = scalar_select %p38, %s40, %s10
      %p42 = scmp.ge.s32.totalorder %s41, 2
      %s43 = scalar_select %p42, 0, %s41
      %p44 = scmp.le.s32.totalorder 1, %s3
      %p45 = scmp.lt.s32.totalorder %s3, 9
      %p46 = pnand %p44, %p45
      %p47 = pneg %p46
      // Predicated region
      $region9: #{custom-call.15} parent=5 // pred_check
        _
      $region10: #{custom-call.15} parent=5 // pred_check_branch
        %49 = sbr.rel (%p46) target = $region12
      $region11: #{custom-call.15} parent=5 // pred_region
        %s50 = ssub.s32 %s3, 1
      $region12: #{custom-call.15} parent=5 // pred_fallthru
        _
      %p51 = scmp.lt.s32.totalorder %s3, 8
      // Predicated region
      $region13: #{custom-call.15} parent=5 // pred_check
        %p52 = pneg %p51
      $region14: #{custom-call.15} parent=5 // pred_check_branch
        %54 = sbr.rel (%p52) target = $region16
      $region15: #{custom-call.15} parent=5 // pred_region
        %s55 = sand.u32 %s3, 1
        %s56 = sand.u32 %s3, 1
        %s57 = smul.addr %s56, 16
        %s58 = scalar_lea.vmem [#allocation0], %s57
        %s59 = sadd.s32 %s14, %s13
        %s60 = smul.addr %s12, 2
        %s61 = sadd.s32 %s59, %s60
        %s62 = smul.addr %s11, 2
        %s63 = sadd.s32 %s61, %s62
        %s64 = smul.addr %s10, 8
        %s65 = sadd.s32 %s63, %s64
        %s66 = smul.addr %s65, 8
        %s67 = scalar_lea.vmem %s0, %s66
        // Predicated region
        $region17: #{custom-call.15} parent=15 // pred_check
          _
        $region18: #{custom-call.15} parent=15 // pred_check_branch
          %69 = sbr.rel (0) target = $region20
        $region19: #{custom-call.15} parent=15 // pred_region
          // Predicated region
          $region21: #{custom-call.15} parent=19 // pred_check
            _
          $region22: #{custom-call.15} parent=19 // pred_check_branch
            %71 = sbr.rel (0) target = $region24
          $region23: #{custom-call.15} parent=19 // pred_region
            // Predicated region
            $region36: #{custom-call.15} parent=23 // pred_check
              _
            $region37: #{custom-call.15} parent=23 // pred_check_branch
              %88 = sbr.rel (0) target = $region39
            $region38: #{custom-call.15} parent=23 // pred_region
              loop: start=0, step=1, limit=1
              $region40: #{custom-call.15} parent=38 // loop_pre_header
                _
              $region41: #{custom-call.15} parent=38 // loop_header
                %s90 = sphi 0, %s94
                %p91 = scmp.ge.s32.totalorder %s90, 1
                %s95 = sphi %s67, %s67
                %s96 = sphi %s58, %s58
              $region42: #{custom-call.15} parent=38 // loop_header_branch
                %93 = sbr.rel (%p91) target = $region46
              $region43: #{custom-call.15} parent=38 // loop_body
                %v97 = vld [vmem:[%s95] sm:$0xff]
                %98 = vst [vmem:[%s96] sm:$0xff] %v97
                %v99 = vld [vmem:[%s95 + $0x8] sm:$0xff]
                %100 = vst [vmem:[%s96 + $0x8] sm:$0xff] %v99
              $region44: #{custom-call.15} parent=38 // loop_footer
                %s94 = sadd.s32 1, %s90
              $region45: #{custom-call.15} parent=38 // loop_footer_branch
                %89 = sbr.rel target = $region41
              $region46: #{custom-call.15} parent=38 // loop_exit
                _
            $region39: #{custom-call.15} parent=23 // pred_fallthru
              _
            // Predicated region
            $region47: #{custom-call.15} parent=23 // pred_check
              _
            $region48: #{custom-call.15} parent=23 // pred_check_branch
              %102 = sbr.rel target = $region50
            $region49: #{custom-call.15} parent=23 // pred_region
              _
            $region50: #{custom-call.15} parent=23 // pred_fallthru
              _
          $region24: #{custom-call.15} parent=19 // pred_fallthru
            _
          // Predicated region
          $region25: #{custom-call.15} parent=19 // pred_check
            _
          $region26: #{custom-call.15} parent=19 // pred_check_branch
            %73 = sbr.rel target = $region28
          $region27: #{custom-call.15} parent=19 // pred_region
            loop: start=0, step=1, limit=1
            $region29: #{custom-call.15} parent=27 // loop_pre_header
              _
            $region30: #{custom-call.15} parent=27 // loop_header
              %s76 = sphi 0, %s80
              %p77 = scmp.ge.s32.totalorder %s76, 1
              %s81 = sphi %s67, %s67
              %s82 = sphi %s58, %s58
            $region31: #{custom-call.15} parent=27 // loop_header_branch
              %79 = sbr.rel (%p77) target = $region35
            $region32: #{custom-call.15} parent=27 // loop_body
              %v83 = vld [vmem:[%s81] sm:$0xff]
              %84 = vst [vmem:[%s82] sm:$0xff] %v83
              %v85 = vld [vmem:[%s81 + $0x8] sm:$0xff]
              %86 = vst [vmem:[%s82 + $0x8] sm:$0xff] %v85
            $region33: #{custom-call.15} parent=27 // loop_footer
              %s80 = sadd.s32 1, %s76
            $region34: #{custom-call.15} parent=27 // loop_footer_branch
              %75 = sbr.rel target = $region30
            $region35: #{custom-call.15} parent=27 // loop_exit
              _
          $region28: #{custom-call.15} parent=19 // pred_fallthru
            _
        $region20: #{custom-call.15} parent=15 // pred_fallthru
          _
        %103 = vnop
      $region16: #{custom-call.15} parent=5 // pred_fallthru
        _
      %p104 = scmp.le.s32.totalorder 1, %s3
      %p105 = scmp.lt.s32.totalorder %s3, 9
      %p106 = pnand %p104, %p105
      %p107 = pneg %p106
      // Predicated region
      $region51: #{custom-call.15} parent=5 // pred_check
        _
      $region52: #{custom-call.15} parent=5 // pred_check_branch
        %109 = sbr.rel (%p106) target = $region54
      $region53: #{custom-call.15} parent=5 // pred_region
        #allocation2 [shape = 'f32[9,9]{1,0}', space=vmem, size = 0x2000, scoped, tag = 'rescaled input a']
        %s110 = ssub.s32 %s3, 1
        %s111 = sand.u32 %s8, 1
        %s112 = sand.u32 %s8, 1
        %s113 = smul.addr %s112, 16
        %s114 = scalar_lea.vmem [#allocation0], %s113
        %s115 = sand.u32 %s8, 1
        %s116 = sand.u32 %s8, 1
        %s117 = smul.addr %s116, 16
        %s118 = scalar_lea.vmem [#allocation0], %s117
        %s119 = sand.u32 %s8, 1
        %s120 = sand.u32 %s8, 1
        %s121 = smul.addr %s120, 16
        %s122 = scalar_lea.vmem [#allocation1], %s121
        %v123 = vlaneseq
        %v124 = vand.u32 %v123, 127
        %vm125 = vcmp.lt.s32.totalorder %v124, 9
        %v126 = vlaneseq
        %v127 = vshrl.u32 %v126, 7
        %vm129 = vcmp.eq.s32.totalorder %v127, %v124
        %v130 = vld [vmem:[%s114] sm:$0xff]
        %v131 = vsel %vm129, %v130, 0.0
        %132 = vadd.xlane.f32.xlu0 %v131
        %v133 = vpop.xlane.xlu0 %132
        %vm134 = vcmp.ge.s32.totalorder %v127, %v124
        %vm135 = vmand %vm134, %vm125
        %v136 = vsel %vm135, %v130, 0.0
        %v137 = vrcp.pop %v133
        %v138 = vmul.f32 %v136, %v137
        %139 = vst [vmem:[#allocation2] sm:$0xff] %v138
        %s140 = scalar_lea.vmem %s114, 8 [#allocation0]
        %s141 = scalar_lea.vmem [#allocation2], 8
        %v142 = vlaneseq
        %v143 = vshrl.u32 %v142, 7
        %v144 = vadd.s32 %v143, 8
        %vm145 = vcmp.eq.s32.totalorder %v144, %v124
        %v146 = vld [vmem:[%s140] sm:$0xff]
        %v147 = vsel %vm145, %v146, 0.0
        %148 = vadd.xlane.f32.xlu0 %v147
        %v149 = vpop.xlane.xlu0 %148
        %vm150 = vcmp.ge.s32.totalorder %v144, %v124
        %vm151 = vmand %vm150, %vm125
        %v152 = vsel %vm151, %v146, 0.0
        %v153 = vrcp.pop %v149
        %v154 = vmul.f32 %v152, %v153
        %155 = vst [vmem:[%s141] sm:$0xff] %v154
        %v156 = vlaneseq
        %v157 = vand.u32 %v156, 127
        %v158 = vlaneseq
        %v159 = vshrl.u32 %v158, 7
        %vm161 = vcmp.eq.s32.totalorder %v157, %v159
        %v162 = vlaneseq
        %v163 = vand.u32 %v162, 127
        %vm164 = vcmp.eq.s32.totalorder %v163, 0
        %v165 = vsel %vm164, 1.0, -1.0
        %v166 = vsel %vm161, %v165, 0.0
        %v167 = vlaneseq
        %v168 = vand.u32 %v167, 127
        %v169 = vlaneseq
        %v170 = vshrl.u32 %v169, 7
        %v171 = vadd.s32 %v170, 8
        %vm172 = vcmp.eq.s32.totalorder %v168, %v171
        %v173 = vsel %vm172, -1.0, 0.0
        %s174 = scalar_lea.vmem [#allocation2], 1
        %v175 = vld [vmem:[%s174] ss:$0 sm:$0xff]
        %v176 = vxor.u32 %v175, 2147483648
        %v177 = vlaneseq
        %v178 = vand.u32 %v177, 127
        %vm179 = vcmp.eq.s32.totalorder %v178, 1
        %v180 = vmul.f32 %v176, %v166
        %181 = vadd.xlane.f32.xlu0 %v180
        %v182 = vpop.xlane.xlu0 %181
        %v183 = vsel %vm179, %v182, %v166
        %s184 = scalar_lea.vmem [#allocation2], 2
        %v185 = vld [vmem:[%s184] ss:$0 sm:$0xff]
        %v186 = vxor.u32 %v185, 2147483648
        %v187 = vlaneseq
        %v188 = vand.u32 %v187, 127
        %vm189 = vcmp.eq.s32.totalorder %v188, 2
        %v190 = vmul.f32 %v186, %v183
        %191 = vadd.xlane.f32.xlu0 %v190
        %v192 = vpop.xlane.xlu0 %191
        %v193 = vsel %vm189, %v192, %v183
        %s194 = scalar_lea.vmem [#allocation2], 3
        %v195 = vld [vmem:[%s194] ss:$0 sm:$0xff]
        %v196 = vxor.u32 %v195, 2147483648
        %v197 = vlaneseq
        %v198 = vand.u32 %v197, 127
        %vm199 = vcmp.eq.s32.totalorder %v198, 3
        %v200 = vmul.f32 %v196, %v193
        %201 = vadd.xlane.f32.xlu0 %v200
        %v202 = vpop.xlane.xlu0 %201
        %v203 = vsel %vm199, %v202, %v193
        %s204 = scalar_lea.vmem [#allocation2], 4
        %v205 = vld [vmem:[%s204] ss:$0 sm:$0xff]
        %v206 = vxor.u32 %v205, 2147483648
        %v207 = vlaneseq
        %v208 = vand.u32 %v207, 127
        %vm209 = vcmp.eq.s32.totalorder %v208, 4
        %v210 = vmul.f32 %v206, %v203
        %211 = vadd.xlane.f32.xlu0 %v210
        %v212 = vpop.xlane.xlu0 %211
        %v213 = vsel %vm209, %v212, %v203
        %s214 = scalar_lea.vmem [#allocation2], 5
        %v215 = vld [vmem:[%s214] ss:$0 sm:$0xff]
        %v216 = vxor.u32 %v215, 2147483648
        %v217 = vlaneseq
        %v218 = vand.u32 %v217, 127
        %vm219 = vcmp.eq.s32.totalorder %v218, 5
        %v220 = vmul.f32 %v216, %v213
        %221 = vadd.xlane.f32.xlu0 %v220
        %v222 = vpop.xlane.xlu0 %221
        %v223 = vsel %vm219, %v222, %v213
        %s224 = scalar_lea.vmem [#allocation2], 6
        %v225 = vld [vmem:[%s224] ss:$0 sm:$0xff]
        %v226 = vxor.u32 %v225, 2147483648
        %v227 = vlaneseq
        %v228 = vand.u32 %v227, 127
        %vm229 = vcmp.eq.s32.totalorder %v228, 6
        %v230 = vmul.f32 %v226, %v223
        %231 = vadd.xlane.f32.xlu0 %v230
        %v232 = vpop.xlane.xlu0 %231
        %v233 = vsel %vm229, %v232, %v223
        %s234 = scalar_lea.vmem [#allocation2], 7
        %v235 = vld [vmem:[%s234] ss:$0 sm:$0xff]
        %v236 = vxor.u32 %v235, 2147483648
        %v237 = vlaneseq
        %v238 = vand.u32 %v237, 127
        %vm239 = vcmp.eq.s32.totalorder %v238, 7
        %v240 = vmul.f32 %v236, %v233
        %241 = vadd.xlane.f32.xlu0 %v240
        %v242 = vpop.xlane.xlu0 %241
        %v243 = vsel %vm239, %v242, %v233
        %s244 = scalar_lea.vmem [#allocation2], 8
        %v245 = vld [vmem:[%s244] ss:$0 sm:$0xff]
        %v246 = vxor.u32 %v245, 2147483648
        %v247 = vlaneseq
        %v248 = vand.u32 %v247, 127
        %vm249 = vcmp.eq.s32.totalorder %v248, 8
        %v250 = vmul.f32 %v246, %v243
        %251 = vadd.xlane.f32.xlu0 %v250
        %v252 = vpop.xlane.xlu0 %251
        %v253 = vsel %vm249, %v252, %v243
        %v254 = vmul.f32 %v246, %v173
        %255 = vadd.xlane.f32.xlu0 %v254
        %v256 = vpop.xlane.xlu0 %255
        %v257 = vsel %vm249, %v256, %v173
        %v258 = vrcp.pop %v133
        %v259 = vmul.f32 %v253, %v258
        %vm260 = vweird.f32 %v133
        %v261 = vsel %vm260, %v253, %v259
        %262 = vst [vmem:[%s122] sm:$0xff] %v261
        %v263 = vrcp.pop %v149
        %v264 = vmul.f32 %v257, %v263
        %vm265 = vweird.f32 %v149
        %v266 = vsel %vm265, %v257, %v264
        %s267 = scalar_lea.vmem %s122, 8 [#allocation1]
        %268 = vst [vmem:[%s267] sm:$0xff] %v266
        %s269 = sand.u32 %s8, 1
        %s270 = sand.u32 %s8, 1
        %s271 = smul.addr %s270, 16
        %s272 = scalar_lea.vmem [#allocation1], %s271
        %s273 = sadd.s32 %s19, %s18
        %s274 = smul.addr %s17, 2
        %s275 = sadd.s32 %s273, %s274
        %s276 = smul.addr %s16, 2
        %s277 = sadd.s32 %s275, %s276
        %s278 = smul.addr %s15, 8
        %s279 = sadd.s32 %s277, %s278
        %s280 = smul.addr %s279, 8
        %s281 = scalar_lea.vmem %s1, %s280
        // Predicated region
        $region55: #{custom-call.15} parent=53 // pred_check
          _
        $region56: #{custom-call.15} parent=53 // pred_check_branch
          %283 = sbr.rel (0) target = $region58
        $region57: #{custom-call.15} parent=53 // pred_region
          // Predicated region
          $region59: #{custom-call.15} parent=57 // pred_check
            _
          $region60: #{custom-call.15} parent=57 // pred_check_branch
            %285 = sbr.rel (0) target = $region62
          $region61: #{custom-call.15} parent=57 // pred_region
            // Predicated region
            $region74: #{custom-call.15} parent=61 // pred_check
              _
            $region75: #{custom-call.15} parent=61 // pred_check_branch
              %302 = sbr.rel (0) target = $region77
            $region76: #{custom-call.15} parent=61 // pred_region
              loop: start=0, step=1, limit=1
              $region78: #{custom-call.15} parent=76 // loop_pre_header
                _
              $region79: #{custom-call.15} parent=76 // loop_header
                %s304 = sphi 0, %s308
                %p305 = scmp.ge.s32.totalorder %s304, 1
                %s309 = sphi %s272, %s272
                %s310 = sphi %s281, %s281
              $region80: #{custom-call.15} parent=76 // loop_header_branch
                %307 = sbr.rel (%p305) target = $region84
              $region81: #{custom-call.15} parent=76 // loop_body
                %v311 = vld [vmem:[%s309] sm:$0xff]
                %312 = vst [vmem:[%s310] sm:$0xff] %v311
                %v313 = vld [vmem:[%s309 + $0x8] sm:$0xff]
                %314 = vst [vmem:[%s310 + $0x8] sm:$0xff] %v313
              $region82: #{custom-call.15} parent=76 // loop_footer
                %s308 = sadd.s32 1, %s304
              $region83: #{custom-call.15} parent=76 // loop_footer_branch
                %303 = sbr.rel target = $region79
              $region84: #{custom-call.15} parent=76 // loop_exit
                _
            $region77: #{custom-call.15} parent=61 // pred_fallthru
              _
            // Predicated region
            $region85: #{custom-call.15} parent=61 // pred_check
              _
            $region86: #{custom-call.15} parent=61 // pred_check_branch
              %316 = sbr.rel target = $region88
            $region87: #{custom-call.15} parent=61 // pred_region
              _
            $region88: #{custom-call.15} parent=61 // pred_fallthru
              _
          $region62: #{custom-call.15} parent=57 // pred_fallthru
            _
          // Predicated region
          $region63: #{custom-call.15} parent=57 // pred_check
            _
          $region64: #{custom-call.15} parent=57 // pred_check_branch
            %287 = sbr.rel target = $region66
          $region65: #{custom-call.15} parent=57 // pred_region
            loop: start=0, step=1, limit=1
            $region67: #{custom-call.15} parent=65 // loop_pre_header
              _
            $region68: #{custom-call.15} parent=65 // loop_header
              %s290 = sphi 0, %s294
              %p291 = scmp.ge.s32.totalorder %s290, 1
              %s295 = sphi %s272, %s272
              %s296 = sphi %s281, %s281
            $region69: #{custom-call.15} parent=65 // loop_header_branch
              %293 = sbr.rel (%p291) target = $region73
            $region70: #{custom-call.15} parent=65 // loop_body
              %v297 = vld [vmem:[%s295] sm:$0xff]
              %298 = vst [vmem:[%s296] sm:$0xff] %v297
              %v299 = vld [vmem:[%s295 + $0x8] sm:$0xff]
              %300 = vst [vmem:[%s296 + $0x8] sm:$0xff] %v299
            $region71: #{custom-call.15} parent=65 // loop_footer
              %s294 = sadd.s32 1, %s290
            $region72: #{custom-call.15} parent=65 // loop_footer_branch
              %289 = sbr.rel target = $region68
            $region73: #{custom-call.15} parent=65 // loop_exit
              _
          $region66: #{custom-call.15} parent=57 // pred_fallthru
            _
        $region58: #{custom-call.15} parent=53 // pred_fallthru
          _
        %317 = vnop
      $region54: #{custom-call.15} parent=5 // pred_fallthru
        _
      %p318 = scmp.le.s32.totalorder 2, %s3
      // Predicated region
      $region89: #{custom-call.15} parent=5 // pred_check
        %p319 = pneg %p318
      $region90: #{custom-call.15} parent=5 // pred_check_branch
        %321 = sbr.rel (%p319) target = $region92
      $region91: #{custom-call.15} parent=5 // pred_region
        %s322 = ssub.s32 %s3, 2
        %s323 = sand.u32 %s9, 1
        %s324 = sand.u32 %s9, 1
        %s325 = smul.addr %s324, 16
        %s326 = scalar_lea.vmem [#allocation1], %s325
      $region92: #{custom-call.15} parent=5 // pred_fallthru
        _
    $region6: #{custom-call.15} parent=1 // loop_footer
      %s7 = sadd.s32 1, %s3
    $region7: #{custom-call.15} parent=1 // loop_footer_branch
      %2 = sbr.rel target = $region3
    $region8: #{custom-call.15} parent=1 // loop_exit
      _

// kernel: custom-call.16
$region0: #{custom-call.16}
  %s0 = inlined_call_operand.vmem [shape: f32[2,4,9,9], index: 0, kind: input, shape index: {}]
  %s1 = inlined_call_operand.vmem [shape: f32[2,4,9,9], index: 1, kind: output, shape index: {}]
  $region1: #{custom-call.16} parent=0
    #allocation0 [shape = 'u8[16384]{0}', space=vmem, size = 0x4000, scoped, tag = 'operand span for operand 0']
    #allocation1 [shape = 'u8[16384]{0}', space=vmem, size = 0x4000, scoped, tag = 'operand span for operand 1']
    loop: start=0, step=1, limit=10
    $region2: #{custom-call.16} parent=1 // loop_pre_header
      _
    $region3: #{custom-call.16} parent=1 // loop_header
      %s3 = sphi 0, %s7
      %p4 = scmp.ge.s32.totalorder %s3, 10
      %s10 = sphi 0, %s36
      %s11 = sphi 0, %s32
      %s12 = sphi 0, %s28
      %s13 = sphi 0, %s24
      %s14 = sphi 0, %s10
      %s15 = sphi 0, %s11
      %s16 = sphi 0, %s12
      %s17 = sphi 0, %s13
      %s18 = sphi 0, %s14
      %s19 = sphi 0, %s15
      %s20 = sphi 0, %s16
      %s21 = sphi 0, %s17
    $region4: #{custom-call.16} parent=1 // loop_header_branch
      %6 = sbr.rel (%p4) target = $region8
    $region5: #{custom-call.16} parent=1 // loop_body
      %s8 = ssub.s32 %s3, 1
      %s9 = ssub.s32 %s3, 2
      %s22 = sadd.s32 1, %s13
      %p23 = scmp.ge.s32.totalorder %s22, 1
      %s24 = scalar_select %p23, 0, %s22
      %s25 = sadd.s32 1, %s12
      %s26 = scalar_select %p23, %s25, %s12
      %p27 = scmp.ge.s32.totalorder %s26, 1
      %s28 = scalar_select %p27, 0, %s26
      %s29 = sadd.s32 1, %s11
      %s30 = scalar_select %p27, %s29, %s11
      %p31 = scmp.ge.s32.totalorder %s30, 4
      %s32 = scalar_select %p31, 0, %s30
      %s33 = sadd.s32 1, %s10
      %s34 = scalar_select %p31, %s33, %s10
      %p35 = scmp.ge.s32.totalorder %s34, 2
      %s36 = scalar_select %p35, 0, %s34
      %p37 = scmp.le.s32.totalorder 1, %s3
      %p38 = scmp.lt.s32.totalorder %s3, 9
      %p39 = pnand %p37, %p38
      %p40 = pneg %p39
      // Predicated region
      $region9: #{custom-call.16} parent=5 // pred_check
        _
      $region10: #{custom-call.16} parent=5 // pred_check_branch
        %42 = sbr.rel (%p39) target = $region12
      $region11: #{custom-call.16} parent=5 // pred_region
        %s43 = ssub.s32 %s3, 1
      $region12: #{custom-call.16} parent=5 // pred_fallthru
        _
      %p44 = scmp.lt.s32.totalorder %s3, 8
      // Predicated region
      $region13: #{custom-call.16} parent=5 // pred_check
        %p45 = pneg %p44
      $region14: #{custom-call.16} parent=5 // pred_check_branch
        %47 = sbr.rel (%p45) target = $region16
      $region15: #{custom-call.16} parent=5 // pred_region
        %s48 = sand.u32 %s3, 1
        %s49 = sand.u32 %s3, 1
        %s50 = smul.addr %s49, 16
        %s51 = scalar_lea.vmem [#allocation0], %s50
        %s52 = sadd.s32 %s13, %s12
        %s53 = smul.addr %s11, 2
        %s54 = sadd.s32 %s52, %s53
        %s55 = smul.addr %s10, 8
        %s56 = sadd.s32 %s54, %s55
        %s57 = smul.addr %s56, 8
        %s58 = scalar_lea.vmem %s0, %s57
        // Predicated region
        $region17: #{custom-call.16} parent=15 // pred_check
          _
        $region18: #{custom-call.16} parent=15 // pred_check_branch
          %60 = sbr.rel (0) target = $region20
        $region19: #{custom-call.16} parent=15 // pred_region
          // Predicated region
          $region21: #{custom-call.16} parent=19 // pred_check
            _
          $region22: #{custom-call.16} parent=19 // pred_check_branch
            %62 = sbr.rel (0) target = $region24
          $region23: #{custom-call.16} parent=19 // pred_region
            // Predicated region
            $region36: #{custom-call.16} parent=23 // pred_check
              _
            $region37: #{custom-call.16} parent=23 // pred_check_branch
              %79 = sbr.rel (0) target = $region39
            $region38: #{custom-call.16} parent=23 // pred_region
              loop: start=0, step=1, limit=1
              $region40: #{custom-call.16} parent=38 // loop_pre_header
                _
              $region41: #{custom-call.16} parent=38 // loop_header
                %s81 = sphi 0, %s85
                %p82 = scmp.ge.s32.totalorder %s81, 1
                %s86 = sphi %s58, %s58
                %s87 = sphi %s51, %s51
              $region42: #{custom-call.16} parent=38 // loop_header_branch
                %84 = sbr.rel (%p82) target = $region46
              $region43: #{custom-call.16} parent=38 // loop_body
                %v88 = vld [vmem:[%s86] sm:$0xff]
                %89 = vst [vmem:[%s87] sm:$0xff] %v88
                %v90 = vld [vmem:[%s86 + $0x8] sm:$0xff]
                %91 = vst [vmem:[%s87 + $0x8] sm:$0xff] %v90
              $region44: #{custom-call.16} parent=38 // loop_footer
                %s85 = sadd.s32 1, %s81
              $region45: #{custom-call.16} parent=38 // loop_footer_branch
                %80 = sbr.rel target = $region41
              $region46: #{custom-call.16} parent=38 // loop_exit
                _
            $region39: #{custom-call.16} parent=23 // pred_fallthru
              _
            // Predicated region
            $region47: #{custom-call.16} parent=23 // pred_check
              _
            $region48: #{custom-call.16} parent=23 // pred_check_branch
              %93 = sbr.rel target = $region50
            $region49: #{custom-call.16} parent=23 // pred_region
              _
            $region50: #{custom-call.16} parent=23 // pred_fallthru
              _
          $region24: #{custom-call.16} parent=19 // pred_fallthru
            _
          // Predicated region
          $region25: #{custom-call.16} parent=19 // pred_check
            _
          $region26: #{custom-call.16} parent=19 // pred_check_branch
            %64 = sbr.rel target = $region28
          $region27: #{custom-call.16} parent=19 // pred_region
            loop: start=0, step=1, limit=1
            $region29: #{custom-call.16} parent=27 // loop_pre_header
              _
            $region30: #{custom-call.16} parent=27 // loop_header
              %s67 = sphi 0, %s71
              %p68 = scmp.ge.s32.totalorder %s67, 1
              %s72 = sphi %s58, %s58
              %s73 = sphi %s51, %s51
            $region31: #{custom-call.16} parent=27 // loop_header_branch
              %70 = sbr.rel (%p68) target = $region35
            $region32: #{custom-call.16} parent=27 // loop_body
              %v74 = vld [vmem:[%s72] sm:$0xff]
              %75 = vst [vmem:[%s73] sm:$0xff] %v74
              %v76 = vld [vmem:[%s72 + $0x8] sm:$0xff]
              %77 = vst [vmem:[%s73 + $0x8] sm:$0xff] %v76
            $region33: #{custom-call.16} parent=27 // loop_footer
              %s71 = sadd.s32 1, %s67
            $region34: #{custom-call.16} parent=27 // loop_footer_branch
              %66 = sbr.rel target = $region30
            $region35: #{custom-call.16} parent=27 // loop_exit
              _
          $region28: #{custom-call.16} parent=19 // pred_fallthru
            _
        $region20: #{custom-call.16} parent=15 // pred_fallthru
          _
        %94 = vnop
      $region16: #{custom-call.16} parent=5 // pred_fallthru
        _
      %p95 = scmp.le.s32.totalorder 1, %s3
      %p96 = scmp.lt.s32.totalorder %s3, 9
      %p97 = pnand %p95, %p96
      %p98 = pneg %p97
      // Predicated region
      $region51: #{custom-call.16} parent=5 // pred_check
        _
      $region52: #{custom-call.16} parent=5 // pred_check_branch
        %100 = sbr.rel (%p97) target = $region54
      $region53: #{custom-call.16} parent=5 // pred_region
        %s101 = ssub.s32 %s3, 1
        %s102 = sand.u32 %s8, 1
        %s103 = sand.u32 %s8, 1
        %s104 = smul.addr %s103, 16
        %s105 = scalar_lea.vmem [#allocation0], %s104
        %s106 = sand.u32 %s8, 1
        %s107 = sand.u32 %s8, 1
        %s108 = smul.addr %s107, 16
        %s109 = scalar_lea.vmem [#allocation0], %s108
        %s110 = sand.u32 %s8, 1
        %s111 = sand.u32 %s8, 1
        %s112 = smul.addr %s111, 16
        %s113 = scalar_lea.vmem [#allocation1], %s112
        %114 = vst [vmem:[%s113] sm:$0xff] 0.0
        %s115 = scalar_lea.vmem %s113, 8 [#allocation1]
        %116 = vst [vmem:[%s115] sm:$0xff] 0.0
        %vm117 = vcmask 7168
        %v118 = vld [vmem:[%s113] ss:$0 sm:$0xff]
        %v119 = vld [vmem:[%s105] ss:$0 sm:$0xff]
        %v120 = vmul.f32 %v118, %v118
        %121 = vadd.xlane.f32.xlu0 %v120
        %v122 = vpop.xlane.xlu0 %121
        %v123 = vsub.f32 %v119, %v122
        %v124 = vrsqrt.pop %v123
        %v125 = vld [vmem:[%s105] sm:$0xff]
        %v126 = vld [vmem:[%s113] sm:$0xff]
        %v127 = vmul.f32 %v126, %v118
        %128 = vadd.xlane.f32.xlu0 %v127
        %v129 = vpop.xlane.xlu0 %128
        %v130 = vsub.f32 %v125, %v129
        %v131 = vmul.f32 %v130, %v124
        %v132 = vsel %vm117, %v131, 0.0
        %v133 = vadd.f32 %v126, %v132
        %134 = vst [vmem:[%s113] sm:$0xff] %v133
        %s135 = scalar_lea.vmem %s105, 8 [#allocation0]
        %v136 = vld [vmem:[%s135] sm:$0xff]
        %s137 = scalar_lea.vmem %s113, 8 [#allocation1]
        %v138 = vld [vmem:[%s137] sm:$0xff]
        %v139 = vmul.f32 %v138, %v118
        %140 = vadd.xlane.f32.xlu0 %v139
        %v141 = vpop.xlane.xlu0 %140
        %v142 = vsub.f32 %v136, %v141
        %v143 = vmul.f32 %v142, %v124
        %v144 = vsel %vm117, %v143, 0.0
        %v145 = vadd.f32 %v138, %v144
        %s146 = scalar_lea.vmem %s113, 8 [#allocation1]
        %147 = vst [vmem:[%s146] sm:$0xff] %v145
        %vm148 = vcmask 15368
        %s149 = scalar_lea.vmem %s113, 1 [#allocation1]
        %v150 = vld [vmem:[%s149] ss:$0 sm:$0xff]
        %s151 = scalar_lea.vmem %s105, 1 [#allocation0]
        %v152 = vld [vmem:[%s151] ss:$0 sm:$0xff]
        %v153 = vmul.f32 %v150, %v150
        %154 = vadd.xlane.f32.xlu0 %v153
        %v155 = vpop.xlane.xlu0 %154
        %v156 = vsub.f32 %v152, %v155
        %v157 = vrsqrt.pop %v156
        %v158 = vld [vmem:[%s105] sm:$0xff]
        %v159 = vld [vmem:[%s113] sm:$0xff]
        %v160 = vmul.f32 %v159, %v150
        %161 = vadd.xlane.f32.xlu0 %v160
        %v162 = vpop.xlane.xlu0 %161
        %v163 = vsub.f32 %v158, %v162
        %v164 = vmul.f32 %v163, %v157
        %vm165 = vcmask 1047553
        %vm166 = vmand %vm148, %vm165
        %v167 = vsel %vm166, %v164, 0.0
        %v168 = vadd.f32 %v159, %v167
        %169 = vst [vmem:[%s113] sm:$0xff] %v168
        %s170 = scalar_lea.vmem %s105, 8 [#allocation0]
        %v171 = vld [vmem:[%s170] sm:$0xff]
        %s172 = scalar_lea.vmem %s113, 8 [#allocation1]
        %v173 = vld [vmem:[%s172] sm:$0xff]
        %v174 = vmul.f32 %v173, %v150
        %175 = vadd.xlane.f32.xlu0 %v174
        %v176 = vpop.xlane.xlu0 %175
        %v177 = vsub.f32 %v171, %v176
        %v178 = vmul.f32 %v177, %v157
        %v179 = vsel %vm148, %v178, 0.0
        %v180 = vadd.f32 %v173, %v179
        %s181 = scalar_lea.vmem %s113, 8 [#allocation1]
        %182 = vst [vmem:[%s181] sm:$0xff] %v180
        %vm183 = vcmask 23568
        %s184 = scalar_lea.vmem %s113, 2 [#allocation1]
        %v185 = vld [vmem:[%s184] ss:$0 sm:$0xff]
        %s186 = scalar_lea.vmem %s105, 2 [#allocation0]
        %v187 = vld [vmem:[%s186] ss:$0 sm:$0xff]
        %v188 = vmul.f32 %v185, %v185
        %189 = vadd.xlane.f32.xlu0 %v188
        %v190 = vpop.xlane.xlu0 %189
        %v191 = vsub.f32 %v187, %v190
        %v192 = vrsqrt.pop %v191
        %v193 = vld [vmem:[%s105] sm:$0xff]
        %v194 = vld [vmem:[%s113] sm:$0xff]
        %v195 = vmul.f32 %v194, %v185
        %196 = vadd.xlane.f32.xlu0 %v195
        %v197 = vpop.xlane.xlu0 %196
        %v198 = vsub.f32 %v193, %v197
        %v199 = vmul.f32 %v198, %v192
        %vm200 = vcmask 1047554
        %vm201 = vmand %vm183, %vm200
        %v202 = vsel %vm201, %v199, 0.0
        %v203 = vadd.f32 %v194, %v202
        %204 = vst [vmem:[%s113] sm:$0xff] %v203
        %s205 = scalar_lea.vmem %s105, 8 [#allocation0]
        %v206 = vld [vmem:[%s205] sm:$0xff]
        %s207 = scalar_lea.vmem %s113, 8 [#allocation1]
        %v208 = vld [vmem:[%s207] sm:$0xff]
        %v209 = vmul.f32 %v208, %v185
        %210 = vadd.xlane.f32.xlu0 %v209
        %v211 = vpop.xlane.xlu0 %210
        %v212 = vsub.f32 %v206, %v211
        %v213 = vmul.f32 %v212, %v192
        %v214 = vsel %vm183, %v213, 0.0
        %v215 = vadd.f32 %v208, %v214
        %s216 = scalar_lea.vmem %s113, 8 [#allocation1]
        %217 = vst [vmem:[%s216] sm:$0xff] %v215
        %vm218 = vcmask 31768
        %s219 = scalar_lea.vmem %s113, 3 [#allocation1]
        %v220 = vld [vmem:[%s219] ss:$0 sm:$0xff]
        %s221 = scalar_lea.vmem %s105, 3 [#allocation0]
        %v222 = vld [vmem:[%s221] ss:$0 sm:$0xff]
        %v223 = vmul.f32 %v220, %v220
        %224 = vadd.xlane.f32.xlu0 %v223
        %v225 = vpop.xlane.xlu0 %224
        %v226 = vsub.f32 %v222, %v225
        %v227 = vrsqrt.pop %v226
        %v228 = vld [vmem:[%s105] sm:$0xff]
        %v229 = vld [vmem:[%s113] sm:$0xff]
        %v230 = vmul.f32 %v229, %v220
        %231 = vadd.xlane.f32.xlu0 %v230
        %v232 = vpop.xlane.xlu0 %231
        %v233 = vsub.f32 %v228, %v232
        %v234 = vmul.f32 %v233, %v227
        %vm235 = vcmask 1047555
        %vm236 = vmand %vm218, %vm235
        %v237 = vsel %vm236, %v234, 0.0
        %v238 = vadd.f32 %v229, %v237
        %239 = vst [vmem:[%s113] sm:$0xff] %v238
        %s240 = scalar_lea.vmem %s105, 8 [#allocation0]
        %v241 = vld [vmem:[%s240] sm:$0xff]
        %s242 = scalar_lea.vmem %s113, 8 [#allocation1]
        %v243 = vld [vmem:[%s242] sm:$0xff]
        %v244 = vmul.f32 %v243, %v220
        %245 = vadd.xlane.f32.xlu0 %v244
        %v246 = vpop.xlane.xlu0 %245
        %v247 = vsub.f32 %v241, %v246
        %v248 = vmul.f32 %v247, %v227
        %v249 = vsel %vm218, %v248, 0.0
        %v250 = vadd.f32 %v243, %v249
        %s251 = scalar_lea.vmem %s113, 8 [#allocation1]
        %252 = vst [vmem:[%s251] sm:$0xff] %v250
        %vm253 = vcmask 39968
        %s254 = scalar_lea.vmem %s113, 4 [#allocation1]
        %v255 = vld [vmem:[%s254] ss:$0 sm:$0xff]
        %s256 = scalar_lea.vmem %s105, 4 [#allocation0]
        %v257 = vld [vmem:[%s256] ss:$0 sm:$0xff]
        %v258 = vmul.f32 %v255, %v255
        %259 = vadd.xlane.f32.xlu0 %v258
        %v260 = vpop.xlane.xlu0 %259
        %v261 = vsub.f32 %v257, %v260
        %v262 = vrsqrt.pop %v261
        %v263 = vld [vmem:[%s105] sm:$0xff]
        %v264 = vld [vmem:[%s113] sm:$0xff]
        %v265 = vmul.f32 %v264, %v255
        %266 = vadd.xlane.f32.xlu0 %v265
        %v267 = vpop.xlane.xlu0 %266
        %v268 = vsub.f32 %v263, %v267
        %v269 = vmul.f32 %v268, %v262
        %vm270 = vcmask 1047556
        %vm271 = vmand %vm253, %vm270
        %v272 = vsel %vm271, %v269, 0.0
        %v273 = vadd.f32 %v264, %v272
        %274 = vst [vmem:[%s113] sm:$0xff] %v273
        %s275 = scalar_lea.vmem %s105, 8 [#allocation0]
        %v276 = vld [vmem:[%s275] sm:$0xff]
        %s277 = scalar_lea.vmem %s113, 8 [#allocation1]
        %v278 = vld [vmem:[%s277] sm:$0xff]
        %v279 = vmul.f32 %v278, %v255
        %280 = vadd.xlane.f32.xlu0 %v279
        %v281 = vpop.xlane.xlu0 %280
        %v282 = vsub.f32 %v276, %v281
        %v283 = vmul.f32 %v282, %v262
        %v284 = vsel %vm253, %v283, 0.0
        %v285 = vadd.f32 %v278, %v284
        %s286 = scalar_lea.vmem %s113, 8 [#allocation1]
        %287 = vst [vmem:[%s286] sm:$0xff] %v285
        %vm288 = vcmask 48168
        %s289 = scalar_lea.vmem %s113, 5 [#allocation1]
        %v290 = vld [vmem:[%s289] ss:$0 sm:$0xff]
        %s291 = scalar_lea.vmem %s105, 5 [#allocation0]
        %v292 = vld [vmem:[%s291] ss:$0 sm:$0xff]
        %v293 = vmul.f32 %v290, %v290
        %294 = vadd.xlane.f32.xlu0 %v293
        %v295 = vpop.xlane.xlu0 %294
        %v296 = vsub.f32 %v292, %v295
        %v297 = vrsqrt.pop %v296
        %v298 = vld [vmem:[%s105] sm:$0xff]
        %v299 = vld [vmem:[%s113] sm:$0xff]
        %v300 = vmul.f32 %v299, %v290
        %301 = vadd.xlane.f32.xlu0 %v300
        %v302 = vpop.xlane.xlu0 %301
        %v303 = vsub.f32 %v298, %v302
        %v304 = vmul.f32 %v303, %v297
        %vm305 = vcmask 1047557
        %vm306 = vmand %vm288, %vm305
        %v307 = vsel %vm306, %v304, 0.0
        %v308 = vadd.f32 %v299, %v307
        %309 = vst [vmem:[%s113] sm:$0xff] %v308
        %s310 = scalar_lea.vmem %s105, 8 [#allocation0]
        %v311 = vld [vmem:[%s310] sm:$0xff]
        %s312 = scalar_lea.vmem %s113, 8 [#allocation1]
        %v313 = vld [vmem:[%s312] sm:$0xff]
        %v314 = vmul.f32 %v313, %v290
        %315 = vadd.xlane.f32.xlu0 %v314
        %v316 = vpop.xlane.xlu0 %315
        %v317 = vsub.f32 %v311, %v316
        %v318 = vmul.f32 %v317, %v297
        %v319 = vsel %vm288, %v318, 0.0
        %v320 = vadd.f32 %v313, %v319
        %s321 = scalar_lea.vmem %s113, 8 [#allocation1]
        %322 = vst [vmem:[%s321] sm:$0xff] %v320
        %vm323 = vcmask 56368
        %s324 = scalar_lea.vmem %s113, 6 [#allocation1]
        %v325 = vld [vmem:[%s324] ss:$0 sm:$0xff]
        %s326 = scalar_lea.vmem %s105, 6 [#allocation0]
        %v327 = vld [vmem:[%s326] ss:$0 sm:$0xff]
        %v328 = vmul.f32 %v325, %v325
        %329 = vadd.xlane.f32.xlu0 %v328
        %v330 = vpop.xlane.xlu0 %329
        %v331 = vsub.f32 %v327, %v330
        %v332 = vrsqrt.pop %v331
        %v333 = vld [vmem:[%s105] sm:$0xff]
        %v334 = vld [vmem:[%s113] sm:$0xff]
        %v335 = vmul.f32 %v334, %v325
        %336 = vadd.xlane.f32.xlu0 %v335
        %v337 = vpop.xlane.xlu0 %336
        %v338 = vsub.f32 %v333, %v337
        %v339 = vmul.f32 %v338, %v332
        %vm340 = vcmask 1047558
        %vm341 = vmand %vm323, %vm340
        %v342 = vsel %vm341, %v339, 0.0
        %v343 = vadd.f32 %v334, %v342
        %344 = vst [vmem:[%s113] sm:$0xff] %v343
        %s345 = scalar_lea.vmem %s105, 8 [#allocation0]
        %v346 = vld [vmem:[%s345] sm:$0xff]
        %s347 = scalar_lea.vmem %s113, 8 [#allocation1]
        %v348 = vld [vmem:[%s347] sm:$0xff]
        %v349 = vmul.f32 %v348, %v325
        %350 = vadd.xlane.f32.xlu0 %v349
        %v351 = vpop.xlane.xlu0 %350
        %v352 = vsub.f32 %v346, %v351
        %v353 = vmul.f32 %v352, %v332
        %v354 = vsel %vm323, %v353, 0.0
        %v355 = vadd.f32 %v348, %v354
        %s356 = scalar_lea.vmem %s113, 8 [#allocation1]
        %357 = vst [vmem:[%s356] sm:$0xff] %v355
        %vm358 = vcmask 64568
        %s359 = scalar_lea.vmem %s113, 7 [#allocation1]
        %v360 = vld [vmem:[%s359] ss:$0 sm:$0xff]
        %s361 = scalar_lea.vmem %s105, 7 [#allocation0]
        %v362 = vld [vmem:[%s361] ss:$0 sm:$0xff]
        %v363 = vmul.f32 %v360, %v360
        %364 = vadd.xlane.f32.xlu0 %v363
        %v365 = vpop.xlane.xlu0 %364
        %v366 = vsub.f32 %v362, %v365
        %v367 = vrsqrt.pop %v366
        %v368 = vld [vmem:[%s105] sm:$0xff]
        %v369 = vld [vmem:[%s113] sm:$0xff]
        %v370 = vmul.f32 %v369, %v360
        %371 = vadd.xlane.f32.xlu0 %v370
        %v372 = vpop.xlane.xlu0 %371
        %v373 = vsub.f32 %v368, %v372
        %v374 = vmul.f32 %v373, %v367
        %vm375 = vcmask 1047559
        %vm376 = vmand %vm358, %vm375
        %v377 = vsel %vm376, %v374, 0.0
        %v378 = vadd.f32 %v369, %v377
        %379 = vst [vmem:[%s113] sm:$0xff] %v378
        %s380 = scalar_lea.vmem %s105, 8 [#allocation0]
        %v381 = vld [vmem:[%s380] sm:$0xff]
        %s382 = scalar_lea.vmem %s113, 8 [#allocation1]
        %v383 = vld [vmem:[%s382] sm:$0xff]
        %v384 = vmul.f32 %v383, %v360
        %385 = vadd.xlane.f32.xlu0 %v384
        %v386 = vpop.xlane.xlu0 %385
        %v387 = vsub.f32 %v381, %v386
        %v388 = vmul.f32 %v387, %v367
        %v389 = vsel %vm358, %v388, 0.0
        %v390 = vadd.f32 %v383, %v389
        %s391 = scalar_lea.vmem %s113, 8 [#allocation1]
        %392 = vst [vmem:[%s391] sm:$0xff] %v390
        %vm393 = vcmask 72768
        %s394 = scalar_lea.vmem %s113, 8 [#allocation1]
        %v395 = vld [vmem:[%s394] ss:$0 sm:$0xff]
        %s396 = scalar_lea.vmem %s105, 8 [#allocation0]
        %v397 = vld [vmem:[%s396] ss:$0 sm:$0xff]
        %v398 = vmul.f32 %v395, %v395
        %399 = vadd.xlane.f32.xlu0 %v398
        %v400 = vpop.xlane.xlu0 %399
        %v401 = vsub.f32 %v397, %v400
        %v402 = vrsqrt.pop %v401
        %s403 = scalar_lea.vmem %s105, 8 [#allocation0]
        %v404 = vld [vmem:[%s403] sm:$0xff]
        %s405 = scalar_lea.vmem %s113, 8 [#allocation1]
        %v406 = vld [vmem:[%s405] sm:$0xff]
        %v407 = vmul.f32 %v406, %v395
        %408 = vadd.xlane.f32.xlu0 %v407
        %v409 = vpop.xlane.xlu0 %408
        %v410 = vsub.f32 %v404, %v409
        %v411 = vmul.f32 %v410, %v402
        %v412 = vsel %vm393, %v411, 0.0
        %v413 = vadd.f32 %v406, %v412
        %s414 = scalar_lea.vmem %s113, 8 [#allocation1]
        %415 = vst [vmem:[%s414] sm:$0xff] %v413
        %s416 = sand.u32 %s8, 1
        %s417 = sand.u32 %s8, 1
        %s418 = smul.addr %s417, 16
        %s419 = scalar_lea.vmem [#allocation1], %s418
        %s420 = sadd.s32 %s17, %s16
        %s421 = smul.addr %s15, 2
        %s422 = sadd.s32 %s420, %s421
        %s423 = smul.addr %s14, 8
        %s424 = sadd.s32 %s422, %s423
        %s425 = smul.addr %s424, 8
        %s426 = scalar_lea.vmem %s1, %s425
        // Predicated region
        $region55: #{custom-call.16} parent=53 // pred_check
          _
        $region56: #{custom-call.16} parent=53 // pred_check_branch
          %428 = sbr.rel (0) target = $region58
        $region57: #{custom-call.16} parent=53 // pred_region
          // Predicated region
          $region59: #{custom-call.16} parent=57 // pred_check
            _
          $region60: #{custom-call.16} parent=57 // pred_check_branch
            %430 = sbr.rel (0) target = $region62
          $region61: #{custom-call.16} parent=57 // pred_region
            // Predicated region
            $region74: #{custom-call.16} parent=61 // pred_check
              _
            $region75: #{custom-call.16} parent=61 // pred_check_branch
              %447 = sbr.rel (0) target = $region77
            $region76: #{custom-call.16} parent=61 // pred_region
              loop: start=0, step=1, limit=1
              $region78: #{custom-call.16} parent=76 // loop_pre_header
                _
              $region79: #{custom-call.16} parent=76 // loop_header
                %s449 = sphi 0, %s453
                %p450 = scmp.ge.s32.totalorder %s449, 1
                %s454 = sphi %s419, %s419
                %s455 = sphi %s426, %s426
              $region80: #{custom-call.16} parent=76 // loop_header_branch
                %452 = sbr.rel (%p450) target = $region84
              $region81: #{custom-call.16} parent=76 // loop_body
                %v456 = vld [vmem:[%s454] sm:$0xff]
                %457 = vst [vmem:[%s455] sm:$0xff] %v456
                %v458 = vld [vmem:[%s454 + $0x8] sm:$0xff]
                %459 = vst [vmem:[%s455 + $0x8] sm:$0xff] %v458
              $region82: #{custom-call.16} parent=76 // loop_footer
                %s453 = sadd.s32 1, %s449
              $region83: #{custom-call.16} parent=76 // loop_footer_branch
                %448 = sbr.rel target = $region79
              $region84: #{custom-call.16} parent=76 // loop_exit
                _
            $region77: #{custom-call.16} parent=61 // pred_fallthru
              _
            // Predicated region
            $region85: #{custom-call.16} parent=61 // pred_check
              _
            $region86: #{custom-call.16} parent=61 // pred_check_branch
              %461 = sbr.rel target = $region88
            $region87: #{custom-call.16} parent=61 // pred_region
              _
            $region88: #{custom-call.16} parent=61 // pred_fallthru
              _
          $region62: #{custom-call.16} parent=57 // pred_fallthru
            _
          // Predicated region
          $region63: #{custom-call.16} parent=57 // pred_check
            _
          $region64: #{custom-call.16} parent=57 // pred_check_branch
            %432 = sbr.rel target = $region66
          $region65: #{custom-call.16} parent=57 // pred_region
            loop: start=0, step=1, limit=1
            $region67: #{custom-call.16} parent=65 // loop_pre_header
              _
            $region68: #{custom-call.16} parent=65 // loop_header
              %s435 = sphi 0, %s439
              %p436 = scmp.ge.s32.totalorder %s435, 1
              %s440 = sphi %s419, %s419
              %s441 = sphi %s426, %s426
            $region69: #{custom-call.16} parent=65 // loop_header_branch
              %438 = sbr.rel (%p436) target = $region73
            $region70: #{custom-call.16} parent=65 // loop_body
              %v442 = vld [vmem:[%s440] sm:$0xff]
              %443 = vst [vmem:[%s441] sm:$0xff] %v442
              %v444 = vld [vmem:[%s440 + $0x8] sm:$0xff]
              %445 = vst [vmem:[%s441 + $0x8] sm:$0xff] %v444
            $region71: #{custom-call.16} parent=65 // loop_footer
              %s439 = sadd.s32 1, %s435
            $region72: #{custom-call.16} parent=65 // loop_footer_branch
              %434 = sbr.rel target = $region68
            $region73: #{custom-call.16} parent=65 // loop_exit
              _
          $region66: #{custom-call.16} parent=57 // pred_fallthru
            _
        $region58: #{custom-call.16} parent=53 // pred_fallthru
          _
        %462 = vnop
      $region54: #{custom-call.16} parent=5 // pred_fallthru
        _
      %p463 = scmp.le.s32.totalorder 2, %s3
      // Predicated region
      $region89: #{custom-call.16} parent=5 // pred_check
        %p464 = pneg %p463
      $region90: #{custom-call.16} parent=5 // pred_check_branch
        %466 = sbr.rel (%p464) target = $region92
      $region91: #{custom-call.16} parent=5 // pred_region
        %s467 = ssub.s32 %s3, 2
        %s468 = sand.u32 %s9, 1
        %s469 = sand.u32 %s9, 1
        %s470 = smul.addr %s469, 16
        %s471 = scalar_lea.vmem [#allocation1], %s470
      $region92: #{custom-call.16} parent=5 // pred_fallthru
        _
    $region6: #{custom-call.16} parent=1 // loop_footer
      %s7 = sadd.s32 1, %s3
    $region7: #{custom-call.16} parent=1 // loop_footer_branch
      %2 = sbr.rel target = $region3
    $region8: #{custom-call.16} parent=1 // loop_exit
      _

</llo_original>
